<compile_context>
chip_gen: v7x
topology: tpu7x:2x2x1
jax: 0.10.0
libtpu: 0.0.40
codegen_flags: <defaults>
</compile_context>

<pallas_src>
import functools
import math

import jax
import jax.numpy as jnp
from jax.experimental import pallas as pl


# ---------------------------------------------------------------------------
# In-kernel helpers (traced functions, not pallas_calls)
# ---------------------------------------------------------------------------

def _layernorm(x, g, b, eps):
    mu = jnp.mean(x, axis=-1, keepdims=True)
    xc = x - mu
    var = jnp.mean(xc * xc, axis=-1, keepdims=True)
    return xc * jax.lax.rsqrt(var + eps) * g + b


def _gelu(y):
    # tanh-approx GELU.
    # TODO(synk): HF/PyTorch BERT uses exact erf-GELU; deviation is ~1e-3.
    return 0.5 * y * (1.0 + jnp.tanh(0.7978845608028654 * (y + 0.044715 * y * y * y)))


# ---------------------------------------------------------------------------
# Single fused kernel: embedding LN -> L encoder layers -> pooler -> classifier
# ---------------------------------------------------------------------------

def _bert_forward_kernel(emb_ref, bias_ref, eg_ref, eb_ref,
                         qkvw_ref, qkvb_ref, ow_ref, ob_ref,
                         ln1g_ref, ln1b_ref,
                         fiw_ref, fib_ref, fow_ref, fob_ref,
                         ln2g_ref, ln2b_ref,
                         pw_ref, pb_ref, cw_ref, cb_ref,
                         o_ref, *, batch, seq, num_heads, num_layers, eps):
    B, S = batch, seq
    H = emb_ref.shape[1]
    dh = H // num_heads
    scale = 1.0 / math.sqrt(dh)

    # --- embedding LayerNorm ---
    x = _layernorm(emb_ref[...].astype(jnp.float32), eg_ref[...], eb_ref[...], eps)  # (B*S, H)

    # additive key-padding mask, pre-broadcast in the wrapper to (B*nH, 1, S)
    bias = bias_ref[...]

    # --- encoder layers, statically unrolled ---
    for l in range(num_layers):
        xb = x.astype(jnp.bfloat16)

        # fused QKV projection: one (B*S, 3H) MXU pass, (K, N) weight layout
        qkv = jnp.dot(xb, qkvw_ref[l], preferred_element_type=jnp.float32) + qkvb_ref[l]

        # head-batched Q/K/V: (B*nH, S, dh)
        def _split(col0):
            return jnp.stack(
                [qkv[b * S:(b + 1) * S, col0 + h * dh: col0 + (h + 1) * dh]
                 for b in range(B) for h in range(num_heads)],
                axis=0).astype(jnp.bfloat16)

        qh = _split(0)
        kh = _split(H)
        vh = _split(2 * H)

        # batched QK^T + masked softmax, issued once for all (batch, head) pairs
        s = jnp.einsum('hqd,hkd->hqk', qh, kh,
                       preferred_element_type=jnp.float32) * scale + bias   # (B*nH, S, S)
        m = jnp.max(s, axis=-1, keepdims=True)
        p = jnp.exp(s - m)
        p = p * pl.reciprocal(jnp.sum(p, axis=-1, keepdims=True), approx=True)

        # batched P.V
        ctx = jnp.einsum('hqk,hkd->hqd', p.astype(jnp.bfloat16), vh,
                         preferred_element_type=jnp.float32)                 # (B*nH, S, dh)

        # merge heads back to a lane-dense (B*S, H) slab
        ctx_all = jnp.concatenate(
            [jnp.concatenate([ctx[b * num_heads + h] for h in range(num_heads)], axis=-1)
             for b in range(B)], axis=0)

        # single K=H output projection + residual + LayerNorm
        attn = jnp.dot(ctx_all.astype(jnp.bfloat16), ow_ref[l],
                       preferred_element_type=jnp.float32) + ob_ref[l]
        h1 = _layernorm(attn + x, ln1g_ref[l], ln1b_ref[l], eps)

        # FFN: Linear -> GELU -> Linear -> residual + LayerNorm
        f = _gelu(jnp.dot(h1.astype(jnp.bfloat16), fiw_ref[l],
                          preferred_element_type=jnp.float32) + fib_ref[l])
        f2 = jnp.dot(f.astype(jnp.bfloat16), fow_ref[l],
                     preferred_element_type=jnp.float32) + fob_ref[l]
        x = _layernorm(f2 + h1, ln2g_ref[l], ln2b_ref[l], eps)

    # --- pooler (CLS token + tanh Linear) + dropout(identity) + classifier + ReLU ---
    cls = jnp.concatenate([x[b * S:b * S + 1, :] for b in range(B)], axis=0)  # (B, H)
    pooled = jnp.tanh(jnp.dot(cls.astype(jnp.bfloat16), pw_ref[...],
                              preferred_element_type=jnp.float32) + pb_ref[...])
    # nn.Dropout(0.5): inference-mode identity.
    # TODO(synk): training-mode dropout (Bernoulli mask via pltpu.prng) not implemented.
    logits = jnp.dot(pooled.astype(jnp.bfloat16), cw_ref[...],
                     preferred_element_type=jnp.float32) + cb_ref[...]
    o_ref[...] = jnp.maximum(logits, 0.0).astype(o_ref.dtype)


def pallas_bert_forward(params, input_ids, mask, cfg):
    B, S = input_ids.shape
    H, nH, L = cfg["hidden"], cfg["heads"], cfg["layers"]
    Cp = cfg["classes_padded"]

    # --- embeddings (data-dependent gathers stay in plain JAX) ---
    emb = (params["word_emb"][input_ids]
           + params["pos_emb"][jnp.arange(S)][None, :, :]
           + params["type_emb"][0][None, None, :]).astype(jnp.float32).reshape(B * S, H)

    # additive key-padding mask, broadcast once here to (B*nH, 1, S)
    bias = (1.0 - mask.astype(jnp.float32)) * -10000.0
    bias = jnp.broadcast_to(bias[:, None, None, :], (B, nH, 1, S)).reshape(B * nH, 1, S)

    args = (emb, bias, params["emb_ln_g"], params["emb_ln_b"],
            params["qkv_w"], params["qkv_b"], params["o_w"], params["o_b"],
            params["ln1_g"], params["ln1_b"],
            params["ffn_in_w"], params["ffn_in_b"],
            params["ffn_out_w"], params["ffn_out_b"],
            params["ln2_g"], params["ln2_b"],
            params["pool_w"], params["pool_b"],
            params["cls_w"], params["cls_b"])

    def full_spec(a):
        return pl.BlockSpec(a.shape, lambda: (0,) * a.ndim)

    logits_padded = pl.pallas_call(
        functools.partial(_bert_forward_kernel, batch=B, seq=S,
                          num_heads=nH, num_layers=L, eps=1e-12),
        out_shape=jax.ShapeDtypeStruct((B, Cp), jnp.float32),
        in_specs=[full_spec(a) for a in args],
        out_specs=pl.BlockSpec((B, Cp), lambda: (0, 0)),
    )(*args)
    return logits_padded[:, :cfg["classes"]]


# ---------------------------------------------------------------------------
# Model configuration & parameters
# ---------------------------------------------------------------------------

CFG = dict(vocab=128, max_pos=64, hidden=128, heads=4, ffn=256,
           layers=2, classes=15, classes_padded=128, batch=2, seq=16)


def make_params(key, cfg):
    keys = iter(jax.random.split(key, 64))
    H, I, L = cfg["hidden"], cfg["ffn"], cfg["layers"]
    C, Cp = cfg["classes"], cfg["classes_padded"]

    def w(shape, dtype=jnp.bfloat16, scale=0.02):
        return (scale * jax.random.normal(next(keys), shape)).astype(dtype)

    return {
        "word_emb": w((cfg["vocab"], H), jnp.float32),
        "pos_emb": w((cfg["max_pos"], H), jnp.float32),
        "type_emb": w((2, H), jnp.float32),
        "emb_ln_g": jnp.ones((1, H), jnp.float32),
        "emb_ln_b": jnp.zeros((1, H), jnp.float32),
        # All matmul weights stored bf16 in (K, N) layout (pre-transposed once
        # at init so the kernel never transposes the MXU RHS).
        "qkv_w": w((L, H, 3 * H)),                       # stacked Q|K|V per layer
        "qkv_b": jnp.zeros((L, 1, 3 * H), jnp.float32),
        "o_w": w((L, H, H)),
        "o_b": jnp.zeros((L, 1, H), jnp.float32),
        "ln1_g": jnp.ones((L, 1, H), jnp.float32),
        "ln1_b": jnp.zeros((L, 1, H), jnp.float32),
        "ffn_in_w": w((L, H, I)),
        "ffn_in_b": jnp.zeros((L, 1, I), jnp.float32),
        "ffn_out_w": w((L, I, H)),
        "ffn_out_b": jnp.zeros((L, 1, H), jnp.float32),
        "ln2_g": jnp.ones((L, 1, H), jnp.float32),
        "ln2_b": jnp.zeros((L, 1, H), jnp.float32),
        "pool_w": w((H, H)),
        "pool_b": jnp.zeros((1, H), jnp.float32),
        # classifier padded to 128 lane-dense output columns; first C are real.
        "cls_w": jnp.zeros((H, Cp), jnp.bfloat16).at[:, :C].set(w((H, C))),
        "cls_b": jnp.zeros((1, Cp), jnp.float32),
    }


def bert_classifier_forward(params, input_ids, mask, cfg):
    return pallas_bert_forward(params, input_ids, mask, cfg)


# ---------------------------------------------------------------------------
# Main
# ---------------------------------------------------------------------------

if __name__ == "__main__":
    key = jax.random.PRNGKey(0)
    pkey, ikey = jax.random.split(key)
    params = make_params(pkey, CFG)

    B, S = CFG["batch"], CFG["seq"]
    input_ids = jax.random.randint(ikey, (B, S), 0, CFG["vocab"], dtype=jnp.int32)
    # attention mask: second example has its last 4 tokens padded out
    mask = jnp.concatenate(
        [jnp.ones((1, S), jnp.int32),
         jnp.concatenate([jnp.ones((1, S - 4), jnp.int32),
                          jnp.zeros((1, 4), jnp.int32)], axis=1)],
        axis=0)

    out = bert_classifier_forward(params, input_ids, mask, CFG)
    out = jax.block_until_ready(out)
    assert out.shape == (B, CFG["classes"])
    assert bool(jnp.all(out >= 0.0))  # ReLU output is non-negative
    print("KERNEL_OK")
</pallas_src>

<mosaic_0001>
module attributes {stable_mosaic.version = 11 : i64} {
  func.func @_bert_forward_kernel(%arg0: memref<32x128xf32, #tpu.memory_space<vmem>>, %arg1: memref<8x1x16xf32, #tpu.memory_space<vmem>>, %arg2: memref<1x128xf32, #tpu.memory_space<vmem>>, %arg3: memref<1x128xf32, #tpu.memory_space<vmem>>, %arg4: memref<2x128x384xbf16, #tpu.memory_space<vmem>>, %arg5: memref<2x1x384xf32, #tpu.memory_space<vmem>>, %arg6: memref<2x128x128xbf16, #tpu.memory_space<vmem>>, %arg7: memref<2x1x128xf32, #tpu.memory_space<vmem>>, %arg8: memref<2x1x128xf32, #tpu.memory_space<vmem>>, %arg9: memref<2x1x128xf32, #tpu.memory_space<vmem>>, %arg10: memref<2x128x256xbf16, #tpu.memory_space<vmem>>, %arg11: memref<2x1x256xf32, #tpu.memory_space<vmem>>, %arg12: memref<2x256x128xbf16, #tpu.memory_space<vmem>>, %arg13: memref<2x1x128xf32, #tpu.memory_space<vmem>>, %arg14: memref<2x1x128xf32, #tpu.memory_space<vmem>>, %arg15: memref<2x1x128xf32, #tpu.memory_space<vmem>>, %arg16: memref<128x128xbf16, #tpu.memory_space<vmem>>, %arg17: memref<1x128xf32, #tpu.memory_space<vmem>>, %arg18: memref<128x128xbf16, #tpu.memory_space<vmem>>, %arg19: memref<1x128xf32, #tpu.memory_space<vmem>>, %arg20: memref<2x128xf32, #tpu.memory_space<vmem>>) attributes {dimension_semantics = [], scalar_prefetch = 0 : i64, scratch_operands = 0 : i64, tpu.core_type = #tpu.core_type<tc>} {
    %c0 = arith.constant 0 : index
    %c0_0 = arith.constant 0 : index
    %0 = vector.load %arg0[%c0, %c0_0] : memref<32x128xf32, #tpu.memory_space<vmem>>, vector<32x128xf32>
    %c0_1 = arith.constant 0 : index
    %c0_2 = arith.constant 0 : index
    %1 = vector.load %arg2[%c0_1, %c0_2] : memref<1x128xf32, #tpu.memory_space<vmem>>, vector<1x128xf32>
    %c0_3 = arith.constant 0 : index
    %c0_4 = arith.constant 0 : index
    %2 = vector.load %arg3[%c0_3, %c0_4] : memref<1x128xf32, #tpu.memory_space<vmem>>, vector<1x128xf32>
    %cst = arith.constant dense<0.000000e+00> : vector<32xf32>
    %3 = vector.multi_reduction <add>, %0, %cst [1] : vector<32x128xf32> to vector<32xf32>
    %4 = vector.shape_cast %3 : vector<32xf32> to vector<32x1xf32>
    %cst_5 = arith.constant 1.280000e+02 : f32
    %5 = vector.broadcast %cst_5 : f32 to vector<32x1xf32>
    %6 = arith.divf %4, %5 : vector<32x1xf32>
    %7 = vector.broadcast %6 : vector<32x1xf32> to vector<32x128xf32>
    %8 = arith.subf %0, %7 : vector<32x128xf32>
    %9 = arith.mulf %8, %8 : vector<32x128xf32>
    %cst_6 = arith.constant dense<0.000000e+00> : vector<32xf32>
    %10 = vector.multi_reduction <add>, %9, %cst_6 [1] : vector<32x128xf32> to vector<32xf32>
    %11 = vector.shape_cast %10 : vector<32xf32> to vector<32x1xf32>
    %cst_7 = arith.constant 1.280000e+02 : f32
    %12 = vector.broadcast %cst_7 : f32 to vector<32x1xf32>
    %13 = arith.divf %11, %12 : vector<32x1xf32>
    %cst_8 = arith.constant 9.99999996E-13 : f32
    %14 = vector.broadcast %cst_8 : f32 to vector<32x1xf32>
    %15 = arith.addf %13, %14 : vector<32x1xf32>
    %16 = math.rsqrt %15 : vector<32x1xf32>
    %17 = vector.broadcast %16 : vector<32x1xf32> to vector<32x128xf32>
    %18 = arith.mulf %8, %17 : vector<32x128xf32>
    %19 = vector.broadcast %1 : vector<1x128xf32> to vector<32x128xf32>
    %20 = arith.mulf %18, %19 : vector<32x128xf32>
    %21 = vector.broadcast %2 : vector<1x128xf32> to vector<32x128xf32>
    %22 = arith.addf %20, %21 : vector<32x128xf32>
    %c0_9 = arith.constant 0 : index
    %c0_10 = arith.constant 0 : index
    %c0_11 = arith.constant 0 : index
    %23 = vector.load %arg1[%c0_9, %c0_10, %c0_11] : memref<8x1x16xf32, #tpu.memory_space<vmem>>, vector<8x1x16xf32>
    %24 = arith.truncf %22 : vector<32x128xf32> to vector<32x128xbf16>
    %c0_12 = arith.constant 0 : index
    %c0_13 = arith.constant 0 : index
    %c0_14 = arith.constant 0 : index
    %25 = vector.load %arg4[%c0_12, %c0_13, %c0_14] : memref<2x128x384xbf16, #tpu.memory_space<vmem>>, vector<1x128x384xbf16>
    %26 = vector.shape_cast %25 : vector<1x128x384xbf16> to vector<128x384xbf16>
    %cst_15 = arith.constant dense<0.000000e+00> : vector<32x384xf32>
    %27 = tpu.matmul %24, %26, %cst_15 {dimension_numbers = #tpu.dot_dimension_numbers<[1], [0], [0], [1], [0, 0, 1, 1], [], []>} : vector<32x128xbf16>, vector<128x384xbf16>, vector<32x384xf32> -> vector<32x384xf32>
    %c0_16 = arith.constant 0 : index
    %c0_17 = arith.constant 0 : index
    %c0_18 = arith.constant 0 : index
    %28 = vector.load %arg5[%c0_16, %c0_17, %c0_18] : memref<2x1x384xf32, #tpu.memory_space<vmem>>, vector<1x1x384xf32>
    %29 = vector.shape_cast %28 : vector<1x1x384xf32> to vector<1x384xf32>
    %30 = vector.broadcast %29 : vector<1x384xf32> to vector<32x384xf32>
    %31 = arith.addf %27, %30 : vector<32x384xf32>
    %32 = vector.extract_strided_slice %31 {offsets = [0, 0], sizes = [16, 32], strides = [1, 1]} : vector<32x384xf32> to vector<16x32xf32>
    %33 = vector.extract_strided_slice %31 {offsets = [0, 32], sizes = [16, 32], strides = [1, 1]} : vector<32x384xf32> to vector<16x32xf32>
    %34 = vector.extract_strided_slice %31 {offsets = [0, 64], sizes = [16, 32], strides = [1, 1]} : vector<32x384xf32> to vector<16x32xf32>
    %35 = vector.extract_strided_slice %31 {offsets = [0, 96], sizes = [16, 32], strides = [1, 1]} : vector<32x384xf32> to vector<16x32xf32>
    %36 = vector.extract_strided_slice %31 {offsets = [16, 0], sizes = [16, 32], strides = [1, 1]} : vector<32x384xf32> to vector<16x32xf32>
    %37 = vector.extract_strided_slice %31 {offsets = [16, 32], sizes = [16, 32], strides = [1, 1]} : vector<32x384xf32> to vector<16x32xf32>
    %38 = vector.extract_strided_slice %31 {offsets = [16, 64], sizes = [16, 32], strides = [1, 1]} : vector<32x384xf32> to vector<16x32xf32>
    %39 = vector.extract_strided_slice %31 {offsets = [16, 96], sizes = [16, 32], strides = [1, 1]} : vector<32x384xf32> to vector<16x32xf32>
    %40 = vector.shape_cast %32 : vector<16x32xf32> to vector<1x16x32xf32>
    %41 = vector.shape_cast %33 : vector<16x32xf32> to vector<1x16x32xf32>
    %42 = vector.shape_cast %34 : vector<16x32xf32> to vector<1x16x32xf32>
    %43 = vector.shape_cast %35 : vector<16x32xf32> to vector<1x16x32xf32>
    %44 = vector.shape_cast %36 : vector<16x32xf32> to vector<1x16x32xf32>
    %45 = vector.shape_cast %37 : vector<16x32xf32> to vector<1x16x32xf32>
    %46 = vector.shape_cast %38 : vector<16x32xf32> to vector<1x16x32xf32>
    %47 = vector.shape_cast %39 : vector<16x32xf32> to vector<1x16x32xf32>
    %48 = tpu.concatenate %40, %41, %42, %43, %44, %45, %46, %47 in 0 : vector<1x16x32xf32>, vector<1x16x32xf32>, vector<1x16x32xf32>, vector<1x16x32xf32>, vector<1x16x32xf32>, vector<1x16x32xf32>, vector<1x16x32xf32>, vector<1x16x32xf32> -> vector<8x16x32xf32>
    %49 = arith.truncf %48 : vector<8x16x32xf32> to vector<8x16x32xbf16>
    %50 = vector.extract_strided_slice %31 {offsets = [0, 128], sizes = [16, 32], strides = [1, 1]} : vector<32x384xf32> to vector<16x32xf32>
    %51 = vector.extract_strided_slice %31 {offsets = [0, 160], sizes = [16, 32], strides = [1, 1]} : vector<32x384xf32> to vector<16x32xf32>
    %52 = vector.extract_strided_slice %31 {offsets = [0, 192], sizes = [16, 32], strides = [1, 1]} : vector<32x384xf32> to vector<16x32xf32>
    %53 = vector.extract_strided_slice %31 {offsets = [0, 224], sizes = [16, 32], strides = [1, 1]} : vector<32x384xf32> to vector<16x32xf32>
    %54 = vector.extract_strided_slice %31 {offsets = [16, 128], sizes = [16, 32], strides = [1, 1]} : vector<32x384xf32> to vector<16x32xf32>
    %55 = vector.extract_strided_slice %31 {offsets = [16, 160], sizes = [16, 32], strides = [1, 1]} : vector<32x384xf32> to vector<16x32xf32>
    %56 = vector.extract_strided_slice %31 {offsets = [16, 192], sizes = [16, 32], strides = [1, 1]} : vector<32x384xf32> to vector<16x32xf32>
    %57 = vector.extract_strided_slice %31 {offsets = [16, 224], sizes = [16, 32], strides = [1, 1]} : vector<32x384xf32> to vector<16x32xf32>
    %58 = vector.shape_cast %50 : vector<16x32xf32> to vector<1x16x32xf32>
    %59 = vector.shape_cast %51 : vector<16x32xf32> to vector<1x16x32xf32>
    %60 = vector.shape_cast %52 : vector<16x32xf32> to vector<1x16x32xf32>
    %61 = vector.shape_cast %53 : vector<16x32xf32> to vector<1x16x32xf32>
    %62 = vector.shape_cast %54 : vector<16x32xf32> to vector<1x16x32xf32>
    %63 = vector.shape_cast %55 : vector<16x32xf32> to vector<1x16x32xf32>
    %64 = vector.shape_cast %56 : vector<16x32xf32> to vector<1x16x32xf32>
    %65 = vector.shape_cast %57 : vector<16x32xf32> to vector<1x16x32xf32>
    %66 = tpu.concatenate %58, %59, %60, %61, %62, %63, %64, %65 in 0 : vector<1x16x32xf32>, vector<1x16x32xf32>, vector<1x16x32xf32>, vector<1x16x32xf32>, vector<1x16x32xf32>, vector<1x16x32xf32>, vector<1x16x32xf32>, vector<1x16x32xf32> -> vector<8x16x32xf32>
    %67 = arith.truncf %66 : vector<8x16x32xf32> to vector<8x16x32xbf16>
    %68 = vector.extract_strided_slice %31 {offsets = [0, 256], sizes = [16, 32], strides = [1, 1]} : vector<32x384xf32> to vector<16x32xf32>
    %69 = vector.extract_strided_slice %31 {offsets = [0, 288], sizes = [16, 32], strides = [1, 1]} : vector<32x384xf32> to vector<16x32xf32>
    %70 = vector.extract_strided_slice %31 {offsets = [0, 320], sizes = [16, 32], strides = [1, 1]} : vector<32x384xf32> to vector<16x32xf32>
    %71 = vector.extract_strided_slice %31 {offsets = [0, 352], sizes = [16, 32], strides = [1, 1]} : vector<32x384xf32> to vector<16x32xf32>
    %72 = vector.extract_strided_slice %31 {offsets = [16, 256], sizes = [16, 32], strides = [1, 1]} : vector<32x384xf32> to vector<16x32xf32>
    %73 = vector.extract_strided_slice %31 {offsets = [16, 288], sizes = [16, 32], strides = [1, 1]} : vector<32x384xf32> to vector<16x32xf32>
    %74 = vector.extract_strided_slice %31 {offsets = [16, 320], sizes = [16, 32], strides = [1, 1]} : vector<32x384xf32> to vector<16x32xf32>
    %75 = vector.extract_strided_slice %31 {offsets = [16, 352], sizes = [16, 32], strides = [1, 1]} : vector<32x384xf32> to vector<16x32xf32>
    %76 = vector.shape_cast %68 : vector<16x32xf32> to vector<1x16x32xf32>
    %77 = vector.shape_cast %69 : vector<16x32xf32> to vector<1x16x32xf32>
    %78 = vector.shape_cast %70 : vector<16x32xf32> to vector<1x16x32xf32>
    %79 = vector.shape_cast %71 : vector<16x32xf32> to vector<1x16x32xf32>
    %80 = vector.shape_cast %72 : vector<16x32xf32> to vector<1x16x32xf32>
    %81 = vector.shape_cast %73 : vector<16x32xf32> to vector<1x16x32xf32>
    %82 = vector.shape_cast %74 : vector<16x32xf32> to vector<1x16x32xf32>
    %83 = vector.shape_cast %75 : vector<16x32xf32> to vector<1x16x32xf32>
    %84 = tpu.concatenate %76, %77, %78, %79, %80, %81, %82, %83 in 0 : vector<1x16x32xf32>, vector<1x16x32xf32>, vector<1x16x32xf32>, vector<1x16x32xf32>, vector<1x16x32xf32>, vector<1x16x32xf32>, vector<1x16x32xf32>, vector<1x16x32xf32> -> vector<8x16x32xf32>
    %85 = arith.truncf %84 : vector<8x16x32xf32> to vector<8x16x32xbf16>
    "tpu.trace_start"() <{level = 10 : i32, message = "hqd,hkd->hqk"}> : () -> ()
    %cst_19 = arith.constant dense<0.000000e+00> : vector<8x16x16xf32>
    %86 = tpu.matmul %49, %67, %cst_19 {dimension_numbers = #tpu.dot_dimension_numbers<[2], [2], [1], [1], [0, 0, 0, 1, 1, 1], [0], [0]>} : vector<8x16x32xbf16>, vector<8x16x32xbf16>, vector<8x16x16xf32> -> vector<8x16x16xf32>
    "tpu.trace_stop"() : () -> ()
    %cst_20 = arith.constant 0.176776692 : f32
    %87 = vector.broadcast %cst_20 : f32 to vector<8x16x16xf32>
    %88 = arith.mulf %86, %87 : vector<8x16x16xf32>
    %89 = vector.broadcast %23 : vector<8x1x16xf32> to vector<8x16x16xf32>
    %90 = arith.addf %88, %89 : vector<8x16x16xf32>
    %cst_21 = arith.constant dense<0xFF800000> : vector<8x16xf32>
    %91 = vector.multi_reduction <maximumf>, %90, %cst_21 [2] : vector<8x16x16xf32> to vector<8x16xf32>
    %92 = vector.shape_cast %91 : vector<8x16xf32> to vector<8x16x1xf32>
    %93 = vector.broadcast %92 : vector<8x16x1xf32> to vector<8x16x16xf32>
    %94 = arith.subf %90, %93 : vector<8x16x16xf32>
    %95 = math.exp %94 : vector<8x16x16xf32>
    %cst_22 = arith.constant dense<0.000000e+00> : vector<8x16xf32>
    %96 = vector.multi_reduction <add>, %95, %cst_22 [2] : vector<8x16x16xf32> to vector<8x16xf32>
    %97 = vector.shape_cast %96 : vector<8x16xf32> to vector<8x16x1xf32>
    %98 = tpu.reciprocal %97 {approx = true} : vector<8x16x1xf32> -> vector<8x16x1xf32>
    %99 = vector.broadcast %98 : vector<8x16x1xf32> to vector<8x16x16xf32>
    %100 = arith.mulf %95, %99 : vector<8x16x16xf32>
    %101 = arith.truncf %100 : vector<8x16x16xf32> to vector<8x16x16xbf16>
    "tpu.trace_start"() <{level = 10 : i32, message = "hqk,hkd->hqd"}> : () -> ()
    %cst_23 = arith.constant dense<0.000000e+00> : vector<8x16x32xf32>
    %102 = tpu.matmul %101, %85, %cst_23 {dimension_numbers = #tpu.dot_dimension_numbers<[2], [1], [1], [2], [0, 0, 0, 1, 1, 2], [0], [0]>} : vector<8x16x16xbf16>, vector<8x16x32xbf16>, vector<8x16x32xf32> -> vector<8x16x32xf32>
    "tpu.trace_stop"() : () -> ()
    %103 = vector.extract_strided_slice %102 {offsets = [0, 0, 0], sizes = [1, 16, 32], strides = [1, 1, 1]} : vector<8x16x32xf32> to vector<1x16x32xf32>
    %104 = vector.shape_cast %103 : vector<1x16x32xf32> to vector<16x32xf32>
    %105 = vector.extract_strided_slice %102 {offsets = [1, 0, 0], sizes = [1, 16, 32], strides = [1, 1, 1]} : vector<8x16x32xf32> to vector<1x16x32xf32>
    %106 = vector.shape_cast %105 : vector<1x16x32xf32> to vector<16x32xf32>
    %107 = vector.extract_strided_slice %102 {offsets = [2, 0, 0], sizes = [1, 16, 32], strides = [1, 1, 1]} : vector<8x16x32xf32> to vector<1x16x32xf32>
    %108 = vector.shape_cast %107 : vector<1x16x32xf32> to vector<16x32xf32>
    %109 = vector.extract_strided_slice %102 {offsets = [3, 0, 0], sizes = [1, 16, 32], strides = [1, 1, 1]} : vector<8x16x32xf32> to vector<1x16x32xf32>
    %110 = vector.shape_cast %109 : vector<1x16x32xf32> to vector<16x32xf32>
    %111 = tpu.concatenate %104, %106, %108, %110 in 1 : vector<16x32xf32>, vector<16x32xf32>, vector<16x32xf32>, vector<16x32xf32> -> vector<16x128xf32>
    %112 = vector.extract_strided_slice %102 {offsets = [4, 0, 0], sizes = [1, 16, 32], strides = [1, 1, 1]} : vector<8x16x32xf32> to vector<1x16x32xf32>
    %113 = vector.shape_cast %112 : vector<1x16x32xf32> to vector<16x32xf32>
    %114 = vector.extract_strided_slice %102 {offsets = [5, 0, 0], sizes = [1, 16, 32], strides = [1, 1, 1]} : vector<8x16x32xf32> to vector<1x16x32xf32>
    %115 = vector.shape_cast %114 : vector<1x16x32xf32> to vector<16x32xf32>
    %116 = vector.extract_strided_slice %102 {offsets = [6, 0, 0], sizes = [1, 16, 32], strides = [1, 1, 1]} : vector<8x16x32xf32> to vector<1x16x32xf32>
    %117 = vector.shape_cast %116 : vector<1x16x32xf32> to vector<16x32xf32>
    %118 = vector.extract_strided_slice %102 {offsets = [7, 0, 0], sizes = [1, 16, 32], strides = [1, 1, 1]} : vector<8x16x32xf32> to vector<1x16x32xf32>
    %119 = vector.shape_cast %118 : vector<1x16x32xf32> to vector<16x32xf32>
    %120 = tpu.concatenate %113, %115, %117, %119 in 1 : vector<16x32xf32>, vector<16x32xf32>, vector<16x32xf32>, vector<16x32xf32> -> vector<16x128xf32>
    %121 = tpu.concatenate %111, %120 in 0 : vector<16x128xf32>, vector<16x128xf32> -> vector<32x128xf32>
    %122 = arith.truncf %121 : vector<32x128xf32> to vector<32x128xbf16>
    %c0_24 = arith.constant 0 : index
    %c0_25 = arith.constant 0 : index
    %c0_26 = arith.constant 0 : index
    %123 = vector.load %arg6[%c0_24, %c0_25, %c0_26] : memref<2x128x128xbf16, #tpu.memory_space<vmem>>, vector<1x128x128xbf16>
    %124 = vector.shape_cast %123 : vector<1x128x128xbf16> to vector<128x128xbf16>
    %cst_27 = arith.constant dense<0.000000e+00> : vector<32x128xf32>
    %125 = tpu.matmul %122, %124, %cst_27 {dimension_numbers = #tpu.dot_dimension_numbers<[1], [0], [0], [1], [0, 0, 1, 1], [], []>} : vector<32x128xbf16>, vector<128x128xbf16>, vector<32x128xf32> -> vector<32x128xf32>
    %c0_28 = arith.constant 0 : index
    %c0_29 = arith.constant 0 : index
    %c0_30 = arith.constant 0 : index
    %126 = vector.load %arg7[%c0_28, %c0_29, %c0_30] : memref<2x1x128xf32, #tpu.memory_space<vmem>>, vector<1x1x128xf32>
    %127 = vector.shape_cast %126 : vector<1x1x128xf32> to vector<1x128xf32>
    %128 = vector.broadcast %127 : vector<1x128xf32> to vector<32x128xf32>
    %129 = arith.addf %125, %128 : vector<32x128xf32>
    %130 = arith.addf %129, %22 : vector<32x128xf32>
    %c0_31 = arith.constant 0 : index
    %c0_32 = arith.constant 0 : index
    %c0_33 = arith.constant 0 : index
    %131 = vector.load %arg8[%c0_31, %c0_32, %c0_33] : memref<2x1x128xf32, #tpu.memory_space<vmem>>, vector<1x1x128xf32>
    %132 = vector.shape_cast %131 : vector<1x1x128xf32> to vector<1x128xf32>
    %c0_34 = arith.constant 0 : index
    %c0_35 = arith.constant 0 : index
    %c0_36 = arith.constant 0 : index
    %133 = vector.load %arg9[%c0_34, %c0_35, %c0_36] : memref<2x1x128xf32, #tpu.memory_space<vmem>>, vector<1x1x128xf32>
    %134 = vector.shape_cast %133 : vector<1x1x128xf32> to vector<1x128xf32>
    %cst_37 = arith.constant dense<0.000000e+00> : vector<32xf32>
    %135 = vector.multi_reduction <add>, %130, %cst_37 [1] : vector<32x128xf32> to vector<32xf32>
    %136 = vector.shape_cast %135 : vector<32xf32> to vector<32x1xf32>
    %cst_38 = arith.constant 1.280000e+02 : f32
    %137 = vector.broadcast %cst_38 : f32 to vector<32x1xf32>
    %138 = arith.divf %136, %137 : vector<32x1xf32>
    %139 = vector.broadcast %138 : vector<32x1xf32> to vector<32x128xf32>
    %140 = arith.subf %130, %139 : vector<32x128xf32>
    %141 = arith.mulf %140, %140 : vector<32x128xf32>
    %cst_39 = arith.constant dense<0.000000e+00> : vector<32xf32>
    %142 = vector.multi_reduction <add>, %141, %cst_39 [1] : vector<32x128xf32> to vector<32xf32>
    %143 = vector.shape_cast %142 : vector<32xf32> to vector<32x1xf32>
    %cst_40 = arith.constant 1.280000e+02 : f32
    %144 = vector.broadcast %cst_40 : f32 to vector<32x1xf32>
    %145 = arith.divf %143, %144 : vector<32x1xf32>
    %cst_41 = arith.constant 9.99999996E-13 : f32
    %146 = vector.broadcast %cst_41 : f32 to vector<32x1xf32>
    %147 = arith.addf %145, %146 : vector<32x1xf32>
    %148 = math.rsqrt %147 : vector<32x1xf32>
    %149 = vector.broadcast %148 : vector<32x1xf32> to vector<32x128xf32>
    %150 = arith.mulf %140, %149 : vector<32x128xf32>
    %151 = vector.broadcast %132 : vector<1x128xf32> to vector<32x128xf32>
    %152 = arith.mulf %150, %151 : vector<32x128xf32>
    %153 = vector.broadcast %134 : vector<1x128xf32> to vector<32x128xf32>
    %154 = arith.addf %152, %153 : vector<32x128xf32>
    %155 = arith.truncf %154 : vector<32x128xf32> to vector<32x128xbf16>
    %c0_42 = arith.constant 0 : index
    %c0_43 = arith.constant 0 : index
    %c0_44 = arith.constant 0 : index
    %156 = vector.load %arg10[%c0_42, %c0_43, %c0_44] : memref<2x128x256xbf16, #tpu.memory_space<vmem>>, vector<1x128x256xbf16>
    %157 = vector.shape_cast %156 : vector<1x128x256xbf16> to vector<128x256xbf16>
    %cst_45 = arith.constant dense<0.000000e+00> : vector<32x256xf32>
    %158 = tpu.matmul %155, %157, %cst_45 {dimension_numbers = #tpu.dot_dimension_numbers<[1], [0], [0], [1], [0, 0, 1, 1], [], []>} : vector<32x128xbf16>, vector<128x256xbf16>, vector<32x256xf32> -> vector<32x256xf32>
    %c0_46 = arith.constant 0 : index
    %c0_47 = arith.constant 0 : index
    %c0_48 = arith.constant 0 : index
    %159 = vector.load %arg11[%c0_46, %c0_47, %c0_48] : memref<2x1x256xf32, #tpu.memory_space<vmem>>, vector<1x1x256xf32>
    %160 = vector.shape_cast %159 : vector<1x1x256xf32> to vector<1x256xf32>
    %161 = vector.broadcast %160 : vector<1x256xf32> to vector<32x256xf32>
    %162 = arith.addf %158, %161 : vector<32x256xf32>
    %cst_49 = arith.constant 5.000000e-01 : f32
    %163 = vector.broadcast %cst_49 : f32 to vector<32x256xf32>
    %164 = arith.mulf %163, %162 : vector<32x256xf32>
    %cst_50 = arith.constant 4.471500e-02 : f32
    %165 = vector.broadcast %cst_50 : f32 to vector<32x256xf32>
    %166 = arith.mulf %165, %162 : vector<32x256xf32>
    %167 = arith.mulf %166, %162 : vector<32x256xf32>
    %168 = arith.mulf %167, %162 : vector<32x256xf32>
    %169 = arith.addf %162, %168 : vector<32x256xf32>
    %cst_51 = arith.constant 0.797884583 : f32
    %170 = vector.broadcast %cst_51 : f32 to vector<32x256xf32>
    %171 = arith.mulf %170, %169 : vector<32x256xf32>
    %172 = math.tanh %171 : vector<32x256xf32>
    %cst_52 = arith.constant 1.000000e+00 : f32
    %173 = vector.broadcast %cst_52 : f32 to vector<32x256xf32>
    %174 = arith.addf %173, %172 : vector<32x256xf32>
    %175 = arith.mulf %164, %174 : vector<32x256xf32>
    %176 = arith.truncf %175 : vector<32x256xf32> to vector<32x256xbf16>
    %c0_53 = arith.constant 0 : index
    %c0_54 = arith.constant 0 : index
    %c0_55 = arith.constant 0 : index
    %177 = vector.load %arg12[%c0_53, %c0_54, %c0_55] : memref<2x256x128xbf16, #tpu.memory_space<vmem>>, vector<1x256x128xbf16>
    %178 = vector.shape_cast %177 : vector<1x256x128xbf16> to vector<256x128xbf16>
    %cst_56 = arith.constant dense<0.000000e+00> : vector<32x128xf32>
    %179 = tpu.matmul %176, %178, %cst_56 {dimension_numbers = #tpu.dot_dimension_numbers<[1], [0], [0], [1], [0, 0, 1, 1], [], []>} : vector<32x256xbf16>, vector<256x128xbf16>, vector<32x128xf32> -> vector<32x128xf32>
    %c0_57 = arith.constant 0 : index
    %c0_58 = arith.constant 0 : index
    %c0_59 = arith.constant 0 : index
    %180 = vector.load %arg13[%c0_57, %c0_58, %c0_59] : memref<2x1x128xf32, #tpu.memory_space<vmem>>, vector<1x1x128xf32>
    %181 = vector.shape_cast %180 : vector<1x1x128xf32> to vector<1x128xf32>
    %182 = vector.broadcast %181 : vector<1x128xf32> to vector<32x128xf32>
    %183 = arith.addf %179, %182 : vector<32x128xf32>
    %184 = arith.addf %183, %154 : vector<32x128xf32>
    %c0_60 = arith.constant 0 : index
    %c0_61 = arith.constant 0 : index
    %c0_62 = arith.constant 0 : index
    %185 = vector.load %arg14[%c0_60, %c0_61, %c0_62] : memref<2x1x128xf32, #tpu.memory_space<vmem>>, vector<1x1x128xf32>
    %186 = vector.shape_cast %185 : vector<1x1x128xf32> to vector<1x128xf32>
    %c0_63 = arith.constant 0 : index
    %c0_64 = arith.constant 0 : index
    %c0_65 = arith.constant 0 : index
    %187 = vector.load %arg15[%c0_63, %c0_64, %c0_65] : memref<2x1x128xf32, #tpu.memory_space<vmem>>, vector<1x1x128xf32>
    %188 = vector.shape_cast %187 : vector<1x1x128xf32> to vector<1x128xf32>
    %cst_66 = arith.constant dense<0.000000e+00> : vector<32xf32>
    %189 = vector.multi_reduction <add>, %184, %cst_66 [1] : vector<32x128xf32> to vector<32xf32>
    %190 = vector.shape_cast %189 : vector<32xf32> to vector<32x1xf32>
    %cst_67 = arith.constant 1.280000e+02 : f32
    %191 = vector.broadcast %cst_67 : f32 to vector<32x1xf32>
    %192 = arith.divf %190, %191 : vector<32x1xf32>
    %193 = vector.broadcast %192 : vector<32x1xf32> to vector<32x128xf32>
    %194 = arith.subf %184, %193 : vector<32x128xf32>
    %195 = arith.mulf %194, %194 : vector<32x128xf32>
    %cst_68 = arith.constant dense<0.000000e+00> : vector<32xf32>
    %196 = vector.multi_reduction <add>, %195, %cst_68 [1] : vector<32x128xf32> to vector<32xf32>
    %197 = vector.shape_cast %196 : vector<32xf32> to vector<32x1xf32>
    %cst_69 = arith.constant 1.280000e+02 : f32
    %198 = vector.broadcast %cst_69 : f32 to vector<32x1xf32>
    %199 = arith.divf %197, %198 : vector<32x1xf32>
    %cst_70 = arith.constant 9.99999996E-13 : f32
    %200 = vector.broadcast %cst_70 : f32 to vector<32x1xf32>
    %201 = arith.addf %199, %200 : vector<32x1xf32>
    %202 = math.rsqrt %201 : vector<32x1xf32>
    %203 = vector.broadcast %202 : vector<32x1xf32> to vector<32x128xf32>
    %204 = arith.mulf %194, %203 : vector<32x128xf32>
    %205 = vector.broadcast %186 : vector<1x128xf32> to vector<32x128xf32>
    %206 = arith.mulf %204, %205 : vector<32x128xf32>
    %207 = vector.broadcast %188 : vector<1x128xf32> to vector<32x128xf32>
    %208 = arith.addf %206, %207 : vector<32x128xf32>
    %209 = arith.truncf %208 : vector<32x128xf32> to vector<32x128xbf16>
    %c1 = arith.constant 1 : index
    %c0_71 = arith.constant 0 : index
    %c0_72 = arith.constant 0 : index
    %210 = vector.load %arg4[%c1, %c0_71, %c0_72] : memref<2x128x384xbf16, #tpu.memory_space<vmem>>, vector<1x128x384xbf16>
    %211 = vector.shape_cast %210 : vector<1x128x384xbf16> to vector<128x384xbf16>
    %cst_73 = arith.constant dense<0.000000e+00> : vector<32x384xf32>
    %212 = tpu.matmul %209, %211, %cst_73 {dimension_numbers = #tpu.dot_dimension_numbers<[1], [0], [0], [1], [0, 0, 1, 1], [], []>} : vector<32x128xbf16>, vector<128x384xbf16>, vector<32x384xf32> -> vector<32x384xf32>
    %c1_74 = arith.constant 1 : index
    %c0_75 = arith.constant 0 : index
    %c0_76 = arith.constant 0 : index
    %213 = vector.load %arg5[%c1_74, %c0_75, %c0_76] : memref<2x1x384xf32, #tpu.memory_space<vmem>>, vector<1x1x384xf32>
    %214 = vector.shape_cast %213 : vector<1x1x384xf32> to vector<1x384xf32>
    %215 = vector.broadcast %214 : vector<1x384xf32> to vector<32x384xf32>
    %216 = arith.addf %212, %215 : vector<32x384xf32>
    %217 = vector.extract_strided_slice %216 {offsets = [0, 0], sizes = [16, 32], strides = [1, 1]} : vector<32x384xf32> to vector<16x32xf32>
    %218 = vector.extract_strided_slice %216 {offsets = [0, 32], sizes = [16, 32], strides = [1, 1]} : vector<32x384xf32> to vector<16x32xf32>
    %219 = vector.extract_strided_slice %216 {offsets = [0, 64], sizes = [16, 32], strides = [1, 1]} : vector<32x384xf32> to vector<16x32xf32>
    %220 = vector.extract_strided_slice %216 {offsets = [0, 96], sizes = [16, 32], strides = [1, 1]} : vector<32x384xf32> to vector<16x32xf32>
    %221 = vector.extract_strided_slice %216 {offsets = [16, 0], sizes = [16, 32], strides = [1, 1]} : vector<32x384xf32> to vector<16x32xf32>
    %222 = vector.extract_strided_slice %216 {offsets = [16, 32], sizes = [16, 32], strides = [1, 1]} : vector<32x384xf32> to vector<16x32xf32>
    %223 = vector.extract_strided_slice %216 {offsets = [16, 64], sizes = [16, 32], strides = [1, 1]} : vector<32x384xf32> to vector<16x32xf32>
    %224 = vector.extract_strided_slice %216 {offsets = [16, 96], sizes = [16, 32], strides = [1, 1]} : vector<32x384xf32> to vector<16x32xf32>
    %225 = vector.shape_cast %217 : vector<16x32xf32> to vector<1x16x32xf32>
    %226 = vector.shape_cast %218 : vector<16x32xf32> to vector<1x16x32xf32>
    %227 = vector.shape_cast %219 : vector<16x32xf32> to vector<1x16x32xf32>
    %228 = vector.shape_cast %220 : vector<16x32xf32> to vector<1x16x32xf32>
    %229 = vector.shape_cast %221 : vector<16x32xf32> to vector<1x16x32xf32>
    %230 = vector.shape_cast %222 : vector<16x32xf32> to vector<1x16x32xf32>
    %231 = vector.shape_cast %223 : vector<16x32xf32> to vector<1x16x32xf32>
    %232 = vector.shape_cast %224 : vector<16x32xf32> to vector<1x16x32xf32>
    %233 = tpu.concatenate %225, %226, %227, %228, %229, %230, %231, %232 in 0 : vector<1x16x32xf32>, vector<1x16x32xf32>, vector<1x16x32xf32>, vector<1x16x32xf32>, vector<1x16x32xf32>, vector<1x16x32xf32>, vector<1x16x32xf32>, vector<1x16x32xf32> -> vector<8x16x32xf32>
    %234 = arith.truncf %233 : vector<8x16x32xf32> to vector<8x16x32xbf16>
    %235 = vector.extract_strided_slice %216 {offsets = [0, 128], sizes = [16, 32], strides = [1, 1]} : vector<32x384xf32> to vector<16x32xf32>
    %236 = vector.extract_strided_slice %216 {offsets = [0, 160], sizes = [16, 32], strides = [1, 1]} : vector<32x384xf32> to vector<16x32xf32>
    %237 = vector.extract_strided_slice %216 {offsets = [0, 192], sizes = [16, 32], strides = [1, 1]} : vector<32x384xf32> to vector<16x32xf32>
    %238 = vector.extract_strided_slice %216 {offsets = [0, 224], sizes = [16, 32], strides = [1, 1]} : vector<32x384xf32> to vector<16x32xf32>
    %239 = vector.extract_strided_slice %216 {offsets = [16, 128], sizes = [16, 32], strides = [1, 1]} : vector<32x384xf32> to vector<16x32xf32>
    %240 = vector.extract_strided_slice %216 {offsets = [16, 160], sizes = [16, 32], strides = [1, 1]} : vector<32x384xf32> to vector<16x32xf32>
    %241 = vector.extract_strided_slice %216 {offsets = [16, 192], sizes = [16, 32], strides = [1, 1]} : vector<32x384xf32> to vector<16x32xf32>
    %242 = vector.extract_strided_slice %216 {offsets = [16, 224], sizes = [16, 32], strides = [1, 1]} : vector<32x384xf32> to vector<16x32xf32>
    %243 = vector.shape_cast %235 : vector<16x32xf32> to vector<1x16x32xf32>
    %244 = vector.shape_cast %236 : vector<16x32xf32> to vector<1x16x32xf32>
    %245 = vector.shape_cast %237 : vector<16x32xf32> to vector<1x16x32xf32>
    %246 = vector.shape_cast %238 : vector<16x32xf32> to vector<1x16x32xf32>
    %247 = vector.shape_cast %239 : vector<16x32xf32> to vector<1x16x32xf32>
    %248 = vector.shape_cast %240 : vector<16x32xf32> to vector<1x16x32xf32>
    %249 = vector.shape_cast %241 : vector<16x32xf32> to vector<1x16x32xf32>
    %250 = vector.shape_cast %242 : vector<16x32xf32> to vector<1x16x32xf32>
    %251 = tpu.concatenate %243, %244, %245, %246, %247, %248, %249, %250 in 0 : vector<1x16x32xf32>, vector<1x16x32xf32>, vector<1x16x32xf32>, vector<1x16x32xf32>, vector<1x16x32xf32>, vector<1x16x32xf32>, vector<1x16x32xf32>, vector<1x16x32xf32> -> vector<8x16x32xf32>
    %252 = arith.truncf %251 : vector<8x16x32xf32> to vector<8x16x32xbf16>
    %253 = vector.extract_strided_slice %216 {offsets = [0, 256], sizes = [16, 32], strides = [1, 1]} : vector<32x384xf32> to vector<16x32xf32>
    %254 = vector.extract_strided_slice %216 {offsets = [0, 288], sizes = [16, 32], strides = [1, 1]} : vector<32x384xf32> to vector<16x32xf32>
    %255 = vector.extract_strided_slice %216 {offsets = [0, 320], sizes = [16, 32], strides = [1, 1]} : vector<32x384xf32> to vector<16x32xf32>
    %256 = vector.extract_strided_slice %216 {offsets = [0, 352], sizes = [16, 32], strides = [1, 1]} : vector<32x384xf32> to vector<16x32xf32>
    %257 = vector.extract_strided_slice %216 {offsets = [16, 256], sizes = [16, 32], strides = [1, 1]} : vector<32x384xf32> to vector<16x32xf32>
    %258 = vector.extract_strided_slice %216 {offsets = [16, 288], sizes = [16, 32], strides = [1, 1]} : vector<32x384xf32> to vector<16x32xf32>
    %259 = vector.extract_strided_slice %216 {offsets = [16, 320], sizes = [16, 32], strides = [1, 1]} : vector<32x384xf32> to vector<16x32xf32>
    %260 = vector.extract_strided_slice %216 {offsets = [16, 352], sizes = [16, 32], strides = [1, 1]} : vector<32x384xf32> to vector<16x32xf32>
    %261 = vector.shape_cast %253 : vector<16x32xf32> to vector<1x16x32xf32>
    %262 = vector.shape_cast %254 : vector<16x32xf32> to vector<1x16x32xf32>
    %263 = vector.shape_cast %255 : vector<16x32xf32> to vector<1x16x32xf32>
    %264 = vector.shape_cast %256 : vector<16x32xf32> to vector<1x16x32xf32>
    %265 = vector.shape_cast %257 : vector<16x32xf32> to vector<1x16x32xf32>
    %266 = vector.shape_cast %258 : vector<16x32xf32> to vector<1x16x32xf32>
    %267 = vector.shape_cast %259 : vector<16x32xf32> to vector<1x16x32xf32>
    %268 = vector.shape_cast %260 : vector<16x32xf32> to vector<1x16x32xf32>
    %269 = tpu.concatenate %261, %262, %263, %264, %265, %266, %267, %268 in 0 : vector<1x16x32xf32>, vector<1x16x32xf32>, vector<1x16x32xf32>, vector<1x16x32xf32>, vector<1x16x32xf32>, vector<1x16x32xf32>, vector<1x16x32xf32>, vector<1x16x32xf32> -> vector<8x16x32xf32>
    %270 = arith.truncf %269 : vector<8x16x32xf32> to vector<8x16x32xbf16>
    "tpu.trace_start"() <{level = 10 : i32, message = "hqd,hkd->hqk"}> : () -> ()
    %cst_77 = arith.constant dense<0.000000e+00> : vector<8x16x16xf32>
    %271 = tpu.matmul %234, %252, %cst_77 {dimension_numbers = #tpu.dot_dimension_numbers<[2], [2], [1], [1], [0, 0, 0, 1, 1, 1], [0], [0]>} : vector<8x16x32xbf16>, vector<8x16x32xbf16>, vector<8x16x16xf32> -> vector<8x16x16xf32>
    "tpu.trace_stop"() : () -> ()
    %cst_78 = arith.constant 0.176776692 : f32
    %272 = vector.broadcast %cst_78 : f32 to vector<8x16x16xf32>
    %273 = arith.mulf %271, %272 : vector<8x16x16xf32>
    %274 = vector.broadcast %23 : vector<8x1x16xf32> to vector<8x16x16xf32>
    %275 = arith.addf %273, %274 : vector<8x16x16xf32>
    %cst_79 = arith.constant dense<0xFF800000> : vector<8x16xf32>
    %276 = vector.multi_reduction <maximumf>, %275, %cst_79 [2] : vector<8x16x16xf32> to vector<8x16xf32>
    %277 = vector.shape_cast %276 : vector<8x16xf32> to vector<8x16x1xf32>
    %278 = vector.broadcast %277 : vector<8x16x1xf32> to vector<8x16x16xf32>
    %279 = arith.subf %275, %278 : vector<8x16x16xf32>
    %280 = math.exp %279 : vector<8x16x16xf32>
    %cst_80 = arith.constant dense<0.000000e+00> : vector<8x16xf32>
    %281 = vector.multi_reduction <add>, %280, %cst_80 [2] : vector<8x16x16xf32> to vector<8x16xf32>
    %282 = vector.shape_cast %281 : vector<8x16xf32> to vector<8x16x1xf32>
    %283 = tpu.reciprocal %282 {approx = true} : vector<8x16x1xf32> -> vector<8x16x1xf32>
    %284 = vector.broadcast %283 : vector<8x16x1xf32> to vector<8x16x16xf32>
    %285 = arith.mulf %280, %284 : vector<8x16x16xf32>
    %286 = arith.truncf %285 : vector<8x16x16xf32> to vector<8x16x16xbf16>
    "tpu.trace_start"() <{level = 10 : i32, message = "hqk,hkd->hqd"}> : () -> ()
    %cst_81 = arith.constant dense<0.000000e+00> : vector<8x16x32xf32>
    %287 = tpu.matmul %286, %270, %cst_81 {dimension_numbers = #tpu.dot_dimension_numbers<[2], [1], [1], [2], [0, 0, 0, 1, 1, 2], [0], [0]>} : vector<8x16x16xbf16>, vector<8x16x32xbf16>, vector<8x16x32xf32> -> vector<8x16x32xf32>
    "tpu.trace_stop"() : () -> ()
    %288 = vector.extract_strided_slice %287 {offsets = [0, 0, 0], sizes = [1, 16, 32], strides = [1, 1, 1]} : vector<8x16x32xf32> to vector<1x16x32xf32>
    %289 = vector.shape_cast %288 : vector<1x16x32xf32> to vector<16x32xf32>
    %290 = vector.extract_strided_slice %287 {offsets = [1, 0, 0], sizes = [1, 16, 32], strides = [1, 1, 1]} : vector<8x16x32xf32> to vector<1x16x32xf32>
    %291 = vector.shape_cast %290 : vector<1x16x32xf32> to vector<16x32xf32>
    %292 = vector.extract_strided_slice %287 {offsets = [2, 0, 0], sizes = [1, 16, 32], strides = [1, 1, 1]} : vector<8x16x32xf32> to vector<1x16x32xf32>
    %293 = vector.shape_cast %292 : vector<1x16x32xf32> to vector<16x32xf32>
    %294 = vector.extract_strided_slice %287 {offsets = [3, 0, 0], sizes = [1, 16, 32], strides = [1, 1, 1]} : vector<8x16x32xf32> to vector<1x16x32xf32>
    %295 = vector.shape_cast %294 : vector<1x16x32xf32> to vector<16x32xf32>
    %296 = tpu.concatenate %289, %291, %293, %295 in 1 : vector<16x32xf32>, vector<16x32xf32>, vector<16x32xf32>, vector<16x32xf32> -> vector<16x128xf32>
    %297 = vector.extract_strided_slice %287 {offsets = [4, 0, 0], sizes = [1, 16, 32], strides = [1, 1, 1]} : vector<8x16x32xf32> to vector<1x16x32xf32>
    %298 = vector.shape_cast %297 : vector<1x16x32xf32> to vector<16x32xf32>
    %299 = vector.extract_strided_slice %287 {offsets = [5, 0, 0], sizes = [1, 16, 32], strides = [1, 1, 1]} : vector<8x16x32xf32> to vector<1x16x32xf32>
    %300 = vector.shape_cast %299 : vector<1x16x32xf32> to vector<16x32xf32>
    %301 = vector.extract_strided_slice %287 {offsets = [6, 0, 0], sizes = [1, 16, 32], strides = [1, 1, 1]} : vector<8x16x32xf32> to vector<1x16x32xf32>
    %302 = vector.shape_cast %301 : vector<1x16x32xf32> to vector<16x32xf32>
    %303 = vector.extract_strided_slice %287 {offsets = [7, 0, 0], sizes = [1, 16, 32], strides = [1, 1, 1]} : vector<8x16x32xf32> to vector<1x16x32xf32>
    %304 = vector.shape_cast %303 : vector<1x16x32xf32> to vector<16x32xf32>
    %305 = tpu.concatenate %298, %300, %302, %304 in 1 : vector<16x32xf32>, vector<16x32xf32>, vector<16x32xf32>, vector<16x32xf32> -> vector<16x128xf32>
    %306 = tpu.concatenate %296, %305 in 0 : vector<16x128xf32>, vector<16x128xf32> -> vector<32x128xf32>
    %307 = arith.truncf %306 : vector<32x128xf32> to vector<32x128xbf16>
    %c1_82 = arith.constant 1 : index
    %c0_83 = arith.constant 0 : index
    %c0_84 = arith.constant 0 : index
    %308 = vector.load %arg6[%c1_82, %c0_83, %c0_84] : memref<2x128x128xbf16, #tpu.memory_space<vmem>>, vector<1x128x128xbf16>
    %309 = vector.shape_cast %308 : vector<1x128x128xbf16> to vector<128x128xbf16>
    %cst_85 = arith.constant dense<0.000000e+00> : vector<32x128xf32>
    %310 = tpu.matmul %307, %309, %cst_85 {dimension_numbers = #tpu.dot_dimension_numbers<[1], [0], [0], [1], [0, 0, 1, 1], [], []>} : vector<32x128xbf16>, vector<128x128xbf16>, vector<32x128xf32> -> vector<32x128xf32>
    %c1_86 = arith.constant 1 : index
    %c0_87 = arith.constant 0 : index
    %c0_88 = arith.constant 0 : index
    %311 = vector.load %arg7[%c1_86, %c0_87, %c0_88] : memref<2x1x128xf32, #tpu.memory_space<vmem>>, vector<1x1x128xf32>
    %312 = vector.shape_cast %311 : vector<1x1x128xf32> to vector<1x128xf32>
    %313 = vector.broadcast %312 : vector<1x128xf32> to vector<32x128xf32>
    %314 = arith.addf %310, %313 : vector<32x128xf32>
    %315 = arith.addf %314, %208 : vector<32x128xf32>
    %c1_89 = arith.constant 1 : index
    %c0_90 = arith.constant 0 : index
    %c0_91 = arith.constant 0 : index
    %316 = vector.load %arg8[%c1_89, %c0_90, %c0_91] : memref<2x1x128xf32, #tpu.memory_space<vmem>>, vector<1x1x128xf32>
    %317 = vector.shape_cast %316 : vector<1x1x128xf32> to vector<1x128xf32>
    %c1_92 = arith.constant 1 : index
    %c0_93 = arith.constant 0 : index
    %c0_94 = arith.constant 0 : index
    %318 = vector.load %arg9[%c1_92, %c0_93, %c0_94] : memref<2x1x128xf32, #tpu.memory_space<vmem>>, vector<1x1x128xf32>
    %319 = vector.shape_cast %318 : vector<1x1x128xf32> to vector<1x128xf32>
    %cst_95 = arith.constant dense<0.000000e+00> : vector<32xf32>
    %320 = vector.multi_reduction <add>, %315, %cst_95 [1] : vector<32x128xf32> to vector<32xf32>
    %321 = vector.shape_cast %320 : vector<32xf32> to vector<32x1xf32>
    %cst_96 = arith.constant 1.280000e+02 : f32
    %322 = vector.broadcast %cst_96 : f32 to vector<32x1xf32>
    %323 = arith.divf %321, %322 : vector<32x1xf32>
    %324 = vector.broadcast %323 : vector<32x1xf32> to vector<32x128xf32>
    %325 = arith.subf %315, %324 : vector<32x128xf32>
    %326 = arith.mulf %325, %325 : vector<32x128xf32>
    %cst_97 = arith.constant dense<0.000000e+00> : vector<32xf32>
    %327 = vector.multi_reduction <add>, %326, %cst_97 [1] : vector<32x128xf32> to vector<32xf32>
    %328 = vector.shape_cast %327 : vector<32xf32> to vector<32x1xf32>
    %cst_98 = arith.constant 1.280000e+02 : f32
    %329 = vector.broadcast %cst_98 : f32 to vector<32x1xf32>
    %330 = arith.divf %328, %329 : vector<32x1xf32>
    %cst_99 = arith.constant 9.99999996E-13 : f32
    %331 = vector.broadcast %cst_99 : f32 to vector<32x1xf32>
    %332 = arith.addf %330, %331 : vector<32x1xf32>
    %333 = math.rsqrt %332 : vector<32x1xf32>
    %334 = vector.broadcast %333 : vector<32x1xf32> to vector<32x128xf32>
    %335 = arith.mulf %325, %334 : vector<32x128xf32>
    %336 = vector.broadcast %317 : vector<1x128xf32> to vector<32x128xf32>
    %337 = arith.mulf %335, %336 : vector<32x128xf32>
    %338 = vector.broadcast %319 : vector<1x128xf32> to vector<32x128xf32>
    %339 = arith.addf %337, %338 : vector<32x128xf32>
    %340 = arith.truncf %339 : vector<32x128xf32> to vector<32x128xbf16>
    %c1_100 = arith.constant 1 : index
    %c0_101 = arith.constant 0 : index
    %c0_102 = arith.constant 0 : index
    %341 = vector.load %arg10[%c1_100, %c0_101, %c0_102] : memref<2x128x256xbf16, #tpu.memory_space<vmem>>, vector<1x128x256xbf16>
    %342 = vector.shape_cast %341 : vector<1x128x256xbf16> to vector<128x256xbf16>
    %cst_103 = arith.constant dense<0.000000e+00> : vector<32x256xf32>
    %343 = tpu.matmul %340, %342, %cst_103 {dimension_numbers = #tpu.dot_dimension_numbers<[1], [0], [0], [1], [0, 0, 1, 1], [], []>} : vector<32x128xbf16>, vector<128x256xbf16>, vector<32x256xf32> -> vector<32x256xf32>
    %c1_104 = arith.constant 1 : index
    %c0_105 = arith.constant 0 : index
    %c0_106 = arith.constant 0 : index
    %344 = vector.load %arg11[%c1_104, %c0_105, %c0_106] : memref<2x1x256xf32, #tpu.memory_space<vmem>>, vector<1x1x256xf32>
    %345 = vector.shape_cast %344 : vector<1x1x256xf32> to vector<1x256xf32>
    %346 = vector.broadcast %345 : vector<1x256xf32> to vector<32x256xf32>
    %347 = arith.addf %343, %346 : vector<32x256xf32>
    %cst_107 = arith.constant 5.000000e-01 : f32
    %348 = vector.broadcast %cst_107 : f32 to vector<32x256xf32>
    %349 = arith.mulf %348, %347 : vector<32x256xf32>
    %cst_108 = arith.constant 4.471500e-02 : f32
    %350 = vector.broadcast %cst_108 : f32 to vector<32x256xf32>
    %351 = arith.mulf %350, %347 : vector<32x256xf32>
    %352 = arith.mulf %351, %347 : vector<32x256xf32>
    %353 = arith.mulf %352, %347 : vector<32x256xf32>
    %354 = arith.addf %347, %353 : vector<32x256xf32>
    %cst_109 = arith.constant 0.797884583 : f32
    %355 = vector.broadcast %cst_109 : f32 to vector<32x256xf32>
    %356 = arith.mulf %355, %354 : vector<32x256xf32>
    %357 = math.tanh %356 : vector<32x256xf32>
    %cst_110 = arith.constant 1.000000e+00 : f32
    %358 = vector.broadcast %cst_110 : f32 to vector<32x256xf32>
    %359 = arith.addf %358, %357 : vector<32x256xf32>
    %360 = arith.mulf %349, %359 : vector<32x256xf32>
    %361 = arith.truncf %360 : vector<32x256xf32> to vector<32x256xbf16>
    %c1_111 = arith.constant 1 : index
    %c0_112 = arith.constant 0 : index
    %c0_113 = arith.constant 0 : index
    %362 = vector.load %arg12[%c1_111, %c0_112, %c0_113] : memref<2x256x128xbf16, #tpu.memory_space<vmem>>, vector<1x256x128xbf16>
    %363 = vector.shape_cast %362 : vector<1x256x128xbf16> to vector<256x128xbf16>
    %cst_114 = arith.constant dense<0.000000e+00> : vector<32x128xf32>
    %364 = tpu.matmul %361, %363, %cst_114 {dimension_numbers = #tpu.dot_dimension_numbers<[1], [0], [0], [1], [0, 0, 1, 1], [], []>} : vector<32x256xbf16>, vector<256x128xbf16>, vector<32x128xf32> -> vector<32x128xf32>
    %c1_115 = arith.constant 1 : index
    %c0_116 = arith.constant 0 : index
    %c0_117 = arith.constant 0 : index
    %365 = vector.load %arg13[%c1_115, %c0_116, %c0_117] : memref<2x1x128xf32, #tpu.memory_space<vmem>>, vector<1x1x128xf32>
    %366 = vector.shape_cast %365 : vector<1x1x128xf32> to vector<1x128xf32>
    %367 = vector.broadcast %366 : vector<1x128xf32> to vector<32x128xf32>
    %368 = arith.addf %364, %367 : vector<32x128xf32>
    %369 = arith.addf %368, %339 : vector<32x128xf32>
    %c1_118 = arith.constant 1 : index
    %c0_119 = arith.constant 0 : index
    %c0_120 = arith.constant 0 : index
    %370 = vector.load %arg14[%c1_118, %c0_119, %c0_120] : memref<2x1x128xf32, #tpu.memory_space<vmem>>, vector<1x1x128xf32>
    %371 = vector.shape_cast %370 : vector<1x1x128xf32> to vector<1x128xf32>
    %c1_121 = arith.constant 1 : index
    %c0_122 = arith.constant 0 : index
    %c0_123 = arith.constant 0 : index
    %372 = vector.load %arg15[%c1_121, %c0_122, %c0_123] : memref<2x1x128xf32, #tpu.memory_space<vmem>>, vector<1x1x128xf32>
    %373 = vector.shape_cast %372 : vector<1x1x128xf32> to vector<1x128xf32>
    %cst_124 = arith.constant dense<0.000000e+00> : vector<32xf32>
    %374 = vector.multi_reduction <add>, %369, %cst_124 [1] : vector<32x128xf32> to vector<32xf32>
    %375 = vector.shape_cast %374 : vector<32xf32> to vector<32x1xf32>
    %cst_125 = arith.constant 1.280000e+02 : f32
    %376 = vector.broadcast %cst_125 : f32 to vector<32x1xf32>
    %377 = arith.divf %375, %376 : vector<32x1xf32>
    %378 = vector.broadcast %377 : vector<32x1xf32> to vector<32x128xf32>
    %379 = arith.subf %369, %378 : vector<32x128xf32>
    %380 = arith.mulf %379, %379 : vector<32x128xf32>
    %cst_126 = arith.constant dense<0.000000e+00> : vector<32xf32>
    %381 = vector.multi_reduction <add>, %380, %cst_126 [1] : vector<32x128xf32> to vector<32xf32>
    %382 = vector.shape_cast %381 : vector<32xf32> to vector<32x1xf32>
    %cst_127 = arith.constant 1.280000e+02 : f32
    %383 = vector.broadcast %cst_127 : f32 to vector<32x1xf32>
    %384 = arith.divf %382, %383 : vector<32x1xf32>
    %cst_128 = arith.constant 9.99999996E-13 : f32
    %385 = vector.broadcast %cst_128 : f32 to vector<32x1xf32>
    %386 = arith.addf %384, %385 : vector<32x1xf32>
    %387 = math.rsqrt %386 : vector<32x1xf32>
    %388 = vector.broadcast %387 : vector<32x1xf32> to vector<32x128xf32>
    %389 = arith.mulf %379, %388 : vector<32x128xf32>
    %390 = vector.broadcast %371 : vector<1x128xf32> to vector<32x128xf32>
    %391 = arith.mulf %389, %390 : vector<32x128xf32>
    %392 = vector.broadcast %373 : vector<1x128xf32> to vector<32x128xf32>
    %393 = arith.addf %391, %392 : vector<32x128xf32>
    %394 = vector.extract_strided_slice %393 {offsets = [0, 0], sizes = [1, 128], strides = [1, 1]} : vector<32x128xf32> to vector<1x128xf32>
    %395 = vector.extract_strided_slice %393 {offsets = [16, 0], sizes = [1, 128], strides = [1, 1]} : vector<32x128xf32> to vector<1x128xf32>
    %396 = tpu.concatenate %394, %395 in 0 : vector<1x128xf32>, vector<1x128xf32> -> vector<2x128xf32>
    %397 = arith.truncf %396 : vector<2x128xf32> to vector<2x128xbf16>
    %c0_129 = arith.constant 0 : index
    %c0_130 = arith.constant 0 : index
    %398 = vector.load %arg16[%c0_129, %c0_130] : memref<128x128xbf16, #tpu.memory_space<vmem>>, vector<128x128xbf16>
    %cst_131 = arith.constant dense<0.000000e+00> : vector<2x128xf32>
    %399 = tpu.matmul %397, %398, %cst_131 {dimension_numbers = #tpu.dot_dimension_numbers<[1], [0], [0], [1], [0, 0, 1, 1], [], []>} : vector<2x128xbf16>, vector<128x128xbf16>, vector<2x128xf32> -> vector<2x128xf32>
    %c0_132 = arith.constant 0 : index
    %c0_133 = arith.constant 0 : index
    %400 = vector.load %arg17[%c0_132, %c0_133] : memref<1x128xf32, #tpu.memory_space<vmem>>, vector<1x128xf32>
    %401 = vector.broadcast %400 : vector<1x128xf32> to vector<2x128xf32>
    %402 = arith.addf %399, %401 : vector<2x128xf32>
    %403 = math.tanh %402 : vector<2x128xf32>
    %404 = arith.truncf %403 : vector<2x128xf32> to vector<2x128xbf16>
    %c0_134 = arith.constant 0 : index
    %c0_135 = arith.constant 0 : index
    %405 = vector.load %arg18[%c0_134, %c0_135] : memref<128x128xbf16, #tpu.memory_space<vmem>>, vector<128x128xbf16>
    %cst_136 = arith.constant dense<0.000000e+00> : vector<2x128xf32>
    %406 = tpu.matmul %404, %405, %cst_136 {dimension_numbers = #tpu.dot_dimension_numbers<[1], [0], [0], [1], [0, 0, 1, 1], [], []>} : vector<2x128xbf16>, vector<128x128xbf16>, vector<2x128xf32> -> vector<2x128xf32>
    %c0_137 = arith.constant 0 : index
    %c0_138 = arith.constant 0 : index
    %407 = vector.load %arg19[%c0_137, %c0_138] : memref<1x128xf32, #tpu.memory_space<vmem>>, vector<1x128xf32>
    %408 = vector.broadcast %407 : vector<1x128xf32> to vector<2x128xf32>
    %409 = arith.addf %406, %408 : vector<2x128xf32>
    %cst_139 = arith.constant 0.000000e+00 : f32
    %410 = vector.broadcast %cst_139 : f32 to vector<2x128xf32>
    %411 = arith.maximumf %409, %410 : vector<2x128xf32>
    %c0_140 = arith.constant 0 : index
    %c0_141 = arith.constant 0 : index
    %412 = vector.load %arg20[%c0_140, %c0_141] : memref<2x128xf32, #tpu.memory_space<vmem>>, vector<2x128xf32>
    tpu.vector_store %arg20[%c0_140, %c0_141], %411 {strides = array<i32>} : memref<2x128xf32, #tpu.memory_space<vmem>>, vector<2x128xf32>,
    return
  }
}

</mosaic_0001>

<llo_original>
// kernel: tpu_custom_call.1
$region0: #{tpu_custom_call.1}
  #allocation0 [shape = 'u32[]', space=smem, size = 0x4, offset = 0x4, fixed_abs, tag = 'smem constant byte address 0x4 - core index']
  #allocation1 [shape = 'u32[144,128]{1,0:T(1,128)}', space=vmem, size = 0x12000, scoped, tag = 'internal scratch']
  %s0 = inlined_call_operand.hbm [shape: f32[32,128], index: 0, kind: input, shape index: {}]
  %s1 = inlined_call_operand.hbm [shape: f32[8,1,16], index: 1, kind: input, shape index: {}]
  %s2 = inlined_call_operand.hbm [shape: f32[1,128], index: 2, kind: input, shape index: {}]
  %s3 = inlined_call_operand.hbm [shape: f32[1,128], index: 3, kind: input, shape index: {}]
  %s4 = inlined_call_operand.hbm [shape: bf16[2,128,384], index: 4, kind: input, shape index: {}]
  %s5 = inlined_call_operand.hbm [shape: f32[2,1,384], index: 5, kind: input, shape index: {}]
  %s6 = inlined_call_operand.hbm [shape: bf16[2,128,128], index: 6, kind: input, shape index: {}]
  %s7 = inlined_call_operand.hbm [shape: f32[2,1,128], index: 7, kind: input, shape index: {}]
  %s8 = inlined_call_operand.hbm [shape: f32[2,1,128], index: 8, kind: input, shape index: {}]
  %s9 = inlined_call_operand.hbm [shape: f32[2,1,128], index: 9, kind: input, shape index: {}]
  %s10 = inlined_call_operand.hbm [shape: bf16[2,128,256], index: 10, kind: input, shape index: {}]
  %s11 = inlined_call_operand.vmem [shape: f32[2,1,256], index: 11, kind: input, shape index: {}]
  %s12 = inlined_call_operand.hbm [shape: bf16[2,256,128], index: 12, kind: input, shape index: {}]
  %s13 = inlined_call_operand.hbm [shape: f32[2,1,128], index: 13, kind: input, shape index: {}]
  %s14 = inlined_call_operand.hbm [shape: f32[2,1,128], index: 14, kind: input, shape index: {}]
  %s15 = inlined_call_operand.hbm [shape: f32[2,1,128], index: 15, kind: input, shape index: {}]
  %s16 = inlined_call_operand.hbm [shape: bf16[128,128], index: 16, kind: input, shape index: {}]
  %s17 = inlined_call_operand.hbm [shape: f32[1,128], index: 17, kind: input, shape index: {}]
  %s18 = inlined_call_operand.vmem [shape: bf16[128,128], index: 18, kind: input, shape index: {}]
  %s19 = inlined_call_operand.vmem [shape: f32[1,128], index: 19, kind: input, shape index: {}]
  %s20 = inlined_call_operand.hbm [shape: f32[2,128], index: 20, kind: output, shape index: {}]
  %s21 = sld [smem:[#allocation0]]
  $region158: #{tpu_custom_call.1} parent=0
    _
  %s23 = ssub.s32 1, %s21
  %s24 = scalar_select 0, %s23, %s21
  $region1: #{tpu_custom_call.1} parent=0
    #allocation2 [shape = 'u8[16384]{0}', space=vmem, size = 0x4000, scoped, tag = 'input window, operand 0, single buffered']
    #allocation3 [shape = 's32[1]{0}', space=sflag, size = 0x4, scoped, tag = 'scoped memory for tpu_custom_call.1']
    #allocation4 [shape = 's32[1]{0}', space=sflag, size = 0x4, scoped, tag = 'scoped memory for tpu_custom_call.1']
    #allocation5 [shape = 'u8[4096]{0}', space=vmem, size = 0x1000, scoped, tag = 'input window, operand 1, single buffered']
    #allocation6 [shape = 's32[1]{0}', space=sflag, size = 0x4, scoped, tag = 'scoped memory for tpu_custom_call.1']
    #allocation7 [shape = 'u8[512]{0}', space=vmem, size = 0x400, scoped, tag = 'input window, operand 2, single buffered']
    #allocation8 [shape = 'u8[512]{0}', space=vmem, size = 0x400, scoped, tag = 'input window, operand 3, single buffered']
    #allocation9 [shape = 's32[1]{0}', space=sflag, size = 0x4, scoped, tag = 'scoped memory for tpu_custom_call.1']
    #allocation10 [shape = 'u8[196608]{0}', space=vmem, size = 0x30000, scoped, tag = 'input window, operand 4, single buffered']
    #allocation11 [shape = 'u8[3072]{0}', space=vmem, size = 0xc00, scoped, tag = 'input window, operand 5, single buffered']
    #allocation12 [shape = 's32[1]{0}', space=sflag, size = 0x4, scoped, tag = 'scoped memory for tpu_custom_call.1']
    #allocation13 [shape = 'u8[65536]{0}', space=vmem, size = 0x10000, scoped, tag = 'input window, operand 6, single buffered']
    #allocation14 [shape = 'u8[1024]{0}', space=vmem, size = 0x400, scoped, tag = 'input window, operand 7, single buffered']
    #allocation15 [shape = 's32[1]{0}', space=sflag, size = 0x4, scoped, tag = 'scoped memory for tpu_custom_call.1']
    #allocation16 [shape = 'u8[1024]{0}', space=vmem, size = 0x400, scoped, tag = 'input window, operand 8, single buffered']
    #allocation17 [shape = 'u8[1024]{0}', space=vmem, size = 0x400, scoped, tag = 'input window, operand 9, single buffered']
    #allocation18 [shape = 's32[1]{0}', space=sflag, size = 0x4, scoped, tag = 'scoped memory for tpu_custom_call.1']
    #allocation19 [shape = 'u8[131072]{0}', space=vmem, size = 0x20000, scoped, tag = 'input window, operand 10, single buffered']
    #allocation20 [shape = 'u8[131072]{0}', space=vmem, size = 0x20000, scoped, tag = 'input window, operand 12, single buffered']
    #allocation21 [shape = 's32[1]{0}', space=sflag, size = 0x4, scoped, tag = 'scoped memory for tpu_custom_call.1']
    #allocation22 [shape = 'u8[1024]{0}', space=vmem, size = 0x400, scoped, tag = 'input window, operand 13, single buffered']
    #allocation23 [shape = 'u8[1024]{0}', space=vmem, size = 0x400, scoped, tag = 'input window, operand 14, single buffered']
    #allocation24 [shape = 's32[1]{0}', space=sflag, size = 0x4, scoped, tag = 'scoped memory for tpu_custom_call.1']
    #allocation25 [shape = 'u8[1024]{0}', space=vmem, size = 0x400, scoped, tag = 'input window, operand 15, single buffered']
    #allocation26 [shape = 'u8[32768]{0}', space=vmem, size = 0x8000, scoped, tag = 'input window, operand 16, single buffered']
    #allocation27 [shape = 's32[1]{0}', space=sflag, size = 0x4, scoped, tag = 'scoped memory for tpu_custom_call.1']
    #allocation28 [shape = 'u8[512]{0}', space=vmem, size = 0x400, scoped, tag = 'input window, operand 17, single buffered']
    #allocation29 [shape = 'u8[1024]{0}', space=vmem, size = 0x400, scoped, tag = 'output window, operand 0, single buffered']
    %25 = vsyncpa [#allocation3], 0
    %26 = vsyncpa [#allocation6], 0
    %27 = vsyncpa [#allocation9], 0
    %28 = vsyncpa [#allocation12], 0
    %29 = vsyncpa [#allocation15], 0
    %30 = vsyncpa [#allocation18], 0
    %31 = vsyncpa [#allocation21], 0
    %32 = vsyncpa [#allocation24], 0
    %33 = vsyncpa [#allocation27], 0
    %34 = vsyncpa [#allocation4], 0
    // Predicated region
    $region2: #{tpu_custom_call.1} parent=1 // pred_check
      _
    $region3: #{tpu_custom_call.1} parent=1 // pred_check_branch
      %36 = sbr.rel (0) target = $region5
    $region4: #{tpu_custom_call.1} parent=1 // pred_region
      %s38 = ssub.s32 512, 512
      %39 = vsyncadd [#allocation3], %s38
      %s40 = sshll.u32 [#allocation2], 4
      %s41 = int_to_ptr.vmem [resolvable:$true] %s40
      %46 = dma.hbm_to_vmem [thread:$0]  %s0, 512, %s41, [#allocation3], 128, 128, 8
    $region5: #{tpu_custom_call.1} parent=1 // pred_fallthru
      _
    // Predicated region
    $region6: #{tpu_custom_call.1} parent=1 // pred_check
      _
    $region7: #{tpu_custom_call.1} parent=1 // pred_check_branch
      %48 = sbr.rel (0) target = $region9
    $region8: #{tpu_custom_call.1} parent=1 // pred_region
      %s50 = ssub.s32 128, 128
      %51 = vsyncadd [#allocation6], %s50
      %s52 = sshll.u32 [#allocation5], 4
      %s53 = int_to_ptr.vmem [resolvable:$true] %s52
      %58 = dma.hbm_to_vmem [thread:$0]  %s1, 128, %s53, [#allocation6], 16, 16, 1
    $region9: #{tpu_custom_call.1} parent=1 // pred_fallthru
      _
    // Predicated region
    $region10: #{tpu_custom_call.1} parent=1 // pred_check
      _
    $region11: #{tpu_custom_call.1} parent=1 // pred_check_branch
      %60 = sbr.rel (0) target = $region13
    $region12: #{tpu_custom_call.1} parent=1 // pred_region
      %s62 = ssub.s32 16, 16
      %63 = vsyncadd [#allocation6], %s62
      %s65 = sshll.u32 [#allocation7], 4
      %s66 = int_to_ptr.vmem [resolvable:$true] %s65
      %68 = dma.hbm_to_vmem [thread:$0]  %s2, 16, %s66, [#allocation6]
    $region13: #{tpu_custom_call.1} parent=1 // pred_fallthru
      _
    // Predicated region
    $region14: #{tpu_custom_call.1} parent=1 // pred_check
      _
    $region15: #{tpu_custom_call.1} parent=1 // pred_check_branch
      %70 = sbr.rel (0) target = $region17
    $region16: #{tpu_custom_call.1} parent=1 // pred_region
      %s72 = ssub.s32 16, 16
      %73 = vsyncadd [#allocation9], %s72
      %s75 = sshll.u32 [#allocation8], 4
      %s76 = int_to_ptr.vmem [resolvable:$true] %s75
      %78 = dma.hbm_to_vmem [thread:$0]  %s3, 16, %s76, [#allocation9]
    $region17: #{tpu_custom_call.1} parent=1 // pred_fallthru
      _
    // Predicated region
    $region18: #{tpu_custom_call.1} parent=1 // pred_check
      _
    $region19: #{tpu_custom_call.1} parent=1 // pred_check_branch
      %80 = sbr.rel (0) target = $region21
    $region20: #{tpu_custom_call.1} parent=1 // pred_region
      %s82 = ssub.s32 6144, 6144
      %83 = vsyncadd [#allocation9], %s82
      %s84 = sshll.u32 [#allocation10], 4
      %s85 = int_to_ptr.vmem [resolvable:$true] %s84
      %90 = dma.hbm_to_vmem [thread:$0]  %s4, 6144, %s85, [#allocation9], 192, 192, 12
    $region21: #{tpu_custom_call.1} parent=1 // pred_fallthru
      _
    // Predicated region
    $region22: #{tpu_custom_call.1} parent=1 // pred_check
      _
    $region23: #{tpu_custom_call.1} parent=1 // pred_check_branch
      %92 = sbr.rel (0) target = $region25
    $region24: #{tpu_custom_call.1} parent=1 // pred_region
      %s94 = ssub.s32 96, 96
      %95 = vsyncadd [#allocation12], %s94
      %s96 = sshll.u32 [#allocation11], 4
      %s97 = int_to_ptr.vmem [resolvable:$true] %s96
      %102 = dma.hbm_to_vmem [thread:$0]  %s5, 96, %s97, [#allocation12], 48, 48, 3
    $region25: #{tpu_custom_call.1} parent=1 // pred_fallthru
      _
    // Predicated region
    $region26: #{tpu_custom_call.1} parent=1 // pred_check
      _
    $region27: #{tpu_custom_call.1} parent=1 // pred_check_branch
      %104 = sbr.rel (0) target = $region29
    $region28: #{tpu_custom_call.1} parent=1 // pred_region
      %s106 = ssub.s32 2048, 2048
      %107 = vsyncadd [#allocation12], %s106
      %s108 = sshll.u32 [#allocation13], 4
      %s109 = int_to_ptr.vmem [resolvable:$true] %s108
      %114 = dma.hbm_to_vmem [thread:$0]  %s6, 2048, %s109, [#allocation12], 64, 64, 4
    $region29: #{tpu_custom_call.1} parent=1 // pred_fallthru
      _
    // Predicated region
    $region30: #{tpu_custom_call.1} parent=1 // pred_check
      _
    $region31: #{tpu_custom_call.1} parent=1 // pred_check_branch
      %116 = sbr.rel (0) target = $region33
    $region32: #{tpu_custom_call.1} parent=1 // pred_region
      %s118 = ssub.s32 32, 32
      %119 = vsyncadd [#allocation15], %s118
      %s120 = sshll.u32 [#allocation14], 4
      %s121 = int_to_ptr.vmem [resolvable:$true] %s120
      %126 = dma.hbm_to_vmem [thread:$0]  %s7, 32, %s121, [#allocation15], 16, 16, 1
    $region33: #{tpu_custom_call.1} parent=1 // pred_fallthru
      _
    // Predicated region
    $region34: #{tpu_custom_call.1} parent=1 // pred_check
      _
    $region35: #{tpu_custom_call.1} parent=1 // pred_check_branch
      %128 = sbr.rel (0) target = $region37
    $region36: #{tpu_custom_call.1} parent=1 // pred_region
      %s130 = ssub.s32 32, 32
      %131 = vsyncadd [#allocation15], %s130
      %s132 = sshll.u32 [#allocation16], 4
      %s133 = int_to_ptr.vmem [resolvable:$true] %s132
      %138 = dma.hbm_to_vmem [thread:$0]  %s8, 32, %s133, [#allocation15], 16, 16, 1
    $region37: #{tpu_custom_call.1} parent=1 // pred_fallthru
      _
    // Predicated region
    $region38: #{tpu_custom_call.1} parent=1 // pred_check
      _
    $region39: #{tpu_custom_call.1} parent=1 // pred_check_branch
      %140 = sbr.rel (0) target = $region41
    $region40: #{tpu_custom_call.1} parent=1 // pred_region
      %s142 = ssub.s32 32, 32
      %143 = vsyncadd [#allocation18], %s142
      %s144 = sshll.u32 [#allocation17], 4
      %s145 = int_to_ptr.vmem [resolvable:$true] %s144
      %150 = dma.hbm_to_vmem [thread:$0]  %s9, 32, %s145, [#allocation18], 16, 16, 1
    $region41: #{tpu_custom_call.1} parent=1 // pred_fallthru
      _
    // Predicated region
    $region42: #{tpu_custom_call.1} parent=1 // pred_check
      _
    $region43: #{tpu_custom_call.1} parent=1 // pred_check_branch
      %152 = sbr.rel (0) target = $region45
    $region44: #{tpu_custom_call.1} parent=1 // pred_region
      %s154 = ssub.s32 4096, 4096
      %155 = vsyncadd [#allocation18], %s154
      %s156 = sshll.u32 [#allocation19], 4
      %s157 = int_to_ptr.vmem [resolvable:$true] %s156
      %162 = dma.hbm_to_vmem [thread:$0]  %s10, 4096, %s157, [#allocation18], 128, 128, 8
    $region45: #{tpu_custom_call.1} parent=1 // pred_fallthru
      _
    // Predicated region
    $region46: #{tpu_custom_call.1} parent=1 // pred_check
      _
    $region47: #{tpu_custom_call.1} parent=1 // pred_check_branch
      %164 = sbr.rel (0) target = $region49
    $region48: #{tpu_custom_call.1} parent=1 // pred_region
      _
    $region49: #{tpu_custom_call.1} parent=1 // pred_fallthru
      _
    // Predicated region
    $region50: #{tpu_custom_call.1} parent=1 // pred_check
      _
    $region51: #{tpu_custom_call.1} parent=1 // pred_check_branch
      %166 = sbr.rel (0) target = $region53
    $region52: #{tpu_custom_call.1} parent=1 // pred_region
      %s168 = ssub.s32 4096, 4096
      %169 = vsyncadd [#allocation21], %s168
      %s170 = sshll.u32 [#allocation20], 4
      %s171 = int_to_ptr.vmem [resolvable:$true] %s170
      %176 = dma.hbm_to_vmem [thread:$0]  %s12, 4096, %s171, [#allocation21], 64, 64, 4
    $region53: #{tpu_custom_call.1} parent=1 // pred_fallthru
      _
    // Predicated region
    $region54: #{tpu_custom_call.1} parent=1 // pred_check
      _
    $region55: #{tpu_custom_call.1} parent=1 // pred_check_branch
      %178 = sbr.rel (0) target = $region57
    $region56: #{tpu_custom_call.1} parent=1 // pred_region
      %s180 = ssub.s32 32, 32
      %181 = vsyncadd [#allocation21], %s180
      %s182 = sshll.u32 [#allocation22], 4
      %s183 = int_to_ptr.vmem [resolvable:$true] %s182
      %188 = dma.hbm_to_vmem [thread:$0]  %s13, 32, %s183, [#allocation21], 16, 16, 1
    $region57: #{tpu_custom_call.1} parent=1 // pred_fallthru
      _
    // Predicated region
    $region58: #{tpu_custom_call.1} parent=1 // pred_check
      _
    $region59: #{tpu_custom_call.1} parent=1 // pred_check_branch
      %190 = sbr.rel (0) target = $region61
    $region60: #{tpu_custom_call.1} parent=1 // pred_region
      %s192 = ssub.s32 32, 32
      %193 = vsyncadd [#allocation24], %s192
      %s194 = sshll.u32 [#allocation23], 4
      %s195 = int_to_ptr.vmem [resolvable:$true] %s194
      %200 = dma.hbm_to_vmem [thread:$0]  %s14, 32, %s195, [#allocation24], 16, 16, 1
    $region61: #{tpu_custom_call.1} parent=1 // pred_fallthru
      _
    // Predicated region
    $region62: #{tpu_custom_call.1} parent=1 // pred_check
      _
    $region63: #{tpu_custom_call.1} parent=1 // pred_check_branch
      %202 = sbr.rel (0) target = $region65
    $region64: #{tpu_custom_call.1} parent=1 // pred_region
      %s204 = ssub.s32 32, 32
      %205 = vsyncadd [#allocation24], %s204
      %s206 = sshll.u32 [#allocation25], 4
      %s207 = int_to_ptr.vmem [resolvable:$true] %s206
      %212 = dma.hbm_to_vmem [thread:$0]  %s15, 32, %s207, [#allocation24], 16, 16, 1
    $region65: #{tpu_custom_call.1} parent=1 // pred_fallthru
      _
    // Predicated region
    $region66: #{tpu_custom_call.1} parent=1 // pred_check
      _
    $region67: #{tpu_custom_call.1} parent=1 // pred_check_branch
      %214 = sbr.rel (0) target = $region69
    $region68: #{tpu_custom_call.1} parent=1 // pred_region
      %s216 = ssub.s32 1024, 1024
      %217 = vsyncadd [#allocation27], %s216
      %s218 = sshll.u32 [#allocation26], 4
      %s219 = int_to_ptr.vmem [resolvable:$true] %s218
      %224 = dma.hbm_to_vmem [thread:$0]  %s16, 1024, %s219, [#allocation27], 64, 64, 4
    $region69: #{tpu_custom_call.1} parent=1 // pred_fallthru
      _
    // Predicated region
    $region70: #{tpu_custom_call.1} parent=1 // pred_check
      _
    $region71: #{tpu_custom_call.1} parent=1 // pred_check_branch
      %226 = sbr.rel (0) target = $region73
    $region72: #{tpu_custom_call.1} parent=1 // pred_region
      %s228 = ssub.s32 16, 16
      %229 = vsyncadd [#allocation27], %s228
      %s231 = sshll.u32 [#allocation28], 4
      %s232 = int_to_ptr.vmem [resolvable:$true] %s231
      %234 = dma.hbm_to_vmem [thread:$0]  %s17, 16, %s232, [#allocation27]
    $region73: #{tpu_custom_call.1} parent=1 // pred_fallthru
      _
    // Predicated region
    $region74: #{tpu_custom_call.1} parent=1 // pred_check
      _
    $region75: #{tpu_custom_call.1} parent=1 // pred_check_branch
      %236 = sbr.rel (0) target = $region77
    $region76: #{tpu_custom_call.1} parent=1 // pred_region
      _
    $region77: #{tpu_custom_call.1} parent=1 // pred_fallthru
      _
    // Predicated region
    $region78: #{tpu_custom_call.1} parent=1 // pred_check
      _
    $region79: #{tpu_custom_call.1} parent=1 // pred_check_branch
      %238 = sbr.rel (0) target = $region81
    $region80: #{tpu_custom_call.1} parent=1 // pred_region
      _
    $region81: #{tpu_custom_call.1} parent=1 // pred_fallthru
      _
    // Predicated region
    $region82: #{tpu_custom_call.1} parent=1 // pred_check
      _
    $region83: #{tpu_custom_call.1} parent=1 // pred_check_branch
      %240 = sbr.rel (0) target = $region85
    $region84: #{tpu_custom_call.1} parent=1 // pred_region
      %241 = dma.done [#allocation3], 512
    $region85: #{tpu_custom_call.1} parent=1 // pred_fallthru
      _
    // Predicated region
    $region86: #{tpu_custom_call.1} parent=1 // pred_check
      _
    $region87: #{tpu_custom_call.1} parent=1 // pred_check_branch
      %243 = sbr.rel (0) target = $region89
    $region88: #{tpu_custom_call.1} parent=1 // pred_region
      %244 = dma.done [#allocation6], 128
    $region89: #{tpu_custom_call.1} parent=1 // pred_fallthru
      _
    // Predicated region
    $region90: #{tpu_custom_call.1} parent=1 // pred_check
      _
    $region91: #{tpu_custom_call.1} parent=1 // pred_check_branch
      %246 = sbr.rel (0) target = $region93
    $region92: #{tpu_custom_call.1} parent=1 // pred_region
      %247 = dma.done [#allocation6], 16
    $region93: #{tpu_custom_call.1} parent=1 // pred_fallthru
      _
    // Predicated region
    $region94: #{tpu_custom_call.1} parent=1 // pred_check
      _
    $region95: #{tpu_custom_call.1} parent=1 // pred_check_branch
      %249 = sbr.rel (0) target = $region97
    $region96: #{tpu_custom_call.1} parent=1 // pred_region
      %250 = dma.done [#allocation9], 16
    $region97: #{tpu_custom_call.1} parent=1 // pred_fallthru
      _
    // Predicated region
    $region98: #{tpu_custom_call.1} parent=1 // pred_check
      _
    $region99: #{tpu_custom_call.1} parent=1 // pred_check_branch
      %252 = sbr.rel (0) target = $region101
    $region100: #{tpu_custom_call.1} parent=1 // pred_region
      %253 = dma.done [#allocation9], 6144
    $region101: #{tpu_custom_call.1} parent=1 // pred_fallthru
      _
    // Predicated region
    $region102: #{tpu_custom_call.1} parent=1 // pred_check
      _
    $region103: #{tpu_custom_call.1} parent=1 // pred_check_branch
      %255 = sbr.rel (0) target = $region105
    $region104: #{tpu_custom_call.1} parent=1 // pred_region
      %256 = dma.done [#allocation12], 96
    $region105: #{tpu_custom_call.1} parent=1 // pred_fallthru
      _
    // Predicated region
    $region106: #{tpu_custom_call.1} parent=1 // pred_check
      _
    $region107: #{tpu_custom_call.1} parent=1 // pred_check_branch
      %258 = sbr.rel (0) target = $region109
    $region108: #{tpu_custom_call.1} parent=1 // pred_region
      %259 = dma.done [#allocation12], 2048
    $region109: #{tpu_custom_call.1} parent=1 // pred_fallthru
      _
    // Predicated region
    $region110: #{tpu_custom_call.1} parent=1 // pred_check
      _
    $region111: #{tpu_custom_call.1} parent=1 // pred_check_branch
      %261 = sbr.rel (0) target = $region113
    $region112: #{tpu_custom_call.1} parent=1 // pred_region
      %262 = dma.done [#allocation15], 32
    $region113: #{tpu_custom_call.1} parent=1 // pred_fallthru
      _
    // Predicated region
    $region114: #{tpu_custom_call.1} parent=1 // pred_check
      _
    $region115: #{tpu_custom_call.1} parent=1 // pred_check_branch
      %264 = sbr.rel (0) target = $region117
    $region116: #{tpu_custom_call.1} parent=1 // pred_region
      %265 = dma.done [#allocation15], 32
    $region117: #{tpu_custom_call.1} parent=1 // pred_fallthru
      _
    // Predicated region
    $region118: #{tpu_custom_call.1} parent=1 // pred_check
      _
    $region119: #{tpu_custom_call.1} parent=1 // pred_check_branch
      %267 = sbr.rel (0) target = $region121
    $region120: #{tpu_custom_call.1} parent=1 // pred_region
      %268 = dma.done [#allocation18], 32
    $region121: #{tpu_custom_call.1} parent=1 // pred_fallthru
      _
    // Predicated region
    $region122: #{tpu_custom_call.1} parent=1 // pred_check
      _
    $region123: #{tpu_custom_call.1} parent=1 // pred_check_branch
      %270 = sbr.rel (0) target = $region125
    $region124: #{tpu_custom_call.1} parent=1 // pred_region
      %271 = dma.done [#allocation18], 4096
    $region125: #{tpu_custom_call.1} parent=1 // pred_fallthru
      _
    // Predicated region
    $region126: #{tpu_custom_call.1} parent=1 // pred_check
      _
    $region127: #{tpu_custom_call.1} parent=1 // pred_check_branch
      %273 = sbr.rel (0) target = $region129
    $region128: #{tpu_custom_call.1} parent=1 // pred_region
      %274 = dma.done [#allocation21], 4096
    $region129: #{tpu_custom_call.1} parent=1 // pred_fallthru
      _
    // Predicated region
    $region130: #{tpu_custom_call.1} parent=1 // pred_check
      _
    $region131: #{tpu_custom_call.1} parent=1 // pred_check_branch
      %276 = sbr.rel (0) target = $region133
    $region132: #{tpu_custom_call.1} parent=1 // pred_region
      %277 = dma.done [#allocation21], 32
    $region133: #{tpu_custom_call.1} parent=1 // pred_fallthru
      _
    // Predicated region
    $region134: #{tpu_custom_call.1} parent=1 // pred_check
      _
    $region135: #{tpu_custom_call.1} parent=1 // pred_check_branch
      %279 = sbr.rel (0) target = $region137
    $region136: #{tpu_custom_call.1} parent=1 // pred_region
      %280 = dma.done [#allocation24], 32
    $region137: #{tpu_custom_call.1} parent=1 // pred_fallthru
      _
    // Predicated region
    $region138: #{tpu_custom_call.1} parent=1 // pred_check
      _
    $region139: #{tpu_custom_call.1} parent=1 // pred_check_branch
      %282 = sbr.rel (0) target = $region141
    $region140: #{tpu_custom_call.1} parent=1 // pred_region
      %283 = dma.done [#allocation24], 32
    $region141: #{tpu_custom_call.1} parent=1 // pred_fallthru
      _
    // Predicated region
    $region142: #{tpu_custom_call.1} parent=1 // pred_check
      _
    $region143: #{tpu_custom_call.1} parent=1 // pred_check_branch
      %285 = sbr.rel (0) target = $region145
    $region144: #{tpu_custom_call.1} parent=1 // pred_region
      %286 = dma.done [#allocation27], 1024
    $region145: #{tpu_custom_call.1} parent=1 // pred_fallthru
      _
    // Predicated region
    $region146: #{tpu_custom_call.1} parent=1 // pred_check
      _
    $region147: #{tpu_custom_call.1} parent=1 // pred_check_branch
      %288 = sbr.rel (0) target = $region149
    $region148: #{tpu_custom_call.1} parent=1 // pred_region
      %289 = dma.done [#allocation27], 16
    $region149: #{tpu_custom_call.1} parent=1 // pred_fallthru
      _
    %v291 = vld [vmem:[#allocation2] sm:$0xff]
    %v292 = vld [vmem:[#allocation2 + $0x8] sm:$0xff]
    %v293 = vld [vmem:[#allocation2 + $0x10] sm:$0xff]
    %v294 = vld [vmem:[#allocation2 + $0x18] sm:$0xff]
    %v295 = vld [vmem:[#allocation7] sm:$0x1]
    %v296 = vld [vmem:[#allocation8] sm:$0x1]
    %297 = vadd.xlane.f32.xlu0 %v291
    %v298 = vpop.xlane.xlu0 %297
    %299 = vadd.xlane.f32.xlu0 %v292
    %v300 = vpop.xlane.xlu0 %299
    %301 = vadd.xlane.f32.xlu0 %v293
    %v302 = vpop.xlane.xlu0 %301
    %303 = vadd.xlane.f32.xlu0 %v294
    %v304 = vpop.xlane.xlu0 %303
    %v305 = vrcp.pop 128.0
    %v306 = vmul.f32 %v298, %v305
    %v307 = vmul.f32 %v300, %v305
    %v308 = vmul.f32 %v302, %v305
    %v309 = vmul.f32 %v304, %v305
    %v310 = vsub.f32 %v291, %v306
    %v311 = vsub.f32 %v292, %v307
    %v312 = vsub.f32 %v293, %v308
    %v313 = vsub.f32 %v294, %v309
    %v314 = vmul.f32 %v310, %v310
    %v315 = vmul.f32 %v311, %v311
    %v316 = vmul.f32 %v312, %v312
    %v317 = vmul.f32 %v313, %v313
    %318 = vadd.xlane.f32.xlu0 %v314
    %v319 = vpop.xlane.xlu0 %318
    %320 = vadd.xlane.f32.xlu0 %v315
    %v321 = vpop.xlane.xlu0 %320
    %322 = vadd.xlane.f32.xlu0 %v316
    %v323 = vpop.xlane.xlu0 %322
    %324 = vadd.xlane.f32.xlu0 %v317
    %v325 = vpop.xlane.xlu0 %324
    %v326 = vmul.f32 %v319, %v305
    %v327 = vmul.f32 %v321, %v305
    %v328 = vmul.f32 %v323, %v305
    %v329 = vmul.f32 %v325, %v305
    %v330 = vadd.f32 %v326, 1e-12
    %v331 = vadd.f32 %v327, 1e-12
    %v332 = vadd.f32 %v328, 1e-12
    %v333 = vadd.f32 %v329, 1e-12
    %v334 = vrsqrt.pop %v330
    %v335 = vrsqrt.pop %v331
    %v336 = vrsqrt.pop %v332
    %v337 = vrsqrt.pop %v333
    %v338 = vmul.f32 %v310, %v334
    %v339 = vmul.f32 %v311, %v335
    %v340 = vmul.f32 %v312, %v336
    %v341 = vmul.f32 %v313, %v337
    %v343 = vlaneseq
    %v344 = vshrl.u32 %v343, 7
    %v345 = vsub.s32 0, %v344
    %v346 = vrot.slane %v295, %v345
    %v348 = vmul.f32 %v338, %v346
    %v349 = vmul.f32 %v339, %v346
    %v350 = vmul.f32 %v340, %v346
    %v351 = vmul.f32 %v341, %v346
    %v353 = vlaneseq
    %v354 = vshrl.u32 %v353, 7
    %v355 = vsub.s32 0, %v354
    %v356 = vrot.slane %v296, %v355
    %v358 = vadd.f32 %v348, %v356
    %v359 = vadd.f32 %v349, %v356
    %v360 = vadd.f32 %v350, %v356
    %v361 = vadd.f32 %v351, %v356
    %v362 = vld [vmem:[#allocation5] sm:$0x1]
    %v363 = vld [vmem:[#allocation5 + $0x1] sm:$0x1]
    %v364 = vld [vmem:[#allocation5 + $0x2] sm:$0x1]
    %v365 = vld [vmem:[#allocation5 + $0x3] sm:$0x1]
    %v366 = vld [vmem:[#allocation5 + $0x4] sm:$0x1]
    %v367 = vld [vmem:[#allocation5 + $0x5] sm:$0x1]
    %v368 = vld [vmem:[#allocation5 + $0x6] sm:$0x1]
    %v369 = vld [vmem:[#allocation5 + $0x7] sm:$0x1]
    %v370 = vpack.c.bf16 %v359, %v358
    %v371 = vpack.c.bf16 %v361, %v360
    %v372 = vld [vmem:[#allocation10] sm:$0xff]
    %v373 = vld [vmem:[#allocation10 + $0x8] sm:$0xf]
    %v374 = vld [vmem:[#allocation10 + $0xc] sm:$0xff]
    %v375 = vld [vmem:[#allocation10 + $0x14] sm:$0xf]
    %v376 = vld [vmem:[#allocation10 + $0x18] sm:$0xff]
    %v377 = vld [vmem:[#allocation10 + $0x20] sm:$0xf]
    %v378 = vld [vmem:[#allocation10 + $0x24] sm:$0xff]
    %v379 = vld [vmem:[#allocation10 + $0x2c] sm:$0xf]
    %v380 = vld [vmem:[#allocation10 + $0x30] sm:$0xff]
    %v381 = vld [vmem:[#allocation10 + $0x38] sm:$0xf]
    %v382 = vld [vmem:[#allocation10 + $0x3c] sm:$0xff]
    %v383 = vld [vmem:[#allocation10 + $0x44] sm:$0xf]
    %v384 = vld [vmem:[#allocation10 + $0x48] sm:$0xff]
    %v385 = vld [vmem:[#allocation10 + $0x50] sm:$0xf]
    %v386 = vld [vmem:[#allocation10 + $0x54] sm:$0xff]
    %v387 = vld [vmem:[#allocation10 + $0x5c] sm:$0xf]
    %v388 = vld [vmem:[#allocation10 + $0x60] sm:$0xff]
    %v389 = vld [vmem:[#allocation10 + $0x68] sm:$0xf]
    %v390 = vld [vmem:[#allocation10 + $0x6c] sm:$0xff]
    %v391 = vld [vmem:[#allocation10 + $0x74] sm:$0xf]
    %v392 = vld [vmem:[#allocation10 + $0x78] sm:$0xff]
    %v393 = vld [vmem:[#allocation10 + $0x80] sm:$0xf]
    %v394 = vld [vmem:[#allocation10 + $0x84] sm:$0xff]
    %v395 = vld [vmem:[#allocation10 + $0x8c] sm:$0xf]
    %v396 = vld [vmem:[#allocation10 + $0x90] sm:$0xff]
    %v397 = vld [vmem:[#allocation10 + $0x98] sm:$0xf]
    %v398 = vld [vmem:[#allocation10 + $0x9c] sm:$0xff]
    %v399 = vld [vmem:[#allocation10 + $0xa4] sm:$0xf]
    %v400 = vld [vmem:[#allocation10 + $0xa8] sm:$0xff]
    %v401 = vld [vmem:[#allocation10 + $0xb0] sm:$0xf]
    %v402 = vld [vmem:[#allocation10 + $0xb4] sm:$0xff]
    %v403 = vld [vmem:[#allocation10 + $0xbc] sm:$0xf]
    %v404 = vld [vmem:[#allocation11] sm:$0x7]
    %v406 = vlaneseq
    %v407 = vshrl.u32 %v406, 7
    %v408 = vsub.s32 0, %v407
    %v409 = vrot.slane %v404, %v408
    %v410 = vlaneseq
    %v411 = vshrl.u32 %v410, 7
    %v412 = vsub.s32 1, %v411
    %v413 = vrot.slane %v404, %v412
    %v414 = vlaneseq
    %v415 = vshrl.u32 %v414, 7
    %v416 = vsub.s32 2, %v415
    %v417 = vrot.slane %v404, %v416
    %v453 = vunpack.c.l.b16 %v372
    %v454 = vunpack.c.h.b16 %v372
    %v455 = vunpack.c.l.b16 %v373
    %v456 = vunpack.c.l.b16 %v374
    %v457 = vunpack.c.h.b16 %v374
    %v458 = vunpack.c.l.b16 %v375
    %v459 = vunpack.c.l.b16 %v376
    %v460 = vunpack.c.h.b16 %v376
    %v461 = vunpack.c.l.b16 %v377
    %v462 = vunpack.c.l.b16 %v378
    %v463 = vunpack.c.h.b16 %v378
    %v464 = vunpack.c.l.b16 %v379
    %v465 = vunpack.c.l.b16 %v380
    %v466 = vunpack.c.h.b16 %v380
    %v467 = vunpack.c.l.b16 %v381
    %v468 = vunpack.c.l.b16 %v382
    %v469 = vunpack.c.h.b16 %v382
    %v470 = vunpack.c.l.b16 %v383
    %v471 = vunpack.c.l.b16 %v384
    %v472 = vunpack.c.h.b16 %v384
    %v473 = vunpack.c.l.b16 %v385
    %v474 = vunpack.c.l.b16 %v386
    %v475 = vunpack.c.h.b16 %v386
    %v476 = vunpack.c.l.b16 %v387
    %v477 = vunpack.c.l.b16 %v388
    %v478 = vunpack.c.h.b16 %v388
    %v479 = vunpack.c.l.b16 %v389
    %v480 = vunpack.c.l.b16 %v390
    %v481 = vunpack.c.h.b16 %v390
    %v482 = vunpack.c.l.b16 %v391
    %v483 = vunpack.c.l.b16 %v392
    %v484 = vunpack.c.h.b16 %v392
    %v485 = vunpack.c.l.b16 %v393
    %v486 = vunpack.c.l.b16 %v394
    %v487 = vunpack.c.h.b16 %v394
    %v488 = vunpack.c.l.b16 %v395
    %v489 = vunpack.c.l.b16 %v396
    %v490 = vunpack.c.h.b16 %v396
    %v491 = vunpack.c.l.b16 %v397
    %v492 = vunpack.c.l.b16 %v398
    %v493 = vunpack.c.h.b16 %v398
    %v494 = vunpack.c.l.b16 %v399
    %v495 = vunpack.c.l.b16 %v400
    %v496 = vunpack.c.h.b16 %v400
    %v497 = vunpack.c.l.b16 %v401
    %v498 = vunpack.c.l.b16 %v402
    %v499 = vunpack.c.h.b16 %v402
    %v500 = vunpack.c.l.b16 %v403
    %v501 = vpack.c.b16 %v456, %v453
    %v502 = vpack.c.b16 %v457, %v454
    %v503 = vpack.c.b16 %v458, %v455
    %v504 = vpack.c.b16 %v462, %v459
    %v505 = vpack.c.b16 %v463, %v460
    %v506 = vpack.c.b16 %v464, %v461
    %v507 = vpack.c.b16 %v468, %v465
    %v508 = vpack.c.b16 %v469, %v466
    %v509 = vpack.c.b16 %v470, %v467
    %v510 = vpack.c.b16 %v474, %v471
    %v511 = vpack.c.b16 %v475, %v472
    %v512 = vpack.c.b16 %v476, %v473
    %v513 = vpack.c.b16 %v480, %v477
    %v514 = vpack.c.b16 %v481, %v478
    %v515 = vpack.c.b16 %v482, %v479
    %v516 = vpack.c.b16 %v486, %v483
    %v517 = vpack.c.b16 %v487, %v484
    %v518 = vpack.c.b16 %v488, %v485
    %v519 = vpack.c.b16 %v492, %v489
    %v520 = vpack.c.b16 %v493, %v490
    %v521 = vpack.c.b16 %v494, %v491
    %v522 = vpack.c.b16 %v498, %v495
    %v523 = vpack.c.b16 %v499, %v496
    %v524 = vpack.c.b16 %v500, %v497
    %549 = vmatprep.subr.bf16.mxu0 %v502
    %550 = vmatpush1.bf16.msra.mxu0 %v501
    %551 = vmatprep.subr.bf16.mxu0 %v505
    %552 = vmatpush1.bf16.msra.mxu0 %v504
    %553 = vmatprep.subr.bf16.mxu0 %v508
    %554 = vmatpush1.bf16.msra.mxu0 %v507
    %555 = vmatprep.subr.bf16.mxu0 %v511
    %556 = vmatpush1.bf16.msra.mxu0 %v510
    %557 = vmatprep.subr.bf16.mxu0 %v514
    %558 = vmatpush1.bf16.msra.mxu0 %v513
    %559 = vmatprep.subr.bf16.mxu0 %v517
    %560 = vmatpush1.bf16.msra.mxu0 %v516
    %561 = vmatprep.subr.bf16.mxu0 %v520
    %562 = vmatpush1.bf16.msra.mxu0 %v519
    %563 = vmatprep.subr.bf16.mxu0 %v523
    %564 = vmatpush1.bf16.msra.mxu0 %v522
    %565 = vmatprep.subr.bf16.mxu0 0
    %566 = vmatpush1.bf16.msra.mxu0 0
    %567 = vmatprep.subr.bf16.mxu0 0
    %568 = vmatpush1.bf16.msra.mxu0 0
    %569 = vmatprep.subr.bf16.mxu0 0
    %570 = vmatpush1.bf16.msra.mxu0 0
    %571 = vmatprep.subr.bf16.mxu0 0
    %572 = vmatpush1.bf16.msra.mxu0 0
    %573 = vmatprep.subr.bf16.mxu0 0
    %574 = vmatpush1.bf16.msra.mxu0 0
    %575 = vmatprep.subr.bf16.mxu0 0
    %576 = vmatpush1.bf16.msra.mxu0 0
    %577 = vmatprep.subr.bf16.mxu0 0
    %578 = vmatpush1.bf16.msra.mxu0 0
    %579 = vmatprep.subr.bf16.mxu0 0
    %580 = vmatpush1.bf16.msra.mxu0 0
    %581 = vmatprep.mubr.bf16.mxu0 0
    %582 = vmatmul.mubr.bf16.gmra.mrb[0].mxu0 %v370
    %v583 = vpop.f32.mrb[0].mxu0
    %v584 = vadd.f32 %v409, %v583
    %v585 = vpop.f32.mrb[0].mxu0
    %v586 = vadd.f32 %v413, %v585
    %v587 = vpop.f32.mrb[0].mxu0
    %v588 = vadd.f32 %v409, %v587
    %v589 = vpop.f32.mrb[0].mxu0
    %v590 = vadd.f32 %v413, %v589
    %591 = vmatprep.mubr.bf16.mxu0 0
    %592 = vmatmul.mubr.bf16.gmra.mrb[0].mxu0 %v371
    %v593 = vpop.f32.mrb[0].mxu0
    %v594 = vadd.f32 %v409, %v593
    %v595 = vpop.f32.mrb[0].mxu0
    %v596 = vadd.f32 %v413, %v595
    %v597 = vpop.f32.mrb[0].mxu0
    %v598 = vadd.f32 %v409, %v597
    %v599 = vpop.f32.mrb[0].mxu0
    %v600 = vadd.f32 %v413, %v599
    %601 = vdwg.mxu0
    %602 = vmatprep.subr.bf16.mxu0 0
    %603 = vmatpush1.bf16.msra.mxu0 %v503
    %604 = vmatprep.subr.bf16.mxu0 0
    %605 = vmatpush1.bf16.msra.mxu0 %v506
    %606 = vmatprep.subr.bf16.mxu0 0
    %607 = vmatpush1.bf16.msra.mxu0 %v509
    %608 = vmatprep.subr.bf16.mxu0 0
    %609 = vmatpush1.bf16.msra.mxu0 %v512
    %610 = vmatprep.subr.bf16.mxu0 0
    %611 = vmatpush1.bf16.msra.mxu0 %v515
    %612 = vmatprep.subr.bf16.mxu0 0
    %613 = vmatpush1.bf16.msra.mxu0 %v518
    %614 = vmatprep.subr.bf16.mxu0 0
    %615 = vmatpush1.bf16.msra.mxu0 %v521
    %616 = vmatprep.subr.bf16.mxu0 0
    %617 = vmatpush1.bf16.msra.mxu0 %v524
    %618 = vmatprep.subr.bf16.mxu0 0
    %619 = vmatpush1.bf16.msra.mxu0 0
    %620 = vmatprep.subr.bf16.mxu0 0
    %621 = vmatpush1.bf16.msra.mxu0 0
    %622 = vmatprep.subr.bf16.mxu0 0
    %623 = vmatpush1.bf16.msra.mxu0 0
    %624 = vmatprep.subr.bf16.mxu0 0
    %625 = vmatpush1.bf16.msra.mxu0 0
    %626 = vmatprep.subr.bf16.mxu0 0
    %627 = vmatpush1.bf16.msra.mxu0 0
    %628 = vmatprep.subr.bf16.mxu0 0
    %629 = vmatpush1.bf16.msra.mxu0 0
    %630 = vmatprep.subr.bf16.mxu0 0
    %631 = vmatpush1.bf16.msra.mxu0 0
    %632 = vmatprep.subr.bf16.mxu0 0
    %633 = vmatpush1.bf16.msra.mxu0 0
    %634 = vmatprep.mubr.bf16.mxu0 0
    %635 = vmatmul.mubr.bf16.gmra.mrb[0].mxu0 %v370
    %v636 = vpop.f32.mrb[0].mxu0
    %v637 = vadd.f32 %v417, %v636
    %v638 = vpop.f32.mrb[0].mxu0
    %v639 = vpop.f32.mrb[0].mxu0
    %v640 = vadd.f32 %v417, %v639
    %v641 = vpop.f32.mrb[0].mxu0
    %642 = vmatprep.mubr.bf16.mxu0 0
    %643 = vmatmul.mubr.bf16.gmra.mrb[0].mxu0 %v371
    %v644 = vpop.f32.mrb[0].mxu0
    %v645 = vadd.f32 %v417, %v644
    %v646 = vpop.f32.mrb[0].mxu0
    %v647 = vpop.f32.mrb[0].mxu0
    %v648 = vadd.f32 %v417, %v647
    %v649 = vpop.f32.mrb[0].mxu0
    %650 = vdwg.mxu0
    %653 = vrot.lane.b32.xlu0 %v584, 96
    %v654 = vpop.permute.xlu0 %653
    %655 = vrot.lane.b32.xlu0 %v588, 96
    %v656 = vpop.permute.xlu0 %655
    %659 = vrot.lane.b32.xlu0 %v584, 64
    %v660 = vpop.permute.xlu0 %659
    %661 = vrot.lane.b32.xlu0 %v588, 64
    %v662 = vpop.permute.xlu0 %661
    %665 = vrot.lane.b32.xlu0 %v584, 32
    %v666 = vpop.permute.xlu0 %665
    %667 = vrot.lane.b32.xlu0 %v588, 32
    %v668 = vpop.permute.xlu0 %667
    %673 = vrot.lane.b32.xlu0 %v594, 96
    %v674 = vpop.permute.xlu0 %673
    %675 = vrot.lane.b32.xlu0 %v598, 96
    %v676 = vpop.permute.xlu0 %675
    %679 = vrot.lane.b32.xlu0 %v594, 64
    %v680 = vpop.permute.xlu0 %679
    %681 = vrot.lane.b32.xlu0 %v598, 64
    %v682 = vpop.permute.xlu0 %681
    %685 = vrot.lane.b32.xlu0 %v594, 32
    %v686 = vpop.permute.xlu0 %685
    %687 = vrot.lane.b32.xlu0 %v598, 32
    %v688 = vpop.permute.xlu0 %687
    %v691 = vpack.c.bf16 %v588, %v584
    %v692 = vpack.c.bf16 %v656, %v654
    %v693 = vpack.c.bf16 %v662, %v660
    %v694 = vpack.c.bf16 %v668, %v666
    %v695 = vpack.c.bf16 %v598, %v594
    %v696 = vpack.c.bf16 %v676, %v674
    %v697 = vpack.c.bf16 %v682, %v680
    %v698 = vpack.c.bf16 %v688, %v686
    %701 = vrot.lane.b32.xlu0 %v586, 96
    %v702 = vpop.permute.xlu0 %701
    %703 = vrot.lane.b32.xlu0 %v590, 96
    %v704 = vpop.permute.xlu0 %703
    %707 = vrot.lane.b32.xlu0 %v586, 64
    %v708 = vpop.permute.xlu0 %707
    %709 = vrot.lane.b32.xlu0 %v590, 64
    %v710 = vpop.permute.xlu0 %709
    %713 = vrot.lane.b32.xlu0 %v586, 32
    %v714 = vpop.permute.xlu0 %713
    %715 = vrot.lane.b32.xlu0 %v590, 32
    %v716 = vpop.permute.xlu0 %715
    %721 = vrot.lane.b32.xlu0 %v596, 96
    %v722 = vpop.permute.xlu0 %721
    %723 = vrot.lane.b32.xlu0 %v600, 96
    %v724 = vpop.permute.xlu0 %723
    %727 = vrot.lane.b32.xlu0 %v596, 64
    %v728 = vpop.permute.xlu0 %727
    %729 = vrot.lane.b32.xlu0 %v600, 64
    %v730 = vpop.permute.xlu0 %729
    %733 = vrot.lane.b32.xlu0 %v596, 32
    %v734 = vpop.permute.xlu0 %733
    %735 = vrot.lane.b32.xlu0 %v600, 32
    %v736 = vpop.permute.xlu0 %735
    %v739 = vpack.c.bf16 %v590, %v586
    %v740 = vpack.c.bf16 %v704, %v702
    %v741 = vpack.c.bf16 %v710, %v708
    %v742 = vpack.c.bf16 %v716, %v714
    %v743 = vpack.c.bf16 %v600, %v596
    %v744 = vpack.c.bf16 %v724, %v722
    %v745 = vpack.c.bf16 %v730, %v728
    %v746 = vpack.c.bf16 %v736, %v734
    %749 = vrot.lane.b32.xlu0 %v637, 96
    %v750 = vpop.permute.xlu0 %749
    %751 = vrot.lane.b32.xlu0 %v640, 96
    %v752 = vpop.permute.xlu0 %751
    %755 = vrot.lane.b32.xlu0 %v637, 64
    %v756 = vpop.permute.xlu0 %755
    %757 = vrot.lane.b32.xlu0 %v640, 64
    %v758 = vpop.permute.xlu0 %757
    %761 = vrot.lane.b32.xlu0 %v637, 32
    %v762 = vpop.permute.xlu0 %761
    %763 = vrot.lane.b32.xlu0 %v640, 32
    %v764 = vpop.permute.xlu0 %763
    %769 = vrot.lane.b32.xlu0 %v645, 96
    %v770 = vpop.permute.xlu0 %769
    %771 = vrot.lane.b32.xlu0 %v648, 96
    %v772 = vpop.permute.xlu0 %771
    %775 = vrot.lane.b32.xlu0 %v645, 64
    %v776 = vpop.permute.xlu0 %775
    %777 = vrot.lane.b32.xlu0 %v648, 64
    %v778 = vpop.permute.xlu0 %777
    %781 = vrot.lane.b32.xlu0 %v645, 32
    %v782 = vpop.permute.xlu0 %781
    %783 = vrot.lane.b32.xlu0 %v648, 32
    %v784 = vpop.permute.xlu0 %783
    %v787 = vpack.c.bf16 %v640, %v637
    %v788 = vpack.c.bf16 %v752, %v750
    %v789 = vpack.c.bf16 %v758, %v756
    %v790 = vpack.c.bf16 %v764, %v762
    %v791 = vpack.c.bf16 %v648, %v645
    %v792 = vpack.c.bf16 %v772, %v770
    %v793 = vpack.c.bf16 %v778, %v776
    %v794 = vpack.c.bf16 %v784, %v782
    %vm795 = vcmask 261120
    %v797 = vsel %vm795, %v691, 0
    %v800 = vsel %vm795, %v739, 0
    %802 = vmatprep.subr.bf16.mxu0 0
    %803 = vmatpush1.bf16.xpose.msra.mxu0 %v800
    %804 = vmatprep.subr.bf16.mxu0 0
    %805 = vmatpush1.bf16.xpose.msra.mxu0 0
    %806 = vmatprep.subr.bf16.mxu0 0
    %807 = vmatpush1.bf16.xpose.msra.mxu0 0
    %808 = vmatprep.subr.bf16.mxu0 0
    %809 = vmatpush1.bf16.xpose.msra.mxu0 0
    %810 = vmatprep.subr.bf16.mxu0 0
    %811 = vmatpush1.bf16.xpose.msra.mxu0 0
    %812 = vmatprep.subr.bf16.mxu0 0
    %813 = vmatpush1.bf16.xpose.msra.mxu0 0
    %814 = vmatprep.subr.bf16.mxu0 0
    %815 = vmatpush1.bf16.xpose.msra.mxu0 0
    %816 = vmatprep.subr.bf16.mxu0 0
    %817 = vmatpush1.bf16.xpose.msra.mxu0 0
    %818 = vmatprep.subr.bf16.mxu0 0
    %819 = vmatpush1.bf16.xpose.msra.mxu0 0
    %820 = vmatprep.subr.bf16.mxu0 0
    %821 = vmatpush1.bf16.xpose.msra.mxu0 0
    %822 = vmatprep.subr.bf16.mxu0 0
    %823 = vmatpush1.bf16.xpose.msra.mxu0 0
    %824 = vmatprep.subr.bf16.mxu0 0
    %825 = vmatpush1.bf16.xpose.msra.mxu0 0
    %826 = vmatprep.subr.bf16.mxu0 0
    %827 = vmatpush1.bf16.xpose.msra.mxu0 0
    %828 = vmatprep.subr.bf16.mxu0 0
    %829 = vmatpush1.bf16.xpose.msra.mxu0 0
    %830 = vmatprep.subr.bf16.mxu0 0
    %831 = vmatpush1.bf16.xpose.msra.mxu0 0
    %832 = vmatprep.subr.bf16.mxu0 0
    %833 = vmatpush1.bf16.xpose.msra.mxu0 0
    %834 = vmatprep.mubr.bf16.mxu0 0
    %835 = vmatmul.mubr.bf16.gmra.mrb[0].mxu0 %v797
    %v836 = vpop.f32.mrb[0].mxu0
    %v837 = vadd.f32 0.0, %v836
    %v838 = vpop.f32.mrb[0].mxu0
    %v839 = vpop.f32.mrb[0].mxu0
    %v840 = vadd.f32 0.0, %v839
    %v841 = vpop.f32.mrb[0].mxu0
    %842 = vdwg.mxu0
    %v844 = vsel %vm795, %v692, 0
    %v847 = vsel %vm795, %v740, 0
    %849 = vmatprep.subr.bf16.mxu0 0
    %850 = vmatpush1.bf16.xpose.msra.mxu0 %v847
    %851 = vmatprep.subr.bf16.mxu0 0
    %852 = vmatpush1.bf16.xpose.msra.mxu0 0
    %853 = vmatprep.subr.bf16.mxu0 0
    %854 = vmatpush1.bf16.xpose.msra.mxu0 0
    %855 = vmatprep.subr.bf16.mxu0 0
    %856 = vmatpush1.bf16.xpose.msra.mxu0 0
    %857 = vmatprep.subr.bf16.mxu0 0
    %858 = vmatpush1.bf16.xpose.msra.mxu0 0
    %859 = vmatprep.subr.bf16.mxu0 0
    %860 = vmatpush1.bf16.xpose.msra.mxu0 0
    %861 = vmatprep.subr.bf16.mxu0 0
    %862 = vmatpush1.bf16.xpose.msra.mxu0 0
    %863 = vmatprep.subr.bf16.mxu0 0
    %864 = vmatpush1.bf16.xpose.msra.mxu0 0
    %865 = vmatprep.subr.bf16.mxu0 0
    %866 = vmatpush1.bf16.xpose.msra.mxu0 0
    %867 = vmatprep.subr.bf16.mxu0 0
    %868 = vmatpush1.bf16.xpose.msra.mxu0 0
    %869 = vmatprep.subr.bf16.mxu0 0
    %870 = vmatpush1.bf16.xpose.msra.mxu0 0
    %871 = vmatprep.subr.bf16.mxu0 0
    %872 = vmatpush1.bf16.xpose.msra.mxu0 0
    %873 = vmatprep.subr.bf16.mxu0 0
    %874 = vmatpush1.bf16.xpose.msra.mxu0 0
    %875 = vmatprep.subr.bf16.mxu0 0
    %876 = vmatpush1.bf16.xpose.msra.mxu0 0
    %877 = vmatprep.subr.bf16.mxu0 0
    %878 = vmatpush1.bf16.xpose.msra.mxu0 0
    %879 = vmatprep.subr.bf16.mxu0 0
    %880 = vmatpush1.bf16.xpose.msra.mxu0 0
    %881 = vmatprep.mubr.bf16.mxu0 0
    %882 = vmatmul.mubr.bf16.gmra.mrb[0].mxu0 %v844
    %v883 = vpop.f32.mrb[0].mxu0
    %v884 = vadd.f32 0.0, %v883
    %v885 = vpop.f32.mrb[0].mxu0
    %v886 = vpop.f32.mrb[0].mxu0
    %v887 = vadd.f32 0.0, %v886
    %v888 = vpop.f32.mrb[0].mxu0
    %889 = vdwg.mxu0
    %v891 = vsel %vm795, %v693, 0
    %v894 = vsel %vm795, %v741, 0
    %896 = vmatprep.subr.bf16.mxu0 0
    %897 = vmatpush1.bf16.xpose.msra.mxu0 %v894
    %898 = vmatprep.subr.bf16.mxu0 0
    %899 = vmatpush1.bf16.xpose.msra.mxu0 0
    %900 = vmatprep.subr.bf16.mxu0 0
    %901 = vmatpush1.bf16.xpose.msra.mxu0 0
    %902 = vmatprep.subr.bf16.mxu0 0
    %903 = vmatpush1.bf16.xpose.msra.mxu0 0
    %904 = vmatprep.subr.bf16.mxu0 0
    %905 = vmatpush1.bf16.xpose.msra.mxu0 0
    %906 = vmatprep.subr.bf16.mxu0 0
    %907 = vmatpush1.bf16.xpose.msra.mxu0 0
    %908 = vmatprep.subr.bf16.mxu0 0
    %909 = vmatpush1.bf16.xpose.msra.mxu0 0
    %910 = vmatprep.subr.bf16.mxu0 0
    %911 = vmatpush1.bf16.xpose.msra.mxu0 0
    %912 = vmatprep.subr.bf16.mxu0 0
    %913 = vmatpush1.bf16.xpose.msra.mxu0 0
    %914 = vmatprep.subr.bf16.mxu0 0
    %915 = vmatpush1.bf16.xpose.msra.mxu0 0
    %916 = vmatprep.subr.bf16.mxu0 0
    %917 = vmatpush1.bf16.xpose.msra.mxu0 0
    %918 = vmatprep.subr.bf16.mxu0 0
    %919 = vmatpush1.bf16.xpose.msra.mxu0 0
    %920 = vmatprep.subr.bf16.mxu0 0
    %921 = vmatpush1.bf16.xpose.msra.mxu0 0
    %922 = vmatprep.subr.bf16.mxu0 0
    %923 = vmatpush1.bf16.xpose.msra.mxu0 0
    %924 = vmatprep.subr.bf16.mxu0 0
    %925 = vmatpush1.bf16.xpose.msra.mxu0 0
    %926 = vmatprep.subr.bf16.mxu0 0
    %927 = vmatpush1.bf16.xpose.msra.mxu0 0
    %928 = vmatprep.mubr.bf16.mxu0 0
    %929 = vmatmul.mubr.bf16.gmra.mrb[0].mxu0 %v891
    %v930 = vpop.f32.mrb[0].mxu0
    %v931 = vadd.f32 0.0, %v930
    %v932 = vpop.f32.mrb[0].mxu0
    %v933 = vpop.f32.mrb[0].mxu0
    %v934 = vadd.f32 0.0, %v933
    %v935 = vpop.f32.mrb[0].mxu0
    %936 = vdwg.mxu0
    %v938 = vsel %vm795, %v694, 0
    %v941 = vsel %vm795, %v742, 0
    %943 = vmatprep.subr.bf16.mxu0 0
    %944 = vmatpush1.bf16.xpose.msra.mxu0 %v941
    %945 = vmatprep.subr.bf16.mxu0 0
    %946 = vmatpush1.bf16.xpose.msra.mxu0 0
    %947 = vmatprep.subr.bf16.mxu0 0
    %948 = vmatpush1.bf16.xpose.msra.mxu0 0
    %949 = vmatprep.subr.bf16.mxu0 0
    %950 = vmatpush1.bf16.xpose.msra.mxu0 0
    %951 = vmatprep.subr.bf16.mxu0 0
    %952 = vmatpush1.bf16.xpose.msra.mxu0 0
    %953 = vmatprep.subr.bf16.mxu0 0
    %954 = vmatpush1.bf16.xpose.msra.mxu0 0
    %955 = vmatprep.subr.bf16.mxu0 0
    %956 = vmatpush1.bf16.xpose.msra.mxu0 0
    %957 = vmatprep.subr.bf16.mxu0 0
    %958 = vmatpush1.bf16.xpose.msra.mxu0 0
    %959 = vmatprep.subr.bf16.mxu0 0
    %960 = vmatpush1.bf16.xpose.msra.mxu0 0
    %961 = vmatprep.subr.bf16.mxu0 0
    %962 = vmatpush1.bf16.xpose.msra.mxu0 0
    %963 = vmatprep.subr.bf16.mxu0 0
    %964 = vmatpush1.bf16.xpose.msra.mxu0 0
    %965 = vmatprep.subr.bf16.mxu0 0
    %966 = vmatpush1.bf16.xpose.msra.mxu0 0
    %967 = vmatprep.subr.bf16.mxu0 0
    %968 = vmatpush1.bf16.xpose.msra.mxu0 0
    %969 = vmatprep.subr.bf16.mxu0 0
    %970 = vmatpush1.bf16.xpose.msra.mxu0 0
    %971 = vmatprep.subr.bf16.mxu0 0
    %972 = vmatpush1.bf16.xpose.msra.mxu0 0
    %973 = vmatprep.subr.bf16.mxu0 0
    %974 = vmatpush1.bf16.xpose.msra.mxu0 0
    %975 = vmatprep.mubr.bf16.mxu0 0
    %976 = vmatmul.mubr.bf16.gmra.mrb[0].mxu0 %v938
    %v977 = vpop.f32.mrb[0].mxu0
    %v978 = vadd.f32 0.0, %v977
    %v979 = vpop.f32.mrb[0].mxu0
    %v980 = vpop.f32.mrb[0].mxu0
    %v981 = vadd.f32 0.0, %v980
    %v982 = vpop.f32.mrb[0].mxu0
    %983 = vdwg.mxu0
    %v985 = vsel %vm795, %v695, 0
    %v988 = vsel %vm795, %v743, 0
    %990 = vmatprep.subr.bf16.mxu0 0
    %991 = vmatpush1.bf16.xpose.msra.mxu0 %v988
    %992 = vmatprep.subr.bf16.mxu0 0
    %993 = vmatpush1.bf16.xpose.msra.mxu0 0
    %994 = vmatprep.subr.bf16.mxu0 0
    %995 = vmatpush1.bf16.xpose.msra.mxu0 0
    %996 = vmatprep.subr.bf16.mxu0 0
    %997 = vmatpush1.bf16.xpose.msra.mxu0 0
    %998 = vmatprep.subr.bf16.mxu0 0
    %999 = vmatpush1.bf16.xpose.msra.mxu0 0
    %1000 = vmatprep.subr.bf16.mxu0 0
    %1001 = vmatpush1.bf16.xpose.msra.mxu0 0
    %1002 = vmatprep.subr.bf16.mxu0 0
    %1003 = vmatpush1.bf16.xpose.msra.mxu0 0
    %1004 = vmatprep.subr.bf16.mxu0 0
    %1005 = vmatpush1.bf16.xpose.msra.mxu0 0
    %1006 = vmatprep.subr.bf16.mxu0 0
    %1007 = vmatpush1.bf16.xpose.msra.mxu0 0
    %1008 = vmatprep.subr.bf16.mxu0 0
    %1009 = vmatpush1.bf16.xpose.msra.mxu0 0
    %1010 = vmatprep.subr.bf16.mxu0 0
    %1011 = vmatpush1.bf16.xpose.msra.mxu0 0
    %1012 = vmatprep.subr.bf16.mxu0 0
    %1013 = vmatpush1.bf16.xpose.msra.mxu0 0
    %1014 = vmatprep.subr.bf16.mxu0 0
    %1015 = vmatpush1.bf16.xpose.msra.mxu0 0
    %1016 = vmatprep.subr.bf16.mxu0 0
    %1017 = vmatpush1.bf16.xpose.msra.mxu0 0
    %1018 = vmatprep.subr.bf16.mxu0 0
    %1019 = vmatpush1.bf16.xpose.msra.mxu0 0
    %1020 = vmatprep.subr.bf16.mxu0 0
    %1021 = vmatpush1.bf16.xpose.msra.mxu0 0
    %1022 = vmatprep.mubr.bf16.mxu0 0
    %1023 = vmatmul.mubr.bf16.gmra.mrb[0].mxu0 %v985
    %v1024 = vpop.f32.mrb[0].mxu0
    %v1025 = vadd.f32 0.0, %v1024
    %v1026 = vpop.f32.mrb[0].mxu0
    %v1027 = vpop.f32.mrb[0].mxu0
    %v1028 = vadd.f32 0.0, %v1027
    %v1029 = vpop.f32.mrb[0].mxu0
    %1030 = vdwg.mxu0
    %v1032 = vsel %vm795, %v696, 0
    %v1035 = vsel %vm795, %v744, 0
    %1037 = vmatprep.subr.bf16.mxu0 0
    %1038 = vmatpush1.bf16.xpose.msra.mxu0 %v1035
    %1039 = vmatprep.subr.bf16.mxu0 0
    %1040 = vmatpush1.bf16.xpose.msra.mxu0 0
    %1041 = vmatprep.subr.bf16.mxu0 0
    %1042 = vmatpush1.bf16.xpose.msra.mxu0 0
    %1043 = vmatprep.subr.bf16.mxu0 0
    %1044 = vmatpush1.bf16.xpose.msra.mxu0 0
    %1045 = vmatprep.subr.bf16.mxu0 0
    %1046 = vmatpush1.bf16.xpose.msra.mxu0 0
    %1047 = vmatprep.subr.bf16.mxu0 0
    %1048 = vmatpush1.bf16.xpose.msra.mxu0 0
    %1049 = vmatprep.subr.bf16.mxu0 0
    %1050 = vmatpush1.bf16.xpose.msra.mxu0 0
    %1051 = vmatprep.subr.bf16.mxu0 0
    %1052 = vmatpush1.bf16.xpose.msra.mxu0 0
    %1053 = vmatprep.subr.bf16.mxu0 0
    %1054 = vmatpush1.bf16.xpose.msra.mxu0 0
    %1055 = vmatprep.subr.bf16.mxu0 0
    %1056 = vmatpush1.bf16.xpose.msra.mxu0 0
    %1057 = vmatprep.subr.bf16.mxu0 0
    %1058 = vmatpush1.bf16.xpose.msra.mxu0 0
    %1059 = vmatprep.subr.bf16.mxu0 0
    %1060 = vmatpush1.bf16.xpose.msra.mxu0 0
    %1061 = vmatprep.subr.bf16.mxu0 0
    %1062 = vmatpush1.bf16.xpose.msra.mxu0 0
    %1063 = vmatprep.subr.bf16.mxu0 0
    %1064 = vmatpush1.bf16.xpose.msra.mxu0 0
    %1065 = vmatprep.subr.bf16.mxu0 0
    %1066 = vmatpush1.bf16.xpose.msra.mxu0 0
    %1067 = vmatprep.subr.bf16.mxu0 0
    %1068 = vmatpush1.bf16.xpose.msra.mxu0 0
    %1069 = vmatprep.mubr.bf16.mxu0 0
    %1070 = vmatmul.mubr.bf16.gmra.mrb[0].mxu0 %v1032
    %v1071 = vpop.f32.mrb[0].mxu0
    %v1072 = vadd.f32 0.0, %v1071
    %v1073 = vpop.f32.mrb[0].mxu0
    %v1074 = vpop.f32.mrb[0].mxu0
    %v1075 = vadd.f32 0.0, %v1074
    %v1076 = vpop.f32.mrb[0].mxu0
    %1077 = vdwg.mxu0
    %v1079 = vsel %vm795, %v697, 0
    %v1082 = vsel %vm795, %v745, 0
    %1084 = vmatprep.subr.bf16.mxu0 0
    %1085 = vmatpush1.bf16.xpose.msra.mxu0 %v1082
    %1086 = vmatprep.subr.bf16.mxu0 0
    %1087 = vmatpush1.bf16.xpose.msra.mxu0 0
    %1088 = vmatprep.subr.bf16.mxu0 0
    %1089 = vmatpush1.bf16.xpose.msra.mxu0 0
    %1090 = vmatprep.subr.bf16.mxu0 0
    %1091 = vmatpush1.bf16.xpose.msra.mxu0 0
    %1092 = vmatprep.subr.bf16.mxu0 0
    %1093 = vmatpush1.bf16.xpose.msra.mxu0 0
    %1094 = vmatprep.subr.bf16.mxu0 0
    %1095 = vmatpush1.bf16.xpose.msra.mxu0 0
    %1096 = vmatprep.subr.bf16.mxu0 0
    %1097 = vmatpush1.bf16.xpose.msra.mxu0 0
    %1098 = vmatprep.subr.bf16.mxu0 0
    %1099 = vmatpush1.bf16.xpose.msra.mxu0 0
    %1100 = vmatprep.subr.bf16.mxu0 0
    %1101 = vmatpush1.bf16.xpose.msra.mxu0 0
    %1102 = vmatprep.subr.bf16.mxu0 0
    %1103 = vmatpush1.bf16.xpose.msra.mxu0 0
    %1104 = vmatprep.subr.bf16.mxu0 0
    %1105 = vmatpush1.bf16.xpose.msra.mxu0 0
    %1106 = vmatprep.subr.bf16.mxu0 0
    %1107 = vmatpush1.bf16.xpose.msra.mxu0 0
    %1108 = vmatprep.subr.bf16.mxu0 0
    %1109 = vmatpush1.bf16.xpose.msra.mxu0 0
    %1110 = vmatprep.subr.bf16.mxu0 0
    %1111 = vmatpush1.bf16.xpose.msra.mxu0 0
    %1112 = vmatprep.subr.bf16.mxu0 0
    %1113 = vmatpush1.bf16.xpose.msra.mxu0 0
    %1114 = vmatprep.subr.bf16.mxu0 0
    %1115 = vmatpush1.bf16.xpose.msra.mxu0 0
    %1116 = vmatprep.mubr.bf16.mxu0 0
    %1117 = vmatmul.mubr.bf16.gmra.mrb[0].mxu0 %v1079
    %v1118 = vpop.f32.mrb[0].mxu0
    %v1119 = vadd.f32 0.0, %v1118
    %v1120 = vpop.f32.mrb[0].mxu0
    %v1121 = vpop.f32.mrb[0].mxu0
    %v1122 = vadd.f32 0.0, %v1121
    %v1123 = vpop.f32.mrb[0].mxu0
    %1124 = vdwg.mxu0
    %v1126 = vsel %vm795, %v698, 0
    %v1129 = vsel %vm795, %v746, 0
    %1131 = vmatprep.subr.bf16.mxu0 0
    %1132 = vmatpush1.bf16.xpose.msra.mxu0 %v1129
    %1133 = vmatprep.subr.bf16.mxu0 0
    %1134 = vmatpush1.bf16.xpose.msra.mxu0 0
    %1135 = vmatprep.subr.bf16.mxu0 0
    %1136 = vmatpush1.bf16.xpose.msra.mxu0 0
    %1137 = vmatprep.subr.bf16.mxu0 0
    %1138 = vmatpush1.bf16.xpose.msra.mxu0 0
    %1139 = vmatprep.subr.bf16.mxu0 0
    %1140 = vmatpush1.bf16.xpose.msra.mxu0 0
    %1141 = vmatprep.subr.bf16.mxu0 0
    %1142 = vmatpush1.bf16.xpose.msra.mxu0 0
    %1143 = vmatprep.subr.bf16.mxu0 0
    %1144 = vmatpush1.bf16.xpose.msra.mxu0 0
    %1145 = vmatprep.subr.bf16.mxu0 0
    %1146 = vmatpush1.bf16.xpose.msra.mxu0 0
    %1147 = vmatprep.subr.bf16.mxu0 0
    %1148 = vmatpush1.bf16.xpose.msra.mxu0 0
    %1149 = vmatprep.subr.bf16.mxu0 0
    %1150 = vmatpush1.bf16.xpose.msra.mxu0 0
    %1151 = vmatprep.subr.bf16.mxu0 0
    %1152 = vmatpush1.bf16.xpose.msra.mxu0 0
    %1153 = vmatprep.subr.bf16.mxu0 0
    %1154 = vmatpush1.bf16.xpose.msra.mxu0 0
    %1155 = vmatprep.subr.bf16.mxu0 0
    %1156 = vmatpush1.bf16.xpose.msra.mxu0 0
    %1157 = vmatprep.subr.bf16.mxu0 0
    %1158 = vmatpush1.bf16.xpose.msra.mxu0 0
    %1159 = vmatprep.subr.bf16.mxu0 0
    %1160 = vmatpush1.bf16.xpose.msra.mxu0 0
    %1161 = vmatprep.subr.bf16.mxu0 0
    %1162 = vmatpush1.bf16.xpose.msra.mxu0 0
    %1163 = vmatprep.mubr.bf16.mxu0 0
    %1164 = vmatmul.mubr.bf16.gmra.mrb[0].mxu0 %v1126
    %v1165 = vpop.f32.mrb[0].mxu0
    %v1166 = vadd.f32 0.0, %v1165
    %v1167 = vpop.f32.mrb[0].mxu0
    %v1168 = vpop.f32.mrb[0].mxu0
    %v1169 = vadd.f32 0.0, %v1168
    %v1170 = vpop.f32.mrb[0].mxu0
    %1171 = vdwg.mxu0
    %v1172 = vmul.f32 %v837, 0.17677669
    %v1173 = vmul.f32 %v840, 0.17677669
    %v1174 = vmul.f32 %v884, 0.17677669
    %v1175 = vmul.f32 %v887, 0.17677669
    %v1176 = vmul.f32 %v931, 0.17677669
    %v1177 = vmul.f32 %v934, 0.17677669
    %v1178 = vmul.f32 %v978, 0.17677669
    %v1179 = vmul.f32 %v981, 0.17677669
    %v1180 = vmul.f32 %v1025, 0.17677669
    %v1181 = vmul.f32 %v1028, 0.17677669
    %v1182 = vmul.f32 %v1072, 0.17677669
    %v1183 = vmul.f32 %v1075, 0.17677669
    %v1184 = vmul.f32 %v1119, 0.17677669
    %v1185 = vmul.f32 %v1122, 0.17677669
    %v1186 = vmul.f32 %v1166, 0.17677669
    %v1187 = vmul.f32 %v1169, 0.17677669
    %v1196 = vlaneseq
    %v1197 = vshrl.u32 %v1196, 7
    %v1198 = vsub.s32 0, %v1197
    %v1199 = vrot.slane %v362, %v1198
    %v1200 = vlaneseq
    %v1201 = vshrl.u32 %v1200, 7
    %v1202 = vsub.s32 0, %v1201
    %v1203 = vrot.slane %v363, %v1202
    %v1204 = vlaneseq
    %v1205 = vshrl.u32 %v1204, 7
    %v1206 = vsub.s32 0, %v1205
    %v1207 = vrot.slane %v364, %v1206
    %v1208 = vlaneseq
    %v1209 = vshrl.u32 %v1208, 7
    %v1210 = vsub.s32 0, %v1209
    %v1211 = vrot.slane %v365, %v1210
    %v1212 = vlaneseq
    %v1213 = vshrl.u32 %v1212, 7
    %v1214 = vsub.s32 0, %v1213
    %v1215 = vrot.slane %v366, %v1214
    %v1216 = vlaneseq
    %v1217 = vshrl.u32 %v1216, 7
    %v1218 = vsub.s32 0, %v1217
    %v1219 = vrot.slane %v367, %v1218
    %v1220 = vlaneseq
    %v1221 = vshrl.u32 %v1220, 7
    %v1222 = vsub.s32 0, %v1221
    %v1223 = vrot.slane %v368, %v1222
    %v1224 = vlaneseq
    %v1225 = vshrl.u32 %v1224, 7
    %v1226 = vsub.s32 0, %v1225
    %v1227 = vrot.slane %v369, %v1226
    %v1236 = vadd.f32 %v1172, %v1199
    %v1237 = vadd.f32 %v1173, %v1199
    %v1238 = vadd.f32 %v1174, %v1203
    %v1239 = vadd.f32 %v1175, %v1203
    %v1240 = vadd.f32 %v1176, %v1207
    %v1241 = vadd.f32 %v1177, %v1207
    %v1242 = vadd.f32 %v1178, %v1211
    %v1243 = vadd.f32 %v1179, %v1211
    %v1244 = vadd.f32 %v1180, %v1215
    %v1245 = vadd.f32 %v1181, %v1215
    %v1246 = vadd.f32 %v1182, %v1219
    %v1247 = vadd.f32 %v1183, %v1219
    %v1248 = vadd.f32 %v1184, %v1223
    %v1249 = vadd.f32 %v1185, %v1223
    %v1250 = vadd.f32 %v1186, %v1227
    %v1251 = vadd.f32 %v1187, %v1227
    %vm1252 = vcmask 130048
    %v1253 = vsel %vm1252, %v1236, -inf
    %1254 = vmax.xlane.f32.xlu0 %v1253
    %v1255 = vpop.xlane.xlu0 %1254
    %v1256 = vsel %vm1252, %v1237, -inf
    %1257 = vmax.xlane.f32.xlu0 %v1256
    %v1258 = vpop.xlane.xlu0 %1257
    %v1259 = vsel %vm1252, %v1238, -inf
    %1260 = vmax.xlane.f32.xlu0 %v1259
    %v1261 = vpop.xlane.xlu0 %1260
    %v1262 = vsel %vm1252, %v1239, -inf
    %1263 = vmax.xlane.f32.xlu0 %v1262
    %v1264 = vpop.xlane.xlu0 %1263
    %v1265 = vsel %vm1252, %v1240, -inf
    %1266 = vmax.xlane.f32.xlu0 %v1265
    %v1267 = vpop.xlane.xlu0 %1266
    %v1268 = vsel %vm1252, %v1241, -inf
    %1269 = vmax.xlane.f32.xlu0 %v1268
    %v1270 = vpop.xlane.xlu0 %1269
    %v1271 = vsel %vm1252, %v1242, -inf
    %1272 = vmax.xlane.f32.xlu0 %v1271
    %v1273 = vpop.xlane.xlu0 %1272
    %v1274 = vsel %vm1252, %v1243, -inf
    %1275 = vmax.xlane.f32.xlu0 %v1274
    %v1276 = vpop.xlane.xlu0 %1275
    %v1277 = vsel %vm1252, %v1244, -inf
    %1278 = vmax.xlane.f32.xlu0 %v1277
    %v1279 = vpop.xlane.xlu0 %1278
    %v1280 = vsel %vm1252, %v1245, -inf
    %1281 = vmax.xlane.f32.xlu0 %v1280
    %v1282 = vpop.xlane.xlu0 %1281
    %v1283 = vsel %vm1252, %v1246, -inf
    %1284 = vmax.xlane.f32.xlu0 %v1283
    %v1285 = vpop.xlane.xlu0 %1284
    %v1286 = vsel %vm1252, %v1247, -inf
    %1287 = vmax.xlane.f32.xlu0 %v1286
    %v1288 = vpop.xlane.xlu0 %1287
    %v1289 = vsel %vm1252, %v1248, -inf
    %1290 = vmax.xlane.f32.xlu0 %v1289
    %v1291 = vpop.xlane.xlu0 %1290
    %v1292 = vsel %vm1252, %v1249, -inf
    %1293 = vmax.xlane.f32.xlu0 %v1292
    %v1294 = vpop.xlane.xlu0 %1293
    %v1295 = vsel %vm1252, %v1250, -inf
    %1296 = vmax.xlane.f32.xlu0 %v1295
    %v1297 = vpop.xlane.xlu0 %1296
    %v1298 = vsel %vm1252, %v1251, -inf
    %1299 = vmax.xlane.f32.xlu0 %v1298
    %v1300 = vpop.xlane.xlu0 %1299
    %v1301 = vsub.f32 %v1236, %v1255
    %v1302 = vsub.f32 %v1237, %v1258
    %v1303 = vsub.f32 %v1238, %v1261
    %v1304 = vsub.f32 %v1239, %v1264
    %v1305 = vsub.f32 %v1240, %v1267
    %v1306 = vsub.f32 %v1241, %v1270
    %v1307 = vsub.f32 %v1242, %v1273
    %v1308 = vsub.f32 %v1243, %v1276
    %v1309 = vsub.f32 %v1244, %v1279
    %v1310 = vsub.f32 %v1245, %v1282
    %v1311 = vsub.f32 %v1246, %v1285
    %v1312 = vsub.f32 %v1247, %v1288
    %v1313 = vsub.f32 %v1248, %v1291
    %v1314 = vsub.f32 %v1249, %v1294
    %v1315 = vsub.f32 %v1250, %v1297
    %v1316 = vsub.f32 %v1251, %v1300
    %v1317 = vmul.f32 %v1301, 1.442695
    %v1318 = vpow.pop %v1317
    %v1319 = vmul.f32 %v1302, 1.442695
    %v1320 = vpow.pop %v1319
    %v1321 = vmul.f32 %v1303, 1.442695
    %v1322 = vpow.pop %v1321
    %v1323 = vmul.f32 %v1304, 1.442695
    %v1324 = vpow.pop %v1323
    %v1325 = vmul.f32 %v1305, 1.442695
    %v1326 = vpow.pop %v1325
    %v1327 = vmul.f32 %v1306, 1.442695
    %v1328 = vpow.pop %v1327
    %v1329 = vmul.f32 %v1307, 1.442695
    %v1330 = vpow.pop %v1329
    %v1331 = vmul.f32 %v1308, 1.442695
    %v1332 = vpow.pop %v1331
    %v1333 = vmul.f32 %v1309, 1.442695
    %v1334 = vpow.pop %v1333
    %v1335 = vmul.f32 %v1310, 1.442695
    %v1336 = vpow.pop %v1335
    %v1337 = vmul.f32 %v1311, 1.442695
    %v1338 = vpow.pop %v1337
    %v1339 = vmul.f32 %v1312, 1.442695
    %v1340 = vpow.pop %v1339
    %v1341 = vmul.f32 %v1313, 1.442695
    %v1342 = vpow.pop %v1341
    %v1343 = vmul.f32 %v1314, 1.442695
    %v1344 = vpow.pop %v1343
    %v1345 = vmul.f32 %v1315, 1.442695
    %v1346 = vpow.pop %v1345
    %v1347 = vmul.f32 %v1316, 1.442695
    %v1348 = vpow.pop %v1347
    %v1349 = vsel %vm1252, %v1318, 0.0
    %1350 = vadd.xlane.f32.xlu0 %v1349
    %v1351 = vpop.xlane.xlu0 %1350
    %v1352 = vsel %vm1252, %v1320, 0.0
    %1353 = vadd.xlane.f32.xlu0 %v1352
    %v1354 = vpop.xlane.xlu0 %1353
    %v1355 = vsel %vm1252, %v1322, 0.0
    %1356 = vadd.xlane.f32.xlu0 %v1355
    %v1357 = vpop.xlane.xlu0 %1356
    %v1358 = vsel %vm1252, %v1324, 0.0
    %1359 = vadd.xlane.f32.xlu0 %v1358
    %v1360 = vpop.xlane.xlu0 %1359
    %v1361 = vsel %vm1252, %v1326, 0.0
    %1362 = vadd.xlane.f32.xlu0 %v1361
    %v1363 = vpop.xlane.xlu0 %1362
    %v1364 = vsel %vm1252, %v1328, 0.0
    %1365 = vadd.xlane.f32.xlu0 %v1364
    %v1366 = vpop.xlane.xlu0 %1365
    %v1367 = vsel %vm1252, %v1330, 0.0
    %1368 = vadd.xlane.f32.xlu0 %v1367
    %v1369 = vpop.xlane.xlu0 %1368
    %v1370 = vsel %vm1252, %v1332, 0.0
    %1371 = vadd.xlane.f32.xlu0 %v1370
    %v1372 = vpop.xlane.xlu0 %1371
    %v1373 = vsel %vm1252, %v1334, 0.0
    %1374 = vadd.xlane.f32.xlu0 %v1373
    %v1375 = vpop.xlane.xlu0 %1374
    %v1376 = vsel %vm1252, %v1336, 0.0
    %1377 = vadd.xlane.f32.xlu0 %v1376
    %v1378 = vpop.xlane.xlu0 %1377
    %v1379 = vsel %vm1252, %v1338, 0.0
    %1380 = vadd.xlane.f32.xlu0 %v1379
    %v1381 = vpop.xlane.xlu0 %1380
    %v1382 = vsel %vm1252, %v1340, 0.0
    %1383 = vadd.xlane.f32.xlu0 %v1382
    %v1384 = vpop.xlane.xlu0 %1383
    %v1385 = vsel %vm1252, %v1342, 0.0
    %1386 = vadd.xlane.f32.xlu0 %v1385
    %v1387 = vpop.xlane.xlu0 %1386
    %v1388 = vsel %vm1252, %v1344, 0.0
    %1389 = vadd.xlane.f32.xlu0 %v1388
    %v1390 = vpop.xlane.xlu0 %1389
    %v1391 = vsel %vm1252, %v1346, 0.0
    %1392 = vadd.xlane.f32.xlu0 %v1391
    %v1393 = vpop.xlane.xlu0 %1392
    %v1394 = vsel %vm1252, %v1348, 0.0
    %1395 = vadd.xlane.f32.xlu0 %v1394
    %v1396 = vpop.xlane.xlu0 %1395
    %v1397 = vrcp.pop %v1351
    %v1398 = vrcp.pop %v1354
    %v1399 = vrcp.pop %v1357
    %v1400 = vrcp.pop %v1360
    %v1401 = vrcp.pop %v1363
    %v1402 = vrcp.pop %v1366
    %v1403 = vrcp.pop %v1369
    %v1404 = vrcp.pop %v1372
    %v1405 = vrcp.pop %v1375
    %v1406 = vrcp.pop %v1378
    %v1407 = vrcp.pop %v1381
    %v1408 = vrcp.pop %v1384
    %v1409 = vrcp.pop %v1387
    %v1410 = vrcp.pop %v1390
    %v1411 = vrcp.pop %v1393
    %v1412 = vrcp.pop %v1396
    %v1413 = vmul.f32 %v1318, %v1397
    %v1414 = vmul.f32 %v1320, %v1398
    %v1415 = vmul.f32 %v1322, %v1399
    %v1416 = vmul.f32 %v1324, %v1400
    %v1417 = vmul.f32 %v1326, %v1401
    %v1418 = vmul.f32 %v1328, %v1402
    %v1419 = vmul.f32 %v1330, %v1403
    %v1420 = vmul.f32 %v1332, %v1404
    %v1421 = vmul.f32 %v1334, %v1405
    %v1422 = vmul.f32 %v1336, %v1406
    %v1423 = vmul.f32 %v1338, %v1407
    %v1424 = vmul.f32 %v1340, %v1408
    %v1425 = vmul.f32 %v1342, %v1409
    %v1426 = vmul.f32 %v1344, %v1410
    %v1427 = vmul.f32 %v1346, %v1411
    %v1428 = vmul.f32 %v1348, %v1412
    %v1429 = vpack.c.bf16 %v1414, %v1413
    %v1430 = vpack.c.bf16 %v1416, %v1415
    %v1431 = vpack.c.bf16 %v1418, %v1417
    %v1432 = vpack.c.bf16 %v1420, %v1419
    %v1433 = vpack.c.bf16 %v1422, %v1421
    %v1434 = vpack.c.bf16 %v1424, %v1423
    %v1435 = vpack.c.bf16 %v1426, %v1425
    %v1436 = vpack.c.bf16 %v1428, %v1427
    %v1438 = vsel %vm1252, %v1429, 0
    %1440 = vmatprep.subr.bf16.mxu0 0
    %1441 = vmatpush1.bf16.msra.mxu0 %v787
    %1442 = vmatprep.subr.bf16.mxu0 0
    %1443 = vmatpush1.bf16.msra.mxu0 0
    %1444 = vmatprep.subr.bf16.mxu0 0
    %1445 = vmatpush1.bf16.msra.mxu0 0
    %1446 = vmatprep.subr.bf16.mxu0 0
    %1447 = vmatpush1.bf16.msra.mxu0 0
    %1448 = vmatprep.subr.bf16.mxu0 0
    %1449 = vmatpush1.bf16.msra.mxu0 0
    %1450 = vmatprep.subr.bf16.mxu0 0
    %1451 = vmatpush1.bf16.msra.mxu0 0
    %1452 = vmatprep.subr.bf16.mxu0 0
    %1453 = vmatpush1.bf16.msra.mxu0 0
    %1454 = vmatprep.subr.bf16.mxu0 0
    %1455 = vmatpush1.bf16.msra.mxu0 0
    %1456 = vmatprep.subr.bf16.mxu0 0
    %1457 = vmatpush1.bf16.msra.mxu0 0
    %1458 = vmatprep.subr.bf16.mxu0 0
    %1459 = vmatpush1.bf16.msra.mxu0 0
    %1460 = vmatprep.subr.bf16.mxu0 0
    %1461 = vmatpush1.bf16.msra.mxu0 0
    %1462 = vmatprep.subr.bf16.mxu0 0
    %1463 = vmatpush1.bf16.msra.mxu0 0
    %1464 = vmatprep.subr.bf16.mxu0 0
    %1465 = vmatpush1.bf16.msra.mxu0 0
    %1466 = vmatprep.subr.bf16.mxu0 0
    %1467 = vmatpush1.bf16.msra.mxu0 0
    %1468 = vmatprep.subr.bf16.mxu0 0
    %1469 = vmatpush1.bf16.msra.mxu0 0
    %1470 = vmatprep.subr.bf16.mxu0 0
    %1471 = vmatpush1.bf16.msra.mxu0 0
    %1472 = vmatprep.mubr.bf16.mxu0 0
    %1473 = vmatmul.mubr.bf16.gmra.mrb[0].mxu0 %v1438
    %v1474 = vpop.f32.mrb[0].mxu0
    %v1475 = vadd.f32 0.0, %v1474
    %v1476 = vpop.f32.mrb[0].mxu0
    %v1477 = vpop.f32.mrb[0].mxu0
    %v1478 = vadd.f32 0.0, %v1477
    %v1479 = vpop.f32.mrb[0].mxu0
    %1480 = vdwg.mxu0
    %v1482 = vsel %vm1252, %v1430, 0
    %1484 = vmatprep.subr.bf16.mxu0 0
    %1485 = vmatpush1.bf16.msra.mxu0 %v788
    %1486 = vmatprep.subr.bf16.mxu0 0
    %1487 = vmatpush1.bf16.msra.mxu0 0
    %1488 = vmatprep.subr.bf16.mxu0 0
    %1489 = vmatpush1.bf16.msra.mxu0 0
    %1490 = vmatprep.subr.bf16.mxu0 0
    %1491 = vmatpush1.bf16.msra.mxu0 0
    %1492 = vmatprep.subr.bf16.mxu0 0
    %1493 = vmatpush1.bf16.msra.mxu0 0
    %1494 = vmatprep.subr.bf16.mxu0 0
    %1495 = vmatpush1.bf16.msra.mxu0 0
    %1496 = vmatprep.subr.bf16.mxu0 0
    %1497 = vmatpush1.bf16.msra.mxu0 0
    %1498 = vmatprep.subr.bf16.mxu0 0
    %1499 = vmatpush1.bf16.msra.mxu0 0
    %1500 = vmatprep.subr.bf16.mxu0 0
    %1501 = vmatpush1.bf16.msra.mxu0 0
    %1502 = vmatprep.subr.bf16.mxu0 0
    %1503 = vmatpush1.bf16.msra.mxu0 0
    %1504 = vmatprep.subr.bf16.mxu0 0
    %1505 = vmatpush1.bf16.msra.mxu0 0
    %1506 = vmatprep.subr.bf16.mxu0 0
    %1507 = vmatpush1.bf16.msra.mxu0 0
    %1508 = vmatprep.subr.bf16.mxu0 0
    %1509 = vmatpush1.bf16.msra.mxu0 0
    %1510 = vmatprep.subr.bf16.mxu0 0
    %1511 = vmatpush1.bf16.msra.mxu0 0
    %1512 = vmatprep.subr.bf16.mxu0 0
    %1513 = vmatpush1.bf16.msra.mxu0 0
    %1514 = vmatprep.subr.bf16.mxu0 0
    %1515 = vmatpush1.bf16.msra.mxu0 0
    %1516 = vmatprep.mubr.bf16.mxu0 0
    %1517 = vmatmul.mubr.bf16.gmra.mrb[0].mxu0 %v1482
    %v1518 = vpop.f32.mrb[0].mxu0
    %v1519 = vadd.f32 0.0, %v1518
    %v1520 = vpop.f32.mrb[0].mxu0
    %v1521 = vpop.f32.mrb[0].mxu0
    %v1522 = vadd.f32 0.0, %v1521
    %v1523 = vpop.f32.mrb[0].mxu0
    %1524 = vdwg.mxu0
    %v1526 = vsel %vm1252, %v1431, 0
    %1528 = vmatprep.subr.bf16.mxu0 0
    %1529 = vmatpush1.bf16.msra.mxu0 %v789
    %1530 = vmatprep.subr.bf16.mxu0 0
    %1531 = vmatpush1.bf16.msra.mxu0 0
    %1532 = vmatprep.subr.bf16.mxu0 0
    %1533 = vmatpush1.bf16.msra.mxu0 0
    %1534 = vmatprep.subr.bf16.mxu0 0
    %1535 = vmatpush1.bf16.msra.mxu0 0
    %1536 = vmatprep.subr.bf16.mxu0 0
    %1537 = vmatpush1.bf16.msra.mxu0 0
    %1538 = vmatprep.subr.bf16.mxu0 0
    %1539 = vmatpush1.bf16.msra.mxu0 0
    %1540 = vmatprep.subr.bf16.mxu0 0
    %1541 = vmatpush1.bf16.msra.mxu0 0
    %1542 = vmatprep.subr.bf16.mxu0 0
    %1543 = vmatpush1.bf16.msra.mxu0 0
    %1544 = vmatprep.subr.bf16.mxu0 0
    %1545 = vmatpush1.bf16.msra.mxu0 0
    %1546 = vmatprep.subr.bf16.mxu0 0
    %1547 = vmatpush1.bf16.msra.mxu0 0
    %1548 = vmatprep.subr.bf16.mxu0 0
    %1549 = vmatpush1.bf16.msra.mxu0 0
    %1550 = vmatprep.subr.bf16.mxu0 0
    %1551 = vmatpush1.bf16.msra.mxu0 0
    %1552 = vmatprep.subr.bf16.mxu0 0
    %1553 = vmatpush1.bf16.msra.mxu0 0
    %1554 = vmatprep.subr.bf16.mxu0 0
    %1555 = vmatpush1.bf16.msra.mxu0 0
    %1556 = vmatprep.subr.bf16.mxu0 0
    %1557 = vmatpush1.bf16.msra.mxu0 0
    %1558 = vmatprep.subr.bf16.mxu0 0
    %1559 = vmatpush1.bf16.msra.mxu0 0
    %1560 = vmatprep.mubr.bf16.mxu0 0
    %1561 = vmatmul.mubr.bf16.gmra.mrb[0].mxu0 %v1526
    %v1562 = vpop.f32.mrb[0].mxu0
    %v1563 = vadd.f32 0.0, %v1562
    %v1564 = vpop.f32.mrb[0].mxu0
    %v1565 = vpop.f32.mrb[0].mxu0
    %v1566 = vadd.f32 0.0, %v1565
    %v1567 = vpop.f32.mrb[0].mxu0
    %1568 = vdwg.mxu0
    %v1570 = vsel %vm1252, %v1432, 0
    %1572 = vmatprep.subr.bf16.mxu0 0
    %1573 = vmatpush1.bf16.msra.mxu0 %v790
    %1574 = vmatprep.subr.bf16.mxu0 0
    %1575 = vmatpush1.bf16.msra.mxu0 0
    %1576 = vmatprep.subr.bf16.mxu0 0
    %1577 = vmatpush1.bf16.msra.mxu0 0
    %1578 = vmatprep.subr.bf16.mxu0 0
    %1579 = vmatpush1.bf16.msra.mxu0 0
    %1580 = vmatprep.subr.bf16.mxu0 0
    %1581 = vmatpush1.bf16.msra.mxu0 0
    %1582 = vmatprep.subr.bf16.mxu0 0
    %1583 = vmatpush1.bf16.msra.mxu0 0
    %1584 = vmatprep.subr.bf16.mxu0 0
    %1585 = vmatpush1.bf16.msra.mxu0 0
    %1586 = vmatprep.subr.bf16.mxu0 0
    %1587 = vmatpush1.bf16.msra.mxu0 0
    %1588 = vmatprep.subr.bf16.mxu0 0
    %1589 = vmatpush1.bf16.msra.mxu0 0
    %1590 = vmatprep.subr.bf16.mxu0 0
    %1591 = vmatpush1.bf16.msra.mxu0 0
    %1592 = vmatprep.subr.bf16.mxu0 0
    %1593 = vmatpush1.bf16.msra.mxu0 0
    %1594 = vmatprep.subr.bf16.mxu0 0
    %1595 = vmatpush1.bf16.msra.mxu0 0
    %1596 = vmatprep.subr.bf16.mxu0 0
    %1597 = vmatpush1.bf16.msra.mxu0 0
    %1598 = vmatprep.subr.bf16.mxu0 0
    %1599 = vmatpush1.bf16.msra.mxu0 0
    %1600 = vmatprep.subr.bf16.mxu0 0
    %1601 = vmatpush1.bf16.msra.mxu0 0
    %1602 = vmatprep.subr.bf16.mxu0 0
    %1603 = vmatpush1.bf16.msra.mxu0 0
    %1604 = vmatprep.mubr.bf16.mxu0 0
    %1605 = vmatmul.mubr.bf16.gmra.mrb[0].mxu0 %v1570
    %v1606 = vpop.f32.mrb[0].mxu0
    %v1607 = vadd.f32 0.0, %v1606
    %v1608 = vpop.f32.mrb[0].mxu0
    %v1609 = vpop.f32.mrb[0].mxu0
    %v1610 = vadd.f32 0.0, %v1609
    %v1611 = vpop.f32.mrb[0].mxu0
    %1612 = vdwg.mxu0
    %v1614 = vsel %vm1252, %v1433, 0
    %1616 = vmatprep.subr.bf16.mxu0 0
    %1617 = vmatpush1.bf16.msra.mxu0 %v791
    %1618 = vmatprep.subr.bf16.mxu0 0
    %1619 = vmatpush1.bf16.msra.mxu0 0
    %1620 = vmatprep.subr.bf16.mxu0 0
    %1621 = vmatpush1.bf16.msra.mxu0 0
    %1622 = vmatprep.subr.bf16.mxu0 0
    %1623 = vmatpush1.bf16.msra.mxu0 0
    %1624 = vmatprep.subr.bf16.mxu0 0
    %1625 = vmatpush1.bf16.msra.mxu0 0
    %1626 = vmatprep.subr.bf16.mxu0 0
    %1627 = vmatpush1.bf16.msra.mxu0 0
    %1628 = vmatprep.subr.bf16.mxu0 0
    %1629 = vmatpush1.bf16.msra.mxu0 0
    %1630 = vmatprep.subr.bf16.mxu0 0
    %1631 = vmatpush1.bf16.msra.mxu0 0
    %1632 = vmatprep.subr.bf16.mxu0 0
    %1633 = vmatpush1.bf16.msra.mxu0 0
    %1634 = vmatprep.subr.bf16.mxu0 0
    %1635 = vmatpush1.bf16.msra.mxu0 0
    %1636 = vmatprep.subr.bf16.mxu0 0
    %1637 = vmatpush1.bf16.msra.mxu0 0
    %1638 = vmatprep.subr.bf16.mxu0 0
    %1639 = vmatpush1.bf16.msra.mxu0 0
    %1640 = vmatprep.subr.bf16.mxu0 0
    %1641 = vmatpush1.bf16.msra.mxu0 0
    %1642 = vmatprep.subr.bf16.mxu0 0
    %1643 = vmatpush1.bf16.msra.mxu0 0
    %1644 = vmatprep.subr.bf16.mxu0 0
    %1645 = vmatpush1.bf16.msra.mxu0 0
    %1646 = vmatprep.subr.bf16.mxu0 0
    %1647 = vmatpush1.bf16.msra.mxu0 0
    %1648 = vmatprep.mubr.bf16.mxu0 0
    %1649 = vmatmul.mubr.bf16.gmra.mrb[0].mxu0 %v1614
    %v1650 = vpop.f32.mrb[0].mxu0
    %v1651 = vadd.f32 0.0, %v1650
    %v1652 = vpop.f32.mrb[0].mxu0
    %v1653 = vpop.f32.mrb[0].mxu0
    %v1654 = vadd.f32 0.0, %v1653
    %v1655 = vpop.f32.mrb[0].mxu0
    %1656 = vdwg.mxu0
    %v1658 = vsel %vm1252, %v1434, 0
    %1660 = vmatprep.subr.bf16.mxu0 0
    %1661 = vmatpush1.bf16.msra.mxu0 %v792
    %1662 = vmatprep.subr.bf16.mxu0 0
    %1663 = vmatpush1.bf16.msra.mxu0 0
    %1664 = vmatprep.subr.bf16.mxu0 0
    %1665 = vmatpush1.bf16.msra.mxu0 0
    %1666 = vmatprep.subr.bf16.mxu0 0
    %1667 = vmatpush1.bf16.msra.mxu0 0
    %1668 = vmatprep.subr.bf16.mxu0 0
    %1669 = vmatpush1.bf16.msra.mxu0 0
    %1670 = vmatprep.subr.bf16.mxu0 0
    %1671 = vmatpush1.bf16.msra.mxu0 0
    %1672 = vmatprep.subr.bf16.mxu0 0
    %1673 = vmatpush1.bf16.msra.mxu0 0
    %1674 = vmatprep.subr.bf16.mxu0 0
    %1675 = vmatpush1.bf16.msra.mxu0 0
    %1676 = vmatprep.subr.bf16.mxu0 0
    %1677 = vmatpush1.bf16.msra.mxu0 0
    %1678 = vmatprep.subr.bf16.mxu0 0
    %1679 = vmatpush1.bf16.msra.mxu0 0
    %1680 = vmatprep.subr.bf16.mxu0 0
    %1681 = vmatpush1.bf16.msra.mxu0 0
    %1682 = vmatprep.subr.bf16.mxu0 0
    %1683 = vmatpush1.bf16.msra.mxu0 0
    %1684 = vmatprep.subr.bf16.mxu0 0
    %1685 = vmatpush1.bf16.msra.mxu0 0
    %1686 = vmatprep.subr.bf16.mxu0 0
    %1687 = vmatpush1.bf16.msra.mxu0 0
    %1688 = vmatprep.subr.bf16.mxu0 0
    %1689 = vmatpush1.bf16.msra.mxu0 0
    %1690 = vmatprep.subr.bf16.mxu0 0
    %1691 = vmatpush1.bf16.msra.mxu0 0
    %1692 = vmatprep.mubr.bf16.mxu0 0
    %1693 = vmatmul.mubr.bf16.gmra.mrb[0].mxu0 %v1658
    %v1694 = vpop.f32.mrb[0].mxu0
    %v1695 = vadd.f32 0.0, %v1694
    %v1696 = vpop.f32.mrb[0].mxu0
    %v1697 = vpop.f32.mrb[0].mxu0
    %v1698 = vadd.f32 0.0, %v1697
    %v1699 = vpop.f32.mrb[0].mxu0
    %1700 = vdwg.mxu0
    %v1702 = vsel %vm1252, %v1435, 0
    %1704 = vmatprep.subr.bf16.mxu0 0
    %1705 = vmatpush1.bf16.msra.mxu0 %v793
    %1706 = vmatprep.subr.bf16.mxu0 0
    %1707 = vmatpush1.bf16.msra.mxu0 0
    %1708 = vmatprep.subr.bf16.mxu0 0
    %1709 = vmatpush1.bf16.msra.mxu0 0
    %1710 = vmatprep.subr.bf16.mxu0 0
    %1711 = vmatpush1.bf16.msra.mxu0 0
    %1712 = vmatprep.subr.bf16.mxu0 0
    %1713 = vmatpush1.bf16.msra.mxu0 0
    %1714 = vmatprep.subr.bf16.mxu0 0
    %1715 = vmatpush1.bf16.msra.mxu0 0
    %1716 = vmatprep.subr.bf16.mxu0 0
    %1717 = vmatpush1.bf16.msra.mxu0 0
    %1718 = vmatprep.subr.bf16.mxu0 0
    %1719 = vmatpush1.bf16.msra.mxu0 0
    %1720 = vmatprep.subr.bf16.mxu0 0
    %1721 = vmatpush1.bf16.msra.mxu0 0
    %1722 = vmatprep.subr.bf16.mxu0 0
    %1723 = vmatpush1.bf16.msra.mxu0 0
    %1724 = vmatprep.subr.bf16.mxu0 0
    %1725 = vmatpush1.bf16.msra.mxu0 0
    %1726 = vmatprep.subr.bf16.mxu0 0
    %1727 = vmatpush1.bf16.msra.mxu0 0
    %1728 = vmatprep.subr.bf16.mxu0 0
    %1729 = vmatpush1.bf16.msra.mxu0 0
    %1730 = vmatprep.subr.bf16.mxu0 0
    %1731 = vmatpush1.bf16.msra.mxu0 0
    %1732 = vmatprep.subr.bf16.mxu0 0
    %1733 = vmatpush1.bf16.msra.mxu0 0
    %1734 = vmatprep.subr.bf16.mxu0 0
    %1735 = vmatpush1.bf16.msra.mxu0 0
    %1736 = vmatprep.mubr.bf16.mxu0 0
    %1737 = vmatmul.mubr.bf16.gmra.mrb[0].mxu0 %v1702
    %v1738 = vpop.f32.mrb[0].mxu0
    %v1739 = vadd.f32 0.0, %v1738
    %v1740 = vpop.f32.mrb[0].mxu0
    %v1741 = vpop.f32.mrb[0].mxu0
    %v1742 = vadd.f32 0.0, %v1741
    %v1743 = vpop.f32.mrb[0].mxu0
    %1744 = vdwg.mxu0
    %v1746 = vsel %vm1252, %v1436, 0
    %1748 = vmatprep.subr.bf16.mxu0 0
    %1749 = vmatpush1.bf16.msra.mxu0 %v794
    %1750 = vmatprep.subr.bf16.mxu0 0
    %1751 = vmatpush1.bf16.msra.mxu0 0
    %1752 = vmatprep.subr.bf16.mxu0 0
    %1753 = vmatpush1.bf16.msra.mxu0 0
    %1754 = vmatprep.subr.bf16.mxu0 0
    %1755 = vmatpush1.bf16.msra.mxu0 0
    %1756 = vmatprep.subr.bf16.mxu0 0
    %1757 = vmatpush1.bf16.msra.mxu0 0
    %1758 = vmatprep.subr.bf16.mxu0 0
    %1759 = vmatpush1.bf16.msra.mxu0 0
    %1760 = vmatprep.subr.bf16.mxu0 0
    %1761 = vmatpush1.bf16.msra.mxu0 0
    %1762 = vmatprep.subr.bf16.mxu0 0
    %1763 = vmatpush1.bf16.msra.mxu0 0
    %1764 = vmatprep.subr.bf16.mxu0 0
    %1765 = vmatpush1.bf16.msra.mxu0 0
    %1766 = vmatprep.subr.bf16.mxu0 0
    %1767 = vmatpush1.bf16.msra.mxu0 0
    %1768 = vmatprep.subr.bf16.mxu0 0
    %1769 = vmatpush1.bf16.msra.mxu0 0
    %1770 = vmatprep.subr.bf16.mxu0 0
    %1771 = vmatpush1.bf16.msra.mxu0 0
    %1772 = vmatprep.subr.bf16.mxu0 0
    %1773 = vmatpush1.bf16.msra.mxu0 0
    %1774 = vmatprep.subr.bf16.mxu0 0
    %1775 = vmatpush1.bf16.msra.mxu0 0
    %1776 = vmatprep.subr.bf16.mxu0 0
    %1777 = vmatpush1.bf16.msra.mxu0 0
    %1778 = vmatprep.subr.bf16.mxu0 0
    %1779 = vmatpush1.bf16.msra.mxu0 0
    %1780 = vmatprep.mubr.bf16.mxu0 0
    %1781 = vmatmul.mubr.bf16.gmra.mrb[0].mxu0 %v1746
    %v1782 = vpop.f32.mrb[0].mxu0
    %v1783 = vadd.f32 0.0, %v1782
    %v1784 = vpop.f32.mrb[0].mxu0
    %v1785 = vpop.f32.mrb[0].mxu0
    %v1786 = vadd.f32 0.0, %v1785
    %v1787 = vpop.f32.mrb[0].mxu0
    %1788 = vdwg.mxu0
    %1791 = vrot.lane.b32.xlu0 %v1519, 32
    %v1792 = vpop.permute.xlu0 %1791
    %1793 = vrot.lane.b32.xlu0 %v1522, 32
    %v1794 = vpop.permute.xlu0 %1793
    %1799 = vrot.lane.b32.xlu0 %v1563, 64
    %v1800 = vpop.permute.xlu0 %1799
    %1801 = vrot.lane.b32.xlu0 %v1566, 64
    %v1802 = vpop.permute.xlu0 %1801
    %1807 = vrot.lane.b32.xlu0 %v1607, 96
    %v1808 = vpop.permute.xlu0 %1807
    %1809 = vrot.lane.b32.xlu0 %v1610, 96
    %v1810 = vpop.permute.xlu0 %1809
    %v1813 = vsel %vm795, %v1475, %v1792
    %v1814 = vsel %vm795, %v1478, %v1794
    %vm1815 = vcmask 523264
    %v1816 = vsel %vm1815, %v1813, %v1800
    %v1817 = vsel %vm1815, %v1814, %v1802
    %vm1818 = vcmask 785408
    %v1819 = vsel %vm1818, %v1816, %v1808
    %v1820 = vsel %vm1818, %v1817, %v1810
    %1823 = vrot.lane.b32.xlu0 %v1695, 32
    %v1824 = vpop.permute.xlu0 %1823
    %1825 = vrot.lane.b32.xlu0 %v1698, 32
    %v1826 = vpop.permute.xlu0 %1825
    %1831 = vrot.lane.b32.xlu0 %v1739, 64
    %v1832 = vpop.permute.xlu0 %1831
    %1833 = vrot.lane.b32.xlu0 %v1742, 64
    %v1834 = vpop.permute.xlu0 %1833
    %1839 = vrot.lane.b32.xlu0 %v1783, 96
    %v1840 = vpop.permute.xlu0 %1839
    %1841 = vrot.lane.b32.xlu0 %v1786, 96
    %v1842 = vpop.permute.xlu0 %1841
    %v1845 = vsel %vm795, %v1651, %v1824
    %v1846 = vsel %vm795, %v1654, %v1826
    %v1847 = vsel %vm1815, %v1845, %v1832
    %v1848 = vsel %vm1815, %v1846, %v1834
    %v1849 = vsel %vm1818, %v1847, %v1840
    %v1850 = vsel %vm1818, %v1848, %v1842
    %v1851 = vpack.c.bf16 %v1820, %v1819
    %v1852 = vpack.c.bf16 %v1850, %v1849
    %v1853 = vld [vmem:[#allocation13] sm:$0xf]
    %v1854 = vld [vmem:[#allocation13 + $0x4] sm:$0xf]
    %v1855 = vld [vmem:[#allocation13 + $0x8] sm:$0xf]
    %v1856 = vld [vmem:[#allocation13 + $0xc] sm:$0xf]
    %v1857 = vld [vmem:[#allocation13 + $0x10] sm:$0xf]
    %v1858 = vld [vmem:[#allocation13 + $0x14] sm:$0xf]
    %v1859 = vld [vmem:[#allocation13 + $0x18] sm:$0xf]
    %v1860 = vld [vmem:[#allocation13 + $0x1c] sm:$0xf]
    %v1861 = vld [vmem:[#allocation13 + $0x20] sm:$0xf]
    %v1862 = vld [vmem:[#allocation13 + $0x24] sm:$0xf]
    %v1863 = vld [vmem:[#allocation13 + $0x28] sm:$0xf]
    %v1864 = vld [vmem:[#allocation13 + $0x2c] sm:$0xf]
    %v1865 = vld [vmem:[#allocation13 + $0x30] sm:$0xf]
    %v1866 = vld [vmem:[#allocation13 + $0x34] sm:$0xf]
    %v1867 = vld [vmem:[#allocation13 + $0x38] sm:$0xf]
    %v1868 = vld [vmem:[#allocation13 + $0x3c] sm:$0xf]
    %v1869 = vld [vmem:[#allocation14] sm:$0x1]
    %v1871 = vlaneseq
    %v1872 = vshrl.u32 %v1871, 7
    %v1873 = vsub.s32 0, %v1872
    %v1874 = vrot.slane %v1869, %v1873
    %v1892 = vunpack.c.l.b16 %v1853
    %v1893 = vunpack.c.l.b16 %v1854
    %v1894 = vunpack.c.l.b16 %v1855
    %v1895 = vunpack.c.l.b16 %v1856
    %v1896 = vunpack.c.l.b16 %v1857
    %v1897 = vunpack.c.l.b16 %v1858
    %v1898 = vunpack.c.l.b16 %v1859
    %v1899 = vunpack.c.l.b16 %v1860
    %v1900 = vunpack.c.l.b16 %v1861
    %v1901 = vunpack.c.l.b16 %v1862
    %v1902 = vunpack.c.l.b16 %v1863
    %v1903 = vunpack.c.l.b16 %v1864
    %v1904 = vunpack.c.l.b16 %v1865
    %v1905 = vunpack.c.l.b16 %v1866
    %v1906 = vunpack.c.l.b16 %v1867
    %v1907 = vunpack.c.l.b16 %v1868
    %v1908 = vpack.c.b16 %v1893, %v1892
    %v1909 = vpack.c.b16 %v1895, %v1894
    %v1910 = vpack.c.b16 %v1897, %v1896
    %v1911 = vpack.c.b16 %v1899, %v1898
    %v1912 = vpack.c.b16 %v1901, %v1900
    %v1913 = vpack.c.b16 %v1903, %v1902
    %v1914 = vpack.c.b16 %v1905, %v1904
    %v1915 = vpack.c.b16 %v1907, %v1906
    %1924 = vmatprep.subr.bf16.mxu0 0
    %1925 = vmatpush1.bf16.msra.mxu0 %v1908
    %1926 = vmatprep.subr.bf16.mxu0 0
    %1927 = vmatpush1.bf16.msra.mxu0 %v1909
    %1928 = vmatprep.subr.bf16.mxu0 0
    %1929 = vmatpush1.bf16.msra.mxu0 %v1910
    %1930 = vmatprep.subr.bf16.mxu0 0
    %1931 = vmatpush1.bf16.msra.mxu0 %v1911
    %1932 = vmatprep.subr.bf16.mxu0 0
    %1933 = vmatpush1.bf16.msra.mxu0 %v1912
    %1934 = vmatprep.subr.bf16.mxu0 0
    %1935 = vmatpush1.bf16.msra.mxu0 %v1913
    %1936 = vmatprep.subr.bf16.mxu0 0
    %1937 = vmatpush1.bf16.msra.mxu0 %v1914
    %1938 = vmatprep.subr.bf16.mxu0 0
    %1939 = vmatpush1.bf16.msra.mxu0 %v1915
    %1940 = vmatprep.subr.bf16.mxu0 0
    %1941 = vmatpush1.bf16.msra.mxu0 0
    %1942 = vmatprep.subr.bf16.mxu0 0
    %1943 = vmatpush1.bf16.msra.mxu0 0
    %1944 = vmatprep.subr.bf16.mxu0 0
    %1945 = vmatpush1.bf16.msra.mxu0 0
    %1946 = vmatprep.subr.bf16.mxu0 0
    %1947 = vmatpush1.bf16.msra.mxu0 0
    %1948 = vmatprep.subr.bf16.mxu0 0
    %1949 = vmatpush1.bf16.msra.mxu0 0
    %1950 = vmatprep.subr.bf16.mxu0 0
    %1951 = vmatpush1.bf16.msra.mxu0 0
    %1952 = vmatprep.subr.bf16.mxu0 0
    %1953 = vmatpush1.bf16.msra.mxu0 0
    %1954 = vmatprep.subr.bf16.mxu0 0
    %1955 = vmatpush1.bf16.msra.mxu0 0
    %1956 = vmatprep.mubr.bf16.mxu0 0
    %1957 = vmatmul.mubr.bf16.gmra.mrb[0].mxu0 %v1851
    %v1958 = vpop.f32.mrb[0].mxu0
    %v1959 = vadd.f32 %v1874, %v1958
    %v1960 = vpop.f32.mrb[0].mxu0
    %v1961 = vpop.f32.mrb[0].mxu0
    %v1962 = vadd.f32 %v1874, %v1961
    %v1963 = vpop.f32.mrb[0].mxu0
    %1964 = vmatprep.mubr.bf16.mxu0 0
    %1965 = vmatmul.mubr.bf16.gmra.mrb[0].mxu0 %v1852
    %v1966 = vpop.f32.mrb[0].mxu0
    %v1967 = vadd.f32 %v1874, %v1966
    %v1968 = vpop.f32.mrb[0].mxu0
    %v1969 = vpop.f32.mrb[0].mxu0
    %v1970 = vadd.f32 %v1874, %v1969
    %v1971 = vpop.f32.mrb[0].mxu0
    %1972 = vdwg.mxu0
    %v1973 = vadd.f32 %v1959, %v358
    %v1974 = vadd.f32 %v1962, %v359
    %v1975 = vadd.f32 %v1967, %v360
    %v1976 = vadd.f32 %v1970, %v361
    %v1977 = vld [vmem:[#allocation16] sm:$0x1]
    %v1978 = vld [vmem:[#allocation17] sm:$0x1]
    %1979 = vadd.xlane.f32.xlu0 %v1973
    %v1980 = vpop.xlane.xlu0 %1979
    %1981 = vadd.xlane.f32.xlu0 %v1974
    %v1982 = vpop.xlane.xlu0 %1981
    %1983 = vadd.xlane.f32.xlu0 %v1975
    %v1984 = vpop.xlane.xlu0 %1983
    %1985 = vadd.xlane.f32.xlu0 %v1976
    %v1986 = vpop.xlane.xlu0 %1985
    %v1987 = vmul.f32 %v1980, %v305
    %v1988 = vmul.f32 %v1982, %v305
    %v1989 = vmul.f32 %v1984, %v305
    %v1990 = vmul.f32 %v1986, %v305
    %v1991 = vsub.f32 %v1973, %v1987
    %v1992 = vsub.f32 %v1974, %v1988
    %v1993 = vsub.f32 %v1975, %v1989
    %v1994 = vsub.f32 %v1976, %v1990
    %v1995 = vmul.f32 %v1991, %v1991
    %v1996 = vmul.f32 %v1992, %v1992
    %v1997 = vmul.f32 %v1993, %v1993
    %v1998 = vmul.f32 %v1994, %v1994
    %1999 = vadd.xlane.f32.xlu0 %v1995
    %v2000 = vpop.xlane.xlu0 %1999
    %2001 = vadd.xlane.f32.xlu0 %v1996
    %v2002 = vpop.xlane.xlu0 %2001
    %2003 = vadd.xlane.f32.xlu0 %v1997
    %v2004 = vpop.xlane.xlu0 %2003
    %2005 = vadd.xlane.f32.xlu0 %v1998
    %v2006 = vpop.xlane.xlu0 %2005
    %v2007 = vmul.f32 %v2000, %v305
    %v2008 = vmul.f32 %v2002, %v305
    %v2009 = vmul.f32 %v2004, %v305
    %v2010 = vmul.f32 %v2006, %v305
    %v2011 = vadd.f32 %v2007, 1e-12
    %v2012 = vadd.f32 %v2008, 1e-12
    %v2013 = vadd.f32 %v2009, 1e-12
    %v2014 = vadd.f32 %v2010, 1e-12
    %v2015 = vrsqrt.pop %v2011
    %v2016 = vrsqrt.pop %v2012
    %v2017 = vrsqrt.pop %v2013
    %v2018 = vrsqrt.pop %v2014
    %v2019 = vmul.f32 %v1991, %v2015
    %v2020 = vmul.f32 %v1992, %v2016
    %v2021 = vmul.f32 %v1993, %v2017
    %v2022 = vmul.f32 %v1994, %v2018
    %v2024 = vlaneseq
    %v2025 = vshrl.u32 %v2024, 7
    %v2026 = vsub.s32 0, %v2025
    %v2027 = vrot.slane %v1977, %v2026
    %v2029 = vmul.f32 %v2019, %v2027
    %v2030 = vmul.f32 %v2020, %v2027
    %v2031 = vmul.f32 %v2021, %v2027
    %v2032 = vmul.f32 %v2022, %v2027
    %v2034 = vlaneseq
    %v2035 = vshrl.u32 %v2034, 7
    %v2036 = vsub.s32 0, %v2035
    %v2037 = vrot.slane %v1978, %v2036
    %v2039 = vadd.f32 %v2029, %v2037
    %v2040 = vadd.f32 %v2030, %v2037
    %v2041 = vadd.f32 %v2031, %v2037
    %v2042 = vadd.f32 %v2032, %v2037
    %v2043 = vpack.c.bf16 %v2040, %v2039
    %v2044 = vpack.c.bf16 %v2042, %v2041
    %v2045 = vld [vmem:[#allocation19] sm:$0xff]
    %v2046 = vld [vmem:[#allocation19 + $0x8] sm:$0xff]
    %v2047 = vld [vmem:[#allocation19 + $0x10] sm:$0xff]
    %v2048 = vld [vmem:[#allocation19 + $0x18] sm:$0xff]
    %v2049 = vld [vmem:[#allocation19 + $0x20] sm:$0xff]
    %v2050 = vld [vmem:[#allocation19 + $0x28] sm:$0xff]
    %v2051 = vld [vmem:[#allocation19 + $0x30] sm:$0xff]
    %v2052 = vld [vmem:[#allocation19 + $0x38] sm:$0xff]
    %v2053 = vld [vmem:[#allocation19 + $0x40] sm:$0xff]
    %v2054 = vld [vmem:[#allocation19 + $0x48] sm:$0xff]
    %v2055 = vld [vmem:[#allocation19 + $0x50] sm:$0xff]
    %v2056 = vld [vmem:[#allocation19 + $0x58] sm:$0xff]
    %v2057 = vld [vmem:[#allocation19 + $0x60] sm:$0xff]
    %v2058 = vld [vmem:[#allocation19 + $0x68] sm:$0xff]
    %v2059 = vld [vmem:[#allocation19 + $0x70] sm:$0xff]
    %v2060 = vld [vmem:[#allocation19 + $0x78] sm:$0xff]
    %v2061 = vld [vmem:[%s11] sm:$0x3]
    %v2063 = vlaneseq
    %v2064 = vshrl.u32 %v2063, 7
    %v2065 = vsub.s32 0, %v2064
    %v2066 = vrot.slane %v2061, %v2065
    %v2067 = vlaneseq
    %v2068 = vshrl.u32 %v2067, 7
    %v2069 = vsub.s32 1, %v2068
    %v2070 = vrot.slane %v2061, %v2069
    %v2089 = vunpack.c.l.b16 %v2045
    %v2090 = vunpack.c.h.b16 %v2045
    %v2091 = vunpack.c.l.b16 %v2046
    %v2092 = vunpack.c.h.b16 %v2046
    %v2093 = vunpack.c.l.b16 %v2047
    %v2094 = vunpack.c.h.b16 %v2047
    %v2095 = vunpack.c.l.b16 %v2048
    %v2096 = vunpack.c.h.b16 %v2048
    %v2097 = vunpack.c.l.b16 %v2049
    %v2098 = vunpack.c.h.b16 %v2049
    %v2099 = vunpack.c.l.b16 %v2050
    %v2100 = vunpack.c.h.b16 %v2050
    %v2101 = vunpack.c.l.b16 %v2051
    %v2102 = vunpack.c.h.b16 %v2051
    %v2103 = vunpack.c.l.b16 %v2052
    %v2104 = vunpack.c.h.b16 %v2052
    %v2105 = vunpack.c.l.b16 %v2053
    %v2106 = vunpack.c.h.b16 %v2053
    %v2107 = vunpack.c.l.b16 %v2054
    %v2108 = vunpack.c.h.b16 %v2054
    %v2109 = vunpack.c.l.b16 %v2055
    %v2110 = vunpack.c.h.b16 %v2055
    %v2111 = vunpack.c.l.b16 %v2056
    %v2112 = vunpack.c.h.b16 %v2056
    %v2113 = vunpack.c.l.b16 %v2057
    %v2114 = vunpack.c.h.b16 %v2057
    %v2115 = vunpack.c.l.b16 %v2058
    %v2116 = vunpack.c.h.b16 %v2058
    %v2117 = vunpack.c.l.b16 %v2059
    %v2118 = vunpack.c.h.b16 %v2059
    %v2119 = vunpack.c.l.b16 %v2060
    %v2120 = vunpack.c.h.b16 %v2060
    %v2121 = vpack.c.b16 %v2091, %v2089
    %v2122 = vpack.c.b16 %v2092, %v2090
    %v2123 = vpack.c.b16 %v2095, %v2093
    %v2124 = vpack.c.b16 %v2096, %v2094
    %v2125 = vpack.c.b16 %v2099, %v2097
    %v2126 = vpack.c.b16 %v2100, %v2098
    %v2127 = vpack.c.b16 %v2103, %v2101
    %v2128 = vpack.c.b16 %v2104, %v2102
    %v2129 = vpack.c.b16 %v2107, %v2105
    %v2130 = vpack.c.b16 %v2108, %v2106
    %v2131 = vpack.c.b16 %v2111, %v2109
    %v2132 = vpack.c.b16 %v2112, %v2110
    %v2133 = vpack.c.b16 %v2115, %v2113
    %v2134 = vpack.c.b16 %v2116, %v2114
    %v2135 = vpack.c.b16 %v2119, %v2117
    %v2136 = vpack.c.b16 %v2120, %v2118
    %2153 = vmatprep.subr.bf16.mxu0 %v2122
    %2154 = vmatpush1.bf16.msra.mxu0 %v2121
    %2155 = vmatprep.subr.bf16.mxu0 %v2124
    %2156 = vmatpush1.bf16.msra.mxu0 %v2123
    %2157 = vmatprep.subr.bf16.mxu0 %v2126
    %2158 = vmatpush1.bf16.msra.mxu0 %v2125
    %2159 = vmatprep.subr.bf16.mxu0 %v2128
    %2160 = vmatpush1.bf16.msra.mxu0 %v2127
    %2161 = vmatprep.subr.bf16.mxu0 %v2130
    %2162 = vmatpush1.bf16.msra.mxu0 %v2129
    %2163 = vmatprep.subr.bf16.mxu0 %v2132
    %2164 = vmatpush1.bf16.msra.mxu0 %v2131
    %2165 = vmatprep.subr.bf16.mxu0 %v2134
    %2166 = vmatpush1.bf16.msra.mxu0 %v2133
    %2167 = vmatprep.subr.bf16.mxu0 %v2136
    %2168 = vmatpush1.bf16.msra.mxu0 %v2135
    %2169 = vmatprep.subr.bf16.mxu0 0
    %2170 = vmatpush1.bf16.msra.mxu0 0
    %2171 = vmatprep.subr.bf16.mxu0 0
    %2172 = vmatpush1.bf16.msra.mxu0 0
    %2173 = vmatprep.subr.bf16.mxu0 0
    %2174 = vmatpush1.bf16.msra.mxu0 0
    %2175 = vmatprep.subr.bf16.mxu0 0
    %2176 = vmatpush1.bf16.msra.mxu0 0
    %2177 = vmatprep.subr.bf16.mxu0 0
    %2178 = vmatpush1.bf16.msra.mxu0 0
    %2179 = vmatprep.subr.bf16.mxu0 0
    %2180 = vmatpush1.bf16.msra.mxu0 0
    %2181 = vmatprep.subr.bf16.mxu0 0
    %2182 = vmatpush1.bf16.msra.mxu0 0
    %2183 = vmatprep.subr.bf16.mxu0 0
    %2184 = vmatpush1.bf16.msra.mxu0 0
    %2185 = vmatprep.mubr.bf16.mxu0 0
    %2186 = vmatmul.mubr.bf16.gmra.mrb[0].mxu0 %v2043
    %v2187 = vpop.f32.mrb[0].mxu0
    %v2188 = vadd.f32 %v2066, %v2187
    %v2189 = vpop.f32.mrb[0].mxu0
    %v2190 = vadd.f32 %v2070, %v2189
    %v2191 = vpop.f32.mrb[0].mxu0
    %v2192 = vadd.f32 %v2066, %v2191
    %v2193 = vpop.f32.mrb[0].mxu0
    %v2194 = vadd.f32 %v2070, %v2193
    %2195 = vmatprep.mubr.bf16.mxu0 0
    %2196 = vmatmul.mubr.bf16.gmra.mrb[0].mxu0 %v2044
    %v2197 = vpop.f32.mrb[0].mxu0
    %v2198 = vadd.f32 %v2066, %v2197
    %v2199 = vpop.f32.mrb[0].mxu0
    %v2200 = vadd.f32 %v2070, %v2199
    %v2201 = vpop.f32.mrb[0].mxu0
    %v2202 = vadd.f32 %v2066, %v2201
    %v2203 = vpop.f32.mrb[0].mxu0
    %v2204 = vadd.f32 %v2070, %v2203
    %2205 = vdwg.mxu0
    %v2206 = vmul.f32 %v2188, 0.5
    %v2207 = vmul.f32 %v2190, 0.5
    %v2208 = vmul.f32 %v2192, 0.5
    %v2209 = vmul.f32 %v2194, 0.5
    %v2210 = vmul.f32 %v2198, 0.5
    %v2211 = vmul.f32 %v2200, 0.5
    %v2212 = vmul.f32 %v2202, 0.5
    %v2213 = vmul.f32 %v2204, 0.5
    %v2214 = vmul.f32 %v2188, 0.044715
    %v2215 = vmul.f32 %v2190, 0.044715
    %v2216 = vmul.f32 %v2192, 0.044715
    %v2217 = vmul.f32 %v2194, 0.044715
    %v2218 = vmul.f32 %v2198, 0.044715
    %v2219 = vmul.f32 %v2200, 0.044715
    %v2220 = vmul.f32 %v2202, 0.044715
    %v2221 = vmul.f32 %v2204, 0.044715
    %v2222 = vmul.f32 %v2214, %v2188
    %v2223 = vmul.f32 %v2215, %v2190
    %v2224 = vmul.f32 %v2216, %v2192
    %v2225 = vmul.f32 %v2217, %v2194
    %v2226 = vmul.f32 %v2218, %v2198
    %v2227 = vmul.f32 %v2219, %v2200
    %v2228 = vmul.f32 %v2220, %v2202
    %v2229 = vmul.f32 %v2221, %v2204
    %v2230 = vmul.f32 %v2222, %v2188
    %v2231 = vmul.f32 %v2223, %v2190
    %v2232 = vmul.f32 %v2224, %v2192
    %v2233 = vmul.f32 %v2225, %v2194
    %v2234 = vmul.f32 %v2226, %v2198
    %v2235 = vmul.f32 %v2227, %v2200
    %v2236 = vmul.f32 %v2228, %v2202
    %v2237 = vmul.f32 %v2229, %v2204
    %v2238 = vadd.f32 %v2188, %v2230
    %v2239 = vadd.f32 %v2190, %v2231
    %v2240 = vadd.f32 %v2192, %v2232
    %v2241 = vadd.f32 %v2194, %v2233
    %v2242 = vadd.f32 %v2198, %v2234
    %v2243 = vadd.f32 %v2200, %v2235
    %v2244 = vadd.f32 %v2202, %v2236
    %v2245 = vadd.f32 %v2204, %v2237
    %v2246 = vmul.f32 %v2238, 0.7978846
    %v2247 = vmul.f32 %v2239, 0.7978846
    %v2248 = vmul.f32 %v2240, 0.7978846
    %v2249 = vmul.f32 %v2241, 0.7978846
    %v2250 = vmul.f32 %v2242, 0.7978846
    %v2251 = vmul.f32 %v2243, 0.7978846
    %v2252 = vmul.f32 %v2244, 0.7978846
    %v2253 = vmul.f32 %v2245, 0.7978846
    %v2254 = vtanh.pop %v2246
    %v2255 = vtanh.pop %v2247
    %v2256 = vtanh.pop %v2248
    %v2257 = vtanh.pop %v2249
    %v2258 = vtanh.pop %v2250
    %v2259 = vtanh.pop %v2251
    %v2260 = vtanh.pop %v2252
    %v2261 = vtanh.pop %v2253
    %v2262 = vadd.f32 %v2254, 1.0
    %v2263 = vadd.f32 %v2255, 1.0
    %v2264 = vadd.f32 %v2256, 1.0
    %v2265 = vadd.f32 %v2257, 1.0
    %v2266 = vadd.f32 %v2258, 1.0
    %v2267 = vadd.f32 %v2259, 1.0
    %v2268 = vadd.f32 %v2260, 1.0
    %v2269 = vadd.f32 %v2261, 1.0
    %v2270 = vmul.f32 %v2206, %v2262
    %v2271 = vmul.f32 %v2207, %v2263
    %v2272 = vmul.f32 %v2208, %v2264
    %v2273 = vmul.f32 %v2209, %v2265
    %v2274 = vmul.f32 %v2210, %v2266
    %v2275 = vmul.f32 %v2211, %v2267
    %v2276 = vmul.f32 %v2212, %v2268
    %v2277 = vmul.f32 %v2213, %v2269
    %v2278 = vpack.c.bf16 %v2272, %v2270
    %v2279 = vpack.c.bf16 %v2273, %v2271
    %v2280 = vpack.c.bf16 %v2276, %v2274
    %v2281 = vpack.c.bf16 %v2277, %v2275
    %v2282 = vld [vmem:[#allocation20] sm:$0xf]
    %v2283 = vld [vmem:[#allocation20 + $0x4] sm:$0xf]
    %v2284 = vld [vmem:[#allocation20 + $0x8] sm:$0xf]
    %v2285 = vld [vmem:[#allocation20 + $0xc] sm:$0xf]
    %v2286 = vld [vmem:[#allocation20 + $0x10] sm:$0xf]
    %v2287 = vld [vmem:[#allocation20 + $0x14] sm:$0xf]
    %v2288 = vld [vmem:[#allocation20 + $0x18] sm:$0xf]
    %v2289 = vld [vmem:[#allocation20 + $0x1c] sm:$0xf]
    %v2290 = vld [vmem:[#allocation20 + $0x20] sm:$0xf]
    %v2291 = vld [vmem:[#allocation20 + $0x24] sm:$0xf]
    %v2292 = vld [vmem:[#allocation20 + $0x28] sm:$0xf]
    %v2293 = vld [vmem:[#allocation20 + $0x2c] sm:$0xf]
    %v2294 = vld [vmem:[#allocation20 + $0x30] sm:$0xf]
    %v2295 = vld [vmem:[#allocation20 + $0x34] sm:$0xf]
    %v2296 = vld [vmem:[#allocation20 + $0x38] sm:$0xf]
    %v2297 = vld [vmem:[#allocation20 + $0x3c] sm:$0xf]
    %v2298 = vld [vmem:[#allocation20 + $0x40] sm:$0xf]
    %v2299 = vld [vmem:[#allocation20 + $0x44] sm:$0xf]
    %v2300 = vld [vmem:[#allocation20 + $0x48] sm:$0xf]
    %v2301 = vld [vmem:[#allocation20 + $0x4c] sm:$0xf]
    %v2302 = vld [vmem:[#allocation20 + $0x50] sm:$0xf]
    %v2303 = vld [vmem:[#allocation20 + $0x54] sm:$0xf]
    %v2304 = vld [vmem:[#allocation20 + $0x58] sm:$0xf]
    %v2305 = vld [vmem:[#allocation20 + $0x5c] sm:$0xf]
    %v2306 = vld [vmem:[#allocation20 + $0x60] sm:$0xf]
    %v2307 = vld [vmem:[#allocation20 + $0x64] sm:$0xf]
    %v2308 = vld [vmem:[#allocation20 + $0x68] sm:$0xf]
    %v2309 = vld [vmem:[#allocation20 + $0x6c] sm:$0xf]
    %v2310 = vld [vmem:[#allocation20 + $0x70] sm:$0xf]
    %v2311 = vld [vmem:[#allocation20 + $0x74] sm:$0xf]
    %v2312 = vld [vmem:[#allocation20 + $0x78] sm:$0xf]
    %v2313 = vld [vmem:[#allocation20 + $0x7c] sm:$0xf]
    %v2314 = vld [vmem:[#allocation22] sm:$0x1]
    %v2316 = vlaneseq
    %v2317 = vshrl.u32 %v2316, 7
    %v2318 = vsub.s32 0, %v2317
    %v2319 = vrot.slane %v2314, %v2318
    %v2353 = vunpack.c.l.b16 %v2282
    %v2354 = vunpack.c.l.b16 %v2283
    %v2355 = vunpack.c.l.b16 %v2284
    %v2356 = vunpack.c.l.b16 %v2285
    %v2357 = vunpack.c.l.b16 %v2286
    %v2358 = vunpack.c.l.b16 %v2287
    %v2359 = vunpack.c.l.b16 %v2288
    %v2360 = vunpack.c.l.b16 %v2289
    %v2361 = vunpack.c.l.b16 %v2290
    %v2362 = vunpack.c.l.b16 %v2291
    %v2363 = vunpack.c.l.b16 %v2292
    %v2364 = vunpack.c.l.b16 %v2293
    %v2365 = vunpack.c.l.b16 %v2294
    %v2366 = vunpack.c.l.b16 %v2295
    %v2367 = vunpack.c.l.b16 %v2296
    %v2368 = vunpack.c.l.b16 %v2297
    %v2369 = vunpack.c.l.b16 %v2298
    %v2370 = vunpack.c.l.b16 %v2299
    %v2371 = vunpack.c.l.b16 %v2300
    %v2372 = vunpack.c.l.b16 %v2301
    %v2373 = vunpack.c.l.b16 %v2302
    %v2374 = vunpack.c.l.b16 %v2303
    %v2375 = vunpack.c.l.b16 %v2304
    %v2376 = vunpack.c.l.b16 %v2305
    %v2377 = vunpack.c.l.b16 %v2306
    %v2378 = vunpack.c.l.b16 %v2307
    %v2379 = vunpack.c.l.b16 %v2308
    %v2380 = vunpack.c.l.b16 %v2309
    %v2381 = vunpack.c.l.b16 %v2310
    %v2382 = vunpack.c.l.b16 %v2311
    %v2383 = vunpack.c.l.b16 %v2312
    %v2384 = vunpack.c.l.b16 %v2313
    %v2385 = vpack.c.b16 %v2354, %v2353
    %v2386 = vpack.c.b16 %v2356, %v2355
    %v2387 = vpack.c.b16 %v2358, %v2357
    %v2388 = vpack.c.b16 %v2360, %v2359
    %v2389 = vpack.c.b16 %v2362, %v2361
    %v2390 = vpack.c.b16 %v2364, %v2363
    %v2391 = vpack.c.b16 %v2366, %v2365
    %v2392 = vpack.c.b16 %v2368, %v2367
    %v2393 = vpack.c.b16 %v2370, %v2369
    %v2394 = vpack.c.b16 %v2372, %v2371
    %v2395 = vpack.c.b16 %v2374, %v2373
    %v2396 = vpack.c.b16 %v2376, %v2375
    %v2397 = vpack.c.b16 %v2378, %v2377
    %v2398 = vpack.c.b16 %v2380, %v2379
    %v2399 = vpack.c.b16 %v2382, %v2381
    %v2400 = vpack.c.b16 %v2384, %v2383
    %2417 = vmatprep.subr.bf16.mxu0 0
    %2418 = vmatpush1.bf16.msra.mxu0 %v2385
    %2419 = vmatprep.subr.bf16.mxu0 0
    %2420 = vmatpush1.bf16.msra.mxu0 %v2386
    %2421 = vmatprep.subr.bf16.mxu0 0
    %2422 = vmatpush1.bf16.msra.mxu0 %v2387
    %2423 = vmatprep.subr.bf16.mxu0 0
    %2424 = vmatpush1.bf16.msra.mxu0 %v2388
    %2425 = vmatprep.subr.bf16.mxu0 0
    %2426 = vmatpush1.bf16.msra.mxu0 %v2389
    %2427 = vmatprep.subr.bf16.mxu0 0
    %2428 = vmatpush1.bf16.msra.mxu0 %v2390
    %2429 = vmatprep.subr.bf16.mxu0 0
    %2430 = vmatpush1.bf16.msra.mxu0 %v2391
    %2431 = vmatprep.subr.bf16.mxu0 0
    %2432 = vmatpush1.bf16.msra.mxu0 %v2392
    %2433 = vmatprep.subr.bf16.mxu0 0
    %2434 = vmatpush1.bf16.msra.mxu0 %v2393
    %2435 = vmatprep.subr.bf16.mxu0 0
    %2436 = vmatpush1.bf16.msra.mxu0 %v2394
    %2437 = vmatprep.subr.bf16.mxu0 0
    %2438 = vmatpush1.bf16.msra.mxu0 %v2395
    %2439 = vmatprep.subr.bf16.mxu0 0
    %2440 = vmatpush1.bf16.msra.mxu0 %v2396
    %2441 = vmatprep.subr.bf16.mxu0 0
    %2442 = vmatpush1.bf16.msra.mxu0 %v2397
    %2443 = vmatprep.subr.bf16.mxu0 0
    %2444 = vmatpush1.bf16.msra.mxu0 %v2398
    %2445 = vmatprep.subr.bf16.mxu0 0
    %2446 = vmatpush1.bf16.msra.mxu0 %v2399
    %2447 = vmatprep.subr.bf16.mxu0 0
    %2448 = vmatpush1.bf16.msra.mxu0 %v2400
    %2449 = vmatprep.mubr.bf16.mxu0 %v2279
    %2450 = vmatmul.mubr.bf16.gmra.mrb[0].mxu0 %v2278
    %v2451 = vpop.f32.mrb[0].mxu0
    %v2452 = vadd.f32 %v2319, %v2451
    %v2453 = vpop.f32.mrb[0].mxu0
    %v2454 = vpop.f32.mrb[0].mxu0
    %v2455 = vadd.f32 %v2319, %v2454
    %v2456 = vpop.f32.mrb[0].mxu0
    %2457 = vmatprep.mubr.bf16.mxu0 %v2281
    %2458 = vmatmul.mubr.bf16.gmra.mrb[0].mxu0 %v2280
    %v2459 = vpop.f32.mrb[0].mxu0
    %v2460 = vadd.f32 %v2319, %v2459
    %v2461 = vpop.f32.mrb[0].mxu0
    %v2462 = vpop.f32.mrb[0].mxu0
    %v2463 = vadd.f32 %v2319, %v2462
    %v2464 = vpop.f32.mrb[0].mxu0
    %2465 = vdwg.mxu0
    %v2466 = vadd.f32 %v2452, %v2039
    %v2467 = vadd.f32 %v2455, %v2040
    %v2468 = vadd.f32 %v2460, %v2041
    %v2469 = vadd.f32 %v2463, %v2042
    %v2470 = vld [vmem:[#allocation23] sm:$0x1]
    %v2471 = vld [vmem:[#allocation25] sm:$0x1]
    %2472 = vadd.xlane.f32.xlu0 %v2466
    %v2473 = vpop.xlane.xlu0 %2472
    %2474 = vadd.xlane.f32.xlu0 %v2467
    %v2475 = vpop.xlane.xlu0 %2474
    %2476 = vadd.xlane.f32.xlu0 %v2468
    %v2477 = vpop.xlane.xlu0 %2476
    %2478 = vadd.xlane.f32.xlu0 %v2469
    %v2479 = vpop.xlane.xlu0 %2478
    %v2480 = vmul.f32 %v2473, %v305
    %v2481 = vmul.f32 %v2475, %v305
    %v2482 = vmul.f32 %v2477, %v305
    %v2483 = vmul.f32 %v2479, %v305
    %v2484 = vsub.f32 %v2466, %v2480
    %v2485 = vsub.f32 %v2467, %v2481
    %v2486 = vsub.f32 %v2468, %v2482
    %v2487 = vsub.f32 %v2469, %v2483
    %v2488 = vmul.f32 %v2484, %v2484
    %v2489 = vmul.f32 %v2485, %v2485
    %v2490 = vmul.f32 %v2486, %v2486
    %v2491 = vmul.f32 %v2487, %v2487
    %2492 = vadd.xlane.f32.xlu0 %v2488
    %v2493 = vpop.xlane.xlu0 %2492
    %2494 = vadd.xlane.f32.xlu0 %v2489
    %v2495 = vpop.xlane.xlu0 %2494
    %2496 = vadd.xlane.f32.xlu0 %v2490
    %v2497 = vpop.xlane.xlu0 %2496
    %2498 = vadd.xlane.f32.xlu0 %v2491
    %v2499 = vpop.xlane.xlu0 %2498
    %v2500 = vmul.f32 %v2493, %v305
    %v2501 = vmul.f32 %v2495, %v305
    %v2502 = vmul.f32 %v2497, %v305
    %v2503 = vmul.f32 %v2499, %v305
    %v2504 = vadd.f32 %v2500, 1e-12
    %v2505 = vadd.f32 %v2501, 1e-12
    %v2506 = vadd.f32 %v2502, 1e-12
    %v2507 = vadd.f32 %v2503, 1e-12
    %v2508 = vrsqrt.pop %v2504
    %v2509 = vrsqrt.pop %v2505
    %v2510 = vrsqrt.pop %v2506
    %v2511 = vrsqrt.pop %v2507
    %v2512 = vmul.f32 %v2484, %v2508
    %v2513 = vmul.f32 %v2485, %v2509
    %v2514 = vmul.f32 %v2486, %v2510
    %v2515 = vmul.f32 %v2487, %v2511
    %v2517 = vlaneseq
    %v2518 = vshrl.u32 %v2517, 7
    %v2519 = vsub.s32 0, %v2518
    %v2520 = vrot.slane %v2470, %v2519
    %v2522 = vmul.f32 %v2512, %v2520
    %v2523 = vmul.f32 %v2513, %v2520
    %v2524 = vmul.f32 %v2514, %v2520
    %v2525 = vmul.f32 %v2515, %v2520
    %v2527 = vlaneseq
    %v2528 = vshrl.u32 %v2527, 7
    %v2529 = vsub.s32 0, %v2528
    %v2530 = vrot.slane %v2471, %v2529
    %v2532 = vadd.f32 %v2522, %v2530
    %v2533 = vadd.f32 %v2523, %v2530
    %v2534 = vadd.f32 %v2524, %v2530
    %v2535 = vadd.f32 %v2525, %v2530
    %v2536 = vpack.c.bf16 %v2533, %v2532
    %v2537 = vpack.c.bf16 %v2535, %v2534
    %s2538 = scalar_lea.vmem [#allocation10], 192
    %v2539 = vld [vmem:[%s2538] sm:$0xff]
    %v2540 = vld [vmem:[%s2538 + $0x8] sm:$0xf]
    %v2541 = vld [vmem:[%s2538 + $0xc] sm:$0xff]
    %v2542 = vld [vmem:[%s2538 + $0x14] sm:$0xf]
    %v2543 = vld [vmem:[%s2538 + $0x18] sm:$0xff]
    %v2544 = vld [vmem:[%s2538 + $0x20] sm:$0xf]
    %v2545 = vld [vmem:[%s2538 + $0x24] sm:$0xff]
    %v2546 = vld [vmem:[%s2538 + $0x2c] sm:$0xf]
    %v2547 = vld [vmem:[%s2538 + $0x30] sm:$0xff]
    %v2548 = vld [vmem:[%s2538 + $0x38] sm:$0xf]
    %v2549 = vld [vmem:[%s2538 + $0x3c] sm:$0xff]
    %v2550 = vld [vmem:[%s2538 + $0x44] sm:$0xf]
    %v2551 = vld [vmem:[%s2538 + $0x48] sm:$0xff]
    %v2552 = vld [vmem:[%s2538 + $0x50] sm:$0xf]
    %v2553 = vld [vmem:[%s2538 + $0x54] sm:$0xff]
    %v2554 = vld [vmem:[%s2538 + $0x5c] sm:$0xf]
    %v2555 = vld [vmem:[%s2538 + $0x60] sm:$0xff]
    %v2556 = vld [vmem:[%s2538 + $0x68] sm:$0xf]
    %v2557 = vld [vmem:[%s2538 + $0x6c] sm:$0xff]
    %v2558 = vld [vmem:[%s2538 + $0x74] sm:$0xf]
    %v2559 = vld [vmem:[%s2538 + $0x78] sm:$0xff]
    %v2560 = vld [vmem:[%s2538 + $0x80] sm:$0xf]
    %v2561 = vld [vmem:[%s2538 + $0x84] sm:$0xff]
    %v2562 = vld [vmem:[%s2538 + $0x8c] sm:$0xf]
    %v2563 = vld [vmem:[%s2538 + $0x90] sm:$0xff]
    %v2564 = vld [vmem:[%s2538 + $0x98] sm:$0xf]
    %v2565 = vld [vmem:[%s2538 + $0x9c] sm:$0xff]
    %v2566 = vld [vmem:[%s2538 + $0xa4] sm:$0xf]
    %v2567 = vld [vmem:[%s2538 + $0xa8] sm:$0xff]
    %v2568 = vld [vmem:[%s2538 + $0xb0] sm:$0xf]
    %v2569 = vld [vmem:[%s2538 + $0xb4] sm:$0xff]
    %v2570 = vld [vmem:[%s2538 + $0xbc] sm:$0xf]
    %s2571 = scalar_lea.vmem [#allocation11], 3
    %v2572 = vld [vmem:[%s2571] sm:$0x7]
    %v2574 = vlaneseq
    %v2575 = vshrl.u32 %v2574, 7
    %v2576 = vsub.s32 0, %v2575
    %v2577 = vrot.slane %v2572, %v2576
    %v2578 = vlaneseq
    %v2579 = vshrl.u32 %v2578, 7
    %v2580 = vsub.s32 1, %v2579
    %v2581 = vrot.slane %v2572, %v2580
    %v2582 = vlaneseq
    %v2583 = vshrl.u32 %v2582, 7
    %v2584 = vsub.s32 2, %v2583
    %v2585 = vrot.slane %v2572, %v2584
    %v2621 = vunpack.c.l.b16 %v2539
    %v2622 = vunpack.c.h.b16 %v2539
    %v2623 = vunpack.c.l.b16 %v2540
    %v2624 = vunpack.c.l.b16 %v2541
    %v2625 = vunpack.c.h.b16 %v2541
    %v2626 = vunpack.c.l.b16 %v2542
    %v2627 = vunpack.c.l.b16 %v2543
    %v2628 = vunpack.c.h.b16 %v2543
    %v2629 = vunpack.c.l.b16 %v2544
    %v2630 = vunpack.c.l.b16 %v2545
    %v2631 = vunpack.c.h.b16 %v2545
    %v2632 = vunpack.c.l.b16 %v2546
    %v2633 = vunpack.c.l.b16 %v2547
    %v2634 = vunpack.c.h.b16 %v2547
    %v2635 = vunpack.c.l.b16 %v2548
    %v2636 = vunpack.c.l.b16 %v2549
    %v2637 = vunpack.c.h.b16 %v2549
    %v2638 = vunpack.c.l.b16 %v2550
    %v2639 = vunpack.c.l.b16 %v2551
    %v2640 = vunpack.c.h.b16 %v2551
    %v2641 = vunpack.c.l.b16 %v2552
    %v2642 = vunpack.c.l.b16 %v2553
    %v2643 = vunpack.c.h.b16 %v2553
    %v2644 = vunpack.c.l.b16 %v2554
    %v2645 = vunpack.c.l.b16 %v2555
    %v2646 = vunpack.c.h.b16 %v2555
    %v2647 = vunpack.c.l.b16 %v2556
    %v2648 = vunpack.c.l.b16 %v2557
    %v2649 = vunpack.c.h.b16 %v2557
    %v2650 = vunpack.c.l.b16 %v2558
    %v2651 = vunpack.c.l.b16 %v2559
    %v2652 = vunpack.c.h.b16 %v2559
    %v2653 = vunpack.c.l.b16 %v2560
    %v2654 = vunpack.c.l.b16 %v2561
    %v2655 = vunpack.c.h.b16 %v2561
    %v2656 = vunpack.c.l.b16 %v2562
    %v2657 = vunpack.c.l.b16 %v2563
    %v2658 = vunpack.c.h.b16 %v2563
    %v2659 = vunpack.c.l.b16 %v2564
    %v2660 = vunpack.c.l.b16 %v2565
    %v2661 = vunpack.c.h.b16 %v2565
    %v2662 = vunpack.c.l.b16 %v2566
    %v2663 = vunpack.c.l.b16 %v2567
    %v2664 = vunpack.c.h.b16 %v2567
    %v2665 = vunpack.c.l.b16 %v2568
    %v2666 = vunpack.c.l.b16 %v2569
    %v2667 = vunpack.c.h.b16 %v2569
    %v2668 = vunpack.c.l.b16 %v2570
    %v2669 = vpack.c.b16 %v2624, %v2621
    %v2670 = vpack.c.b16 %v2625, %v2622
    %v2671 = vpack.c.b16 %v2626, %v2623
    %v2672 = vpack.c.b16 %v2630, %v2627
    %v2673 = vpack.c.b16 %v2631, %v2628
    %v2674 = vpack.c.b16 %v2632, %v2629
    %v2675 = vpack.c.b16 %v2636, %v2633
    %v2676 = vpack.c.b16 %v2637, %v2634
    %v2677 = vpack.c.b16 %v2638, %v2635
    %v2678 = vpack.c.b16 %v2642, %v2639
    %v2679 = vpack.c.b16 %v2643, %v2640
    %v2680 = vpack.c.b16 %v2644, %v2641
    %v2681 = vpack.c.b16 %v2648, %v2645
    %v2682 = vpack.c.b16 %v2649, %v2646
    %v2683 = vpack.c.b16 %v2650, %v2647
    %v2684 = vpack.c.b16 %v2654, %v2651
    %v2685 = vpack.c.b16 %v2655, %v2652
    %v2686 = vpack.c.b16 %v2656, %v2653
    %v2687 = vpack.c.b16 %v2660, %v2657
    %v2688 = vpack.c.b16 %v2661, %v2658
    %v2689 = vpack.c.b16 %v2662, %v2659
    %v2690 = vpack.c.b16 %v2666, %v2663
    %v2691 = vpack.c.b16 %v2667, %v2664
    %v2692 = vpack.c.b16 %v2668, %v2665
    %2717 = vmatprep.subr.bf16.mxu0 %v2670
    %2718 = vmatpush1.bf16.msra.mxu0 %v2669
    %2719 = vmatprep.subr.bf16.mxu0 %v2673
    %2720 = vmatpush1.bf16.msra.mxu0 %v2672
    %2721 = vmatprep.subr.bf16.mxu0 %v2676
    %2722 = vmatpush1.bf16.msra.mxu0 %v2675
    %2723 = vmatprep.subr.bf16.mxu0 %v2679
    %2724 = vmatpush1.bf16.msra.mxu0 %v2678
    %2725 = vmatprep.subr.bf16.mxu0 %v2682
    %2726 = vmatpush1.bf16.msra.mxu0 %v2681
    %2727 = vmatprep.subr.bf16.mxu0 %v2685
    %2728 = vmatpush1.bf16.msra.mxu0 %v2684
    %2729 = vmatprep.subr.bf16.mxu0 %v2688
    %2730 = vmatpush1.bf16.msra.mxu0 %v2687
    %2731 = vmatprep.subr.bf16.mxu0 %v2691
    %2732 = vmatpush1.bf16.msra.mxu0 %v2690
    %2733 = vmatprep.subr.bf16.mxu0 0
    %2734 = vmatpush1.bf16.msra.mxu0 0
    %2735 = vmatprep.subr.bf16.mxu0 0
    %2736 = vmatpush1.bf16.msra.mxu0 0
    %2737 = vmatprep.subr.bf16.mxu0 0
    %2738 = vmatpush1.bf16.msra.mxu0 0
    %2739 = vmatprep.subr.bf16.mxu0 0
    %2740 = vmatpush1.bf16.msra.mxu0 0
    %2741 = vmatprep.subr.bf16.mxu0 0
    %2742 = vmatpush1.bf16.msra.mxu0 0
    %2743 = vmatprep.subr.bf16.mxu0 0
    %2744 = vmatpush1.bf16.msra.mxu0 0
    %2745 = vmatprep.subr.bf16.mxu0 0
    %2746 = vmatpush1.bf16.msra.mxu0 0
    %2747 = vmatprep.subr.bf16.mxu0 0
    %2748 = vmatpush1.bf16.msra.mxu0 0
    %2749 = vmatprep.mubr.bf16.mxu0 0
    %2750 = vmatmul.mubr.bf16.gmra.mrb[0].mxu0 %v2536
    %v2751 = vpop.f32.mrb[0].mxu0
    %v2752 = vadd.f32 %v2577, %v2751
    %v2753 = vpop.f32.mrb[0].mxu0
    %v2754 = vadd.f32 %v2581, %v2753
    %v2755 = vpop.f32.mrb[0].mxu0
    %v2756 = vadd.f32 %v2577, %v2755
    %v2757 = vpop.f32.mrb[0].mxu0
    %v2758 = vadd.f32 %v2581, %v2757
    %2759 = vmatprep.mubr.bf16.mxu0 0
    %2760 = vmatmul.mubr.bf16.gmra.mrb[0].mxu0 %v2537
    %v2761 = vpop.f32.mrb[0].mxu0
    %v2762 = vadd.f32 %v2577, %v2761
    %v2763 = vpop.f32.mrb[0].mxu0
    %v2764 = vadd.f32 %v2581, %v2763
    %v2765 = vpop.f32.mrb[0].mxu0
    %v2766 = vadd.f32 %v2577, %v2765
    %v2767 = vpop.f32.mrb[0].mxu0
    %v2768 = vadd.f32 %v2581, %v2767
    %2769 = vdwg.mxu0
    %2770 = vmatprep.subr.bf16.mxu0 0
    %2771 = vmatpush1.bf16.msra.mxu0 %v2671
    %2772 = vmatprep.subr.bf16.mxu0 0
    %2773 = vmatpush1.bf16.msra.mxu0 %v2674
    %2774 = vmatprep.subr.bf16.mxu0 0
    %2775 = vmatpush1.bf16.msra.mxu0 %v2677
    %2776 = vmatprep.subr.bf16.mxu0 0
    %2777 = vmatpush1.bf16.msra.mxu0 %v2680
    %2778 = vmatprep.subr.bf16.mxu0 0
    %2779 = vmatpush1.bf16.msra.mxu0 %v2683
    %2780 = vmatprep.subr.bf16.mxu0 0
    %2781 = vmatpush1.bf16.msra.mxu0 %v2686
    %2782 = vmatprep.subr.bf16.mxu0 0
    %2783 = vmatpush1.bf16.msra.mxu0 %v2689
    %2784 = vmatprep.subr.bf16.mxu0 0
    %2785 = vmatpush1.bf16.msra.mxu0 %v2692
    %2786 = vmatprep.subr.bf16.mxu0 0
    %2787 = vmatpush1.bf16.msra.mxu0 0
    %2788 = vmatprep.subr.bf16.mxu0 0
    %2789 = vmatpush1.bf16.msra.mxu0 0
    %2790 = vmatprep.subr.bf16.mxu0 0
    %2791 = vmatpush1.bf16.msra.mxu0 0
    %2792 = vmatprep.subr.bf16.mxu0 0
    %2793 = vmatpush1.bf16.msra.mxu0 0
    %2794 = vmatprep.subr.bf16.mxu0 0
    %2795 = vmatpush1.bf16.msra.mxu0 0
    %2796 = vmatprep.subr.bf16.mxu0 0
    %2797 = vmatpush1.bf16.msra.mxu0 0
    %2798 = vmatprep.subr.bf16.mxu0 0
    %2799 = vmatpush1.bf16.msra.mxu0 0
    %2800 = vmatprep.subr.bf16.mxu0 0
    %2801 = vmatpush1.bf16.msra.mxu0 0
    %2802 = vmatprep.mubr.bf16.mxu0 0
    %2803 = vmatmul.mubr.bf16.gmra.mrb[0].mxu0 %v2536
    %v2804 = vpop.f32.mrb[0].mxu0
    %v2805 = vadd.f32 %v2585, %v2804
    %v2806 = vpop.f32.mrb[0].mxu0
    %v2807 = vpop.f32.mrb[0].mxu0
    %v2808 = vadd.f32 %v2585, %v2807
    %v2809 = vpop.f32.mrb[0].mxu0
    %2810 = vmatprep.mubr.bf16.mxu0 0
    %2811 = vmatmul.mubr.bf16.gmra.mrb[0].mxu0 %v2537
    %v2812 = vpop.f32.mrb[0].mxu0
    %v2813 = vadd.f32 %v2585, %v2812
    %v2814 = vpop.f32.mrb[0].mxu0
    %v2815 = vpop.f32.mrb[0].mxu0
    %v2816 = vadd.f32 %v2585, %v2815
    %v2817 = vpop.f32.mrb[0].mxu0
    %2818 = vdwg.mxu0
    %2821 = vrot.lane.b32.xlu0 %v2752, 96
    %v2822 = vpop.permute.xlu0 %2821
    %2823 = vrot.lane.b32.xlu0 %v2756, 96
    %v2824 = vpop.permute.xlu0 %2823
    %2827 = vrot.lane.b32.xlu0 %v2752, 64
    %v2828 = vpop.permute.xlu0 %2827
    %2829 = vrot.lane.b32.xlu0 %v2756, 64
    %v2830 = vpop.permute.xlu0 %2829
    %2833 = vrot.lane.b32.xlu0 %v2752, 32
    %v2834 = vpop.permute.xlu0 %2833
    %2835 = vrot.lane.b32.xlu0 %v2756, 32
    %v2836 = vpop.permute.xlu0 %2835
    %2841 = vrot.lane.b32.xlu0 %v2762, 96
    %v2842 = vpop.permute.xlu0 %2841
    %2843 = vrot.lane.b32.xlu0 %v2766, 96
    %v2844 = vpop.permute.xlu0 %2843
    %2847 = vrot.lane.b32.xlu0 %v2762, 64
    %v2848 = vpop.permute.xlu0 %2847
    %2849 = vrot.lane.b32.xlu0 %v2766, 64
    %v2850 = vpop.permute.xlu0 %2849
    %2853 = vrot.lane.b32.xlu0 %v2762, 32
    %v2854 = vpop.permute.xlu0 %2853
    %2855 = vrot.lane.b32.xlu0 %v2766, 32
    %v2856 = vpop.permute.xlu0 %2855
    %v2859 = vpack.c.bf16 %v2756, %v2752
    %v2860 = vpack.c.bf16 %v2824, %v2822
    %v2861 = vpack.c.bf16 %v2830, %v2828
    %v2862 = vpack.c.bf16 %v2836, %v2834
    %v2863 = vpack.c.bf16 %v2766, %v2762
    %v2864 = vpack.c.bf16 %v2844, %v2842
    %v2865 = vpack.c.bf16 %v2850, %v2848
    %v2866 = vpack.c.bf16 %v2856, %v2854
    %2869 = vrot.lane.b32.xlu0 %v2754, 96
    %v2870 = vpop.permute.xlu0 %2869
    %2871 = vrot.lane.b32.xlu0 %v2758, 96
    %v2872 = vpop.permute.xlu0 %2871
    %2875 = vrot.lane.b32.xlu0 %v2754, 64
    %v2876 = vpop.permute.xlu0 %2875
    %2877 = vrot.lane.b32.xlu0 %v2758, 64
    %v2878 = vpop.permute.xlu0 %2877
    %2881 = vrot.lane.b32.xlu0 %v2754, 32
    %v2882 = vpop.permute.xlu0 %2881
    %2883 = vrot.lane.b32.xlu0 %v2758, 32
    %v2884 = vpop.permute.xlu0 %2883
    %2889 = vrot.lane.b32.xlu0 %v2764, 96
    %v2890 = vpop.permute.xlu0 %2889
    %2891 = vrot.lane.b32.xlu0 %v2768, 96
    %v2892 = vpop.permute.xlu0 %2891
    %2895 = vrot.lane.b32.xlu0 %v2764, 64
    %v2896 = vpop.permute.xlu0 %2895
    %2897 = vrot.lane.b32.xlu0 %v2768, 64
    %v2898 = vpop.permute.xlu0 %2897
    %2901 = vrot.lane.b32.xlu0 %v2764, 32
    %v2902 = vpop.permute.xlu0 %2901
    %2903 = vrot.lane.b32.xlu0 %v2768, 32
    %v2904 = vpop.permute.xlu0 %2903
    %v2907 = vpack.c.bf16 %v2758, %v2754
    %v2908 = vpack.c.bf16 %v2872, %v2870
    %v2909 = vpack.c.bf16 %v2878, %v2876
    %v2910 = vpack.c.bf16 %v2884, %v2882
    %v2911 = vpack.c.bf16 %v2768, %v2764
    %v2912 = vpack.c.bf16 %v2892, %v2890
    %v2913 = vpack.c.bf16 %v2898, %v2896
    %v2914 = vpack.c.bf16 %v2904, %v2902
    %2917 = vrot.lane.b32.xlu0 %v2805, 96
    %v2918 = vpop.permute.xlu0 %2917
    %2919 = vrot.lane.b32.xlu0 %v2808, 96
    %v2920 = vpop.permute.xlu0 %2919
    %2923 = vrot.lane.b32.xlu0 %v2805, 64
    %v2924 = vpop.permute.xlu0 %2923
    %2925 = vrot.lane.b32.xlu0 %v2808, 64
    %v2926 = vpop.permute.xlu0 %2925
    %2929 = vrot.lane.b32.xlu0 %v2805, 32
    %v2930 = vpop.permute.xlu0 %2929
    %2931 = vrot.lane.b32.xlu0 %v2808, 32
    %v2932 = vpop.permute.xlu0 %2931
    %2937 = vrot.lane.b32.xlu0 %v2813, 96
    %v2938 = vpop.permute.xlu0 %2937
    %2939 = vrot.lane.b32.xlu0 %v2816, 96
    %v2940 = vpop.permute.xlu0 %2939
    %2943 = vrot.lane.b32.xlu0 %v2813, 64
    %v2944 = vpop.permute.xlu0 %2943
    %2945 = vrot.lane.b32.xlu0 %v2816, 64
    %v2946 = vpop.permute.xlu0 %2945
    %2949 = vrot.lane.b32.xlu0 %v2813, 32
    %v2950 = vpop.permute.xlu0 %2949
    %2951 = vrot.lane.b32.xlu0 %v2816, 32
    %v2952 = vpop.permute.xlu0 %2951
    %v2955 = vpack.c.bf16 %v2808, %v2805
    %v2956 = vpack.c.bf16 %v2920, %v2918
    %v2957 = vpack.c.bf16 %v2926, %v2924
    %v2958 = vpack.c.bf16 %v2932, %v2930
    %v2959 = vpack.c.bf16 %v2816, %v2813
    %v2960 = vpack.c.bf16 %v2940, %v2938
    %v2961 = vpack.c.bf16 %v2946, %v2944
    %v2962 = vpack.c.bf16 %v2952, %v2950
    %v2964 = vsel %vm795, %v2859, 0
    %v2967 = vsel %vm795, %v2907, 0
    %2969 = vmatprep.subr.bf16.mxu0 0
    %2970 = vmatpush1.bf16.xpose.msra.mxu0 %v2967
    %2971 = vmatprep.subr.bf16.mxu0 0
    %2972 = vmatpush1.bf16.xpose.msra.mxu0 0
    %2973 = vmatprep.subr.bf16.mxu0 0
    %2974 = vmatpush1.bf16.xpose.msra.mxu0 0
    %2975 = vmatprep.subr.bf16.mxu0 0
    %2976 = vmatpush1.bf16.xpose.msra.mxu0 0
    %2977 = vmatprep.subr.bf16.mxu0 0
    %2978 = vmatpush1.bf16.xpose.msra.mxu0 0
    %2979 = vmatprep.subr.bf16.mxu0 0
    %2980 = vmatpush1.bf16.xpose.msra.mxu0 0
    %2981 = vmatprep.subr.bf16.mxu0 0
    %2982 = vmatpush1.bf16.xpose.msra.mxu0 0
    %2983 = vmatprep.subr.bf16.mxu0 0
    %2984 = vmatpush1.bf16.xpose.msra.mxu0 0
    %2985 = vmatprep.subr.bf16.mxu0 0
    %2986 = vmatpush1.bf16.xpose.msra.mxu0 0
    %2987 = vmatprep.subr.bf16.mxu0 0
    %2988 = vmatpush1.bf16.xpose.msra.mxu0 0
    %2989 = vmatprep.subr.bf16.mxu0 0
    %2990 = vmatpush1.bf16.xpose.msra.mxu0 0
    %2991 = vmatprep.subr.bf16.mxu0 0
    %2992 = vmatpush1.bf16.xpose.msra.mxu0 0
    %2993 = vmatprep.subr.bf16.mxu0 0
    %2994 = vmatpush1.bf16.xpose.msra.mxu0 0
    %2995 = vmatprep.subr.bf16.mxu0 0
    %2996 = vmatpush1.bf16.xpose.msra.mxu0 0
    %2997 = vmatprep.subr.bf16.mxu0 0
    %2998 = vmatpush1.bf16.xpose.msra.mxu0 0
    %2999 = vmatprep.subr.bf16.mxu0 0
    %3000 = vmatpush1.bf16.xpose.msra.mxu0 0
    %3001 = vmatprep.mubr.bf16.mxu0 0
    %3002 = vmatmul.mubr.bf16.gmra.mrb[0].mxu0 %v2964
    %v3003 = vpop.f32.mrb[0].mxu0
    %v3004 = vadd.f32 0.0, %v3003
    %v3005 = vpop.f32.mrb[0].mxu0
    %v3006 = vpop.f32.mrb[0].mxu0
    %v3007 = vadd.f32 0.0, %v3006
    %v3008 = vpop.f32.mrb[0].mxu0
    %3009 = vdwg.mxu0
    %v3011 = vsel %vm795, %v2860, 0
    %v3014 = vsel %vm795, %v2908, 0
    %3016 = vmatprep.subr.bf16.mxu0 0
    %3017 = vmatpush1.bf16.xpose.msra.mxu0 %v3014
    %3018 = vmatprep.subr.bf16.mxu0 0
    %3019 = vmatpush1.bf16.xpose.msra.mxu0 0
    %3020 = vmatprep.subr.bf16.mxu0 0
    %3021 = vmatpush1.bf16.xpose.msra.mxu0 0
    %3022 = vmatprep.subr.bf16.mxu0 0
    %3023 = vmatpush1.bf16.xpose.msra.mxu0 0
    %3024 = vmatprep.subr.bf16.mxu0 0
    %3025 = vmatpush1.bf16.xpose.msra.mxu0 0
    %3026 = vmatprep.subr.bf16.mxu0 0
    %3027 = vmatpush1.bf16.xpose.msra.mxu0 0
    %3028 = vmatprep.subr.bf16.mxu0 0
    %3029 = vmatpush1.bf16.xpose.msra.mxu0 0
    %3030 = vmatprep.subr.bf16.mxu0 0
    %3031 = vmatpush1.bf16.xpose.msra.mxu0 0
    %3032 = vmatprep.subr.bf16.mxu0 0
    %3033 = vmatpush1.bf16.xpose.msra.mxu0 0
    %3034 = vmatprep.subr.bf16.mxu0 0
    %3035 = vmatpush1.bf16.xpose.msra.mxu0 0
    %3036 = vmatprep.subr.bf16.mxu0 0
    %3037 = vmatpush1.bf16.xpose.msra.mxu0 0
    %3038 = vmatprep.subr.bf16.mxu0 0
    %3039 = vmatpush1.bf16.xpose.msra.mxu0 0
    %3040 = vmatprep.subr.bf16.mxu0 0
    %3041 = vmatpush1.bf16.xpose.msra.mxu0 0
    %3042 = vmatprep.subr.bf16.mxu0 0
    %3043 = vmatpush1.bf16.xpose.msra.mxu0 0
    %3044 = vmatprep.subr.bf16.mxu0 0
    %3045 = vmatpush1.bf16.xpose.msra.mxu0 0
    %3046 = vmatprep.subr.bf16.mxu0 0
    %3047 = vmatpush1.bf16.xpose.msra.mxu0 0
    %3048 = vmatprep.mubr.bf16.mxu0 0
    %3049 = vmatmul.mubr.bf16.gmra.mrb[0].mxu0 %v3011
    %v3050 = vpop.f32.mrb[0].mxu0
    %v3051 = vadd.f32 0.0, %v3050
    %v3052 = vpop.f32.mrb[0].mxu0
    %v3053 = vpop.f32.mrb[0].mxu0
    %v3054 = vadd.f32 0.0, %v3053
    %v3055 = vpop.f32.mrb[0].mxu0
    %3056 = vdwg.mxu0
    %v3058 = vsel %vm795, %v2861, 0
    %v3061 = vsel %vm795, %v2909, 0
    %3063 = vmatprep.subr.bf16.mxu0 0
    %3064 = vmatpush1.bf16.xpose.msra.mxu0 %v3061
    %3065 = vmatprep.subr.bf16.mxu0 0
    %3066 = vmatpush1.bf16.xpose.msra.mxu0 0
    %3067 = vmatprep.subr.bf16.mxu0 0
    %3068 = vmatpush1.bf16.xpose.msra.mxu0 0
    %3069 = vmatprep.subr.bf16.mxu0 0
    %3070 = vmatpush1.bf16.xpose.msra.mxu0 0
    %3071 = vmatprep.subr.bf16.mxu0 0
    %3072 = vmatpush1.bf16.xpose.msra.mxu0 0
    %3073 = vmatprep.subr.bf16.mxu0 0
    %3074 = vmatpush1.bf16.xpose.msra.mxu0 0
    %3075 = vmatprep.subr.bf16.mxu0 0
    %3076 = vmatpush1.bf16.xpose.msra.mxu0 0
    %3077 = vmatprep.subr.bf16.mxu0 0
    %3078 = vmatpush1.bf16.xpose.msra.mxu0 0
    %3079 = vmatprep.subr.bf16.mxu0 0
    %3080 = vmatpush1.bf16.xpose.msra.mxu0 0
    %3081 = vmatprep.subr.bf16.mxu0 0
    %3082 = vmatpush1.bf16.xpose.msra.mxu0 0
    %3083 = vmatprep.subr.bf16.mxu0 0
    %3084 = vmatpush1.bf16.xpose.msra.mxu0 0
    %3085 = vmatprep.subr.bf16.mxu0 0
    %3086 = vmatpush1.bf16.xpose.msra.mxu0 0
    %3087 = vmatprep.subr.bf16.mxu0 0
    %3088 = vmatpush1.bf16.xpose.msra.mxu0 0
    %3089 = vmatprep.subr.bf16.mxu0 0
    %3090 = vmatpush1.bf16.xpose.msra.mxu0 0
    %3091 = vmatprep.subr.bf16.mxu0 0
    %3092 = vmatpush1.bf16.xpose.msra.mxu0 0
    %3093 = vmatprep.subr.bf16.mxu0 0
    %3094 = vmatpush1.bf16.xpose.msra.mxu0 0
    %3095 = vmatprep.mubr.bf16.mxu0 0
    %3096 = vmatmul.mubr.bf16.gmra.mrb[0].mxu0 %v3058
    %v3097 = vpop.f32.mrb[0].mxu0
    %v3098 = vadd.f32 0.0, %v3097
    %v3099 = vpop.f32.mrb[0].mxu0
    %v3100 = vpop.f32.mrb[0].mxu0
    %v3101 = vadd.f32 0.0, %v3100
    %v3102 = vpop.f32.mrb[0].mxu0
    %3103 = vdwg.mxu0
    %v3105 = vsel %vm795, %v2862, 0
    %v3108 = vsel %vm795, %v2910, 0
    %3110 = vmatprep.subr.bf16.mxu0 0
    %3111 = vmatpush1.bf16.xpose.msra.mxu0 %v3108
    %3112 = vmatprep.subr.bf16.mxu0 0
    %3113 = vmatpush1.bf16.xpose.msra.mxu0 0
    %3114 = vmatprep.subr.bf16.mxu0 0
    %3115 = vmatpush1.bf16.xpose.msra.mxu0 0
    %3116 = vmatprep.subr.bf16.mxu0 0
    %3117 = vmatpush1.bf16.xpose.msra.mxu0 0
    %3118 = vmatprep.subr.bf16.mxu0 0
    %3119 = vmatpush1.bf16.xpose.msra.mxu0 0
    %3120 = vmatprep.subr.bf16.mxu0 0
    %3121 = vmatpush1.bf16.xpose.msra.mxu0 0
    %3122 = vmatprep.subr.bf16.mxu0 0
    %3123 = vmatpush1.bf16.xpose.msra.mxu0 0
    %3124 = vmatprep.subr.bf16.mxu0 0
    %3125 = vmatpush1.bf16.xpose.msra.mxu0 0
    %3126 = vmatprep.subr.bf16.mxu0 0
    %3127 = vmatpush1.bf16.xpose.msra.mxu0 0
    %3128 = vmatprep.subr.bf16.mxu0 0
    %3129 = vmatpush1.bf16.xpose.msra.mxu0 0
    %3130 = vmatprep.subr.bf16.mxu0 0
    %3131 = vmatpush1.bf16.xpose.msra.mxu0 0
    %3132 = vmatprep.subr.bf16.mxu0 0
    %3133 = vmatpush1.bf16.xpose.msra.mxu0 0
    %3134 = vmatprep.subr.bf16.mxu0 0
    %3135 = vmatpush1.bf16.xpose.msra.mxu0 0
    %3136 = vmatprep.subr.bf16.mxu0 0
    %3137 = vmatpush1.bf16.xpose.msra.mxu0 0
    %3138 = vmatprep.subr.bf16.mxu0 0
    %3139 = vmatpush1.bf16.xpose.msra.mxu0 0
    %3140 = vmatprep.subr.bf16.mxu0 0
    %3141 = vmatpush1.bf16.xpose.msra.mxu0 0
    %3142 = vmatprep.mubr.bf16.mxu0 0
    %3143 = vmatmul.mubr.bf16.gmra.mrb[0].mxu0 %v3105
    %v3144 = vpop.f32.mrb[0].mxu0
    %v3145 = vadd.f32 0.0, %v3144
    %v3146 = vpop.f32.mrb[0].mxu0
    %v3147 = vpop.f32.mrb[0].mxu0
    %v3148 = vadd.f32 0.0, %v3147
    %v3149 = vpop.f32.mrb[0].mxu0
    %3150 = vdwg.mxu0
    %v3152 = vsel %vm795, %v2863, 0
    %v3155 = vsel %vm795, %v2911, 0
    %3157 = vmatprep.subr.bf16.mxu0 0
    %3158 = vmatpush1.bf16.xpose.msra.mxu0 %v3155
    %3159 = vmatprep.subr.bf16.mxu0 0
    %3160 = vmatpush1.bf16.xpose.msra.mxu0 0
    %3161 = vmatprep.subr.bf16.mxu0 0
    %3162 = vmatpush1.bf16.xpose.msra.mxu0 0
    %3163 = vmatprep.subr.bf16.mxu0 0
    %3164 = vmatpush1.bf16.xpose.msra.mxu0 0
    %3165 = vmatprep.subr.bf16.mxu0 0
    %3166 = vmatpush1.bf16.xpose.msra.mxu0 0
    %3167 = vmatprep.subr.bf16.mxu0 0
    %3168 = vmatpush1.bf16.xpose.msra.mxu0 0
    %3169 = vmatprep.subr.bf16.mxu0 0
    %3170 = vmatpush1.bf16.xpose.msra.mxu0 0
    %3171 = vmatprep.subr.bf16.mxu0 0
    %3172 = vmatpush1.bf16.xpose.msra.mxu0 0
    %3173 = vmatprep.subr.bf16.mxu0 0
    %3174 = vmatpush1.bf16.xpose.msra.mxu0 0
    %3175 = vmatprep.subr.bf16.mxu0 0
    %3176 = vmatpush1.bf16.xpose.msra.mxu0 0
    %3177 = vmatprep.subr.bf16.mxu0 0
    %3178 = vmatpush1.bf16.xpose.msra.mxu0 0
    %3179 = vmatprep.subr.bf16.mxu0 0
    %3180 = vmatpush1.bf16.xpose.msra.mxu0 0
    %3181 = vmatprep.subr.bf16.mxu0 0
    %3182 = vmatpush1.bf16.xpose.msra.mxu0 0
    %3183 = vmatprep.subr.bf16.mxu0 0
    %3184 = vmatpush1.bf16.xpose.msra.mxu0 0
    %3185 = vmatprep.subr.bf16.mxu0 0
    %3186 = vmatpush1.bf16.xpose.msra.mxu0 0
    %3187 = vmatprep.subr.bf16.mxu0 0
    %3188 = vmatpush1.bf16.xpose.msra.mxu0 0
    %3189 = vmatprep.mubr.bf16.mxu0 0
    %3190 = vmatmul.mubr.bf16.gmra.mrb[0].mxu0 %v3152
    %v3191 = vpop.f32.mrb[0].mxu0
    %v3192 = vadd.f32 0.0, %v3191
    %v3193 = vpop.f32.mrb[0].mxu0
    %v3194 = vpop.f32.mrb[0].mxu0
    %v3195 = vadd.f32 0.0, %v3194
    %v3196 = vpop.f32.mrb[0].mxu0
    %3197 = vdwg.mxu0
    %v3199 = vsel %vm795, %v2864, 0
    %v3202 = vsel %vm795, %v2912, 0
    %3204 = vmatprep.subr.bf16.mxu0 0
    %3205 = vmatpush1.bf16.xpose.msra.mxu0 %v3202
    %3206 = vmatprep.subr.bf16.mxu0 0
    %3207 = vmatpush1.bf16.xpose.msra.mxu0 0
    %3208 = vmatprep.subr.bf16.mxu0 0
    %3209 = vmatpush1.bf16.xpose.msra.mxu0 0
    %3210 = vmatprep.subr.bf16.mxu0 0
    %3211 = vmatpush1.bf16.xpose.msra.mxu0 0
    %3212 = vmatprep.subr.bf16.mxu0 0
    %3213 = vmatpush1.bf16.xpose.msra.mxu0 0
    %3214 = vmatprep.subr.bf16.mxu0 0
    %3215 = vmatpush1.bf16.xpose.msra.mxu0 0
    %3216 = vmatprep.subr.bf16.mxu0 0
    %3217 = vmatpush1.bf16.xpose.msra.mxu0 0
    %3218 = vmatprep.subr.bf16.mxu0 0
    %3219 = vmatpush1.bf16.xpose.msra.mxu0 0
    %3220 = vmatprep.subr.bf16.mxu0 0
    %3221 = vmatpush1.bf16.xpose.msra.mxu0 0
    %3222 = vmatprep.subr.bf16.mxu0 0
    %3223 = vmatpush1.bf16.xpose.msra.mxu0 0
    %3224 = vmatprep.subr.bf16.mxu0 0
    %3225 = vmatpush1.bf16.xpose.msra.mxu0 0
    %3226 = vmatprep.subr.bf16.mxu0 0
    %3227 = vmatpush1.bf16.xpose.msra.mxu0 0
    %3228 = vmatprep.subr.bf16.mxu0 0
    %3229 = vmatpush1.bf16.xpose.msra.mxu0 0
    %3230 = vmatprep.subr.bf16.mxu0 0
    %3231 = vmatpush1.bf16.xpose.msra.mxu0 0
    %3232 = vmatprep.subr.bf16.mxu0 0
    %3233 = vmatpush1.bf16.xpose.msra.mxu0 0
    %3234 = vmatprep.subr.bf16.mxu0 0
    %3235 = vmatpush1.bf16.xpose.msra.mxu0 0
    %3236 = vmatprep.mubr.bf16.mxu0 0
    %3237 = vmatmul.mubr.bf16.gmra.mrb[0].mxu0 %v3199
    %v3238 = vpop.f32.mrb[0].mxu0
    %v3239 = vadd.f32 0.0, %v3238
    %v3240 = vpop.f32.mrb[0].mxu0
    %v3241 = vpop.f32.mrb[0].mxu0
    %v3242 = vadd.f32 0.0, %v3241
    %v3243 = vpop.f32.mrb[0].mxu0
    %3244 = vdwg.mxu0
    %v3246 = vsel %vm795, %v2865, 0
    %v3249 = vsel %vm795, %v2913, 0
    %3251 = vmatprep.subr.bf16.mxu0 0
    %3252 = vmatpush1.bf16.xpose.msra.mxu0 %v3249
    %3253 = vmatprep.subr.bf16.mxu0 0
    %3254 = vmatpush1.bf16.xpose.msra.mxu0 0
    %3255 = vmatprep.subr.bf16.mxu0 0
    %3256 = vmatpush1.bf16.xpose.msra.mxu0 0
    %3257 = vmatprep.subr.bf16.mxu0 0
    %3258 = vmatpush1.bf16.xpose.msra.mxu0 0
    %3259 = vmatprep.subr.bf16.mxu0 0
    %3260 = vmatpush1.bf16.xpose.msra.mxu0 0
    %3261 = vmatprep.subr.bf16.mxu0 0
    %3262 = vmatpush1.bf16.xpose.msra.mxu0 0
    %3263 = vmatprep.subr.bf16.mxu0 0
    %3264 = vmatpush1.bf16.xpose.msra.mxu0 0
    %3265 = vmatprep.subr.bf16.mxu0 0
    %3266 = vmatpush1.bf16.xpose.msra.mxu0 0
    %3267 = vmatprep.subr.bf16.mxu0 0
    %3268 = vmatpush1.bf16.xpose.msra.mxu0 0
    %3269 = vmatprep.subr.bf16.mxu0 0
    %3270 = vmatpush1.bf16.xpose.msra.mxu0 0
    %3271 = vmatprep.subr.bf16.mxu0 0
    %3272 = vmatpush1.bf16.xpose.msra.mxu0 0
    %3273 = vmatprep.subr.bf16.mxu0 0
    %3274 = vmatpush1.bf16.xpose.msra.mxu0 0
    %3275 = vmatprep.subr.bf16.mxu0 0
    %3276 = vmatpush1.bf16.xpose.msra.mxu0 0
    %3277 = vmatprep.subr.bf16.mxu0 0
    %3278 = vmatpush1.bf16.xpose.msra.mxu0 0
    %3279 = vmatprep.subr.bf16.mxu0 0
    %3280 = vmatpush1.bf16.xpose.msra.mxu0 0
    %3281 = vmatprep.subr.bf16.mxu0 0
    %3282 = vmatpush1.bf16.xpose.msra.mxu0 0
    %3283 = vmatprep.mubr.bf16.mxu0 0
    %3284 = vmatmul.mubr.bf16.gmra.mrb[0].mxu0 %v3246
    %v3285 = vpop.f32.mrb[0].mxu0
    %v3286 = vadd.f32 0.0, %v3285
    %v3287 = vpop.f32.mrb[0].mxu0
    %v3288 = vpop.f32.mrb[0].mxu0
    %v3289 = vadd.f32 0.0, %v3288
    %v3290 = vpop.f32.mrb[0].mxu0
    %3291 = vdwg.mxu0
    %v3293 = vsel %vm795, %v2866, 0
    %v3296 = vsel %vm795, %v2914, 0
    %3298 = vmatprep.subr.bf16.mxu0 0
    %3299 = vmatpush1.bf16.xpose.msra.mxu0 %v3296
    %3300 = vmatprep.subr.bf16.mxu0 0
    %3301 = vmatpush1.bf16.xpose.msra.mxu0 0
    %3302 = vmatprep.subr.bf16.mxu0 0
    %3303 = vmatpush1.bf16.xpose.msra.mxu0 0
    %3304 = vmatprep.subr.bf16.mxu0 0
    %3305 = vmatpush1.bf16.xpose.msra.mxu0 0
    %3306 = vmatprep.subr.bf16.mxu0 0
    %3307 = vmatpush1.bf16.xpose.msra.mxu0 0
    %3308 = vmatprep.subr.bf16.mxu0 0
    %3309 = vmatpush1.bf16.xpose.msra.mxu0 0
    %3310 = vmatprep.subr.bf16.mxu0 0
    %3311 = vmatpush1.bf16.xpose.msra.mxu0 0
    %3312 = vmatprep.subr.bf16.mxu0 0
    %3313 = vmatpush1.bf16.xpose.msra.mxu0 0
    %3314 = vmatprep.subr.bf16.mxu0 0
    %3315 = vmatpush1.bf16.xpose.msra.mxu0 0
    %3316 = vmatprep.subr.bf16.mxu0 0
    %3317 = vmatpush1.bf16.xpose.msra.mxu0 0
    %3318 = vmatprep.subr.bf16.mxu0 0
    %3319 = vmatpush1.bf16.xpose.msra.mxu0 0
    %3320 = vmatprep.subr.bf16.mxu0 0
    %3321 = vmatpush1.bf16.xpose.msra.mxu0 0
    %3322 = vmatprep.subr.bf16.mxu0 0
    %3323 = vmatpush1.bf16.xpose.msra.mxu0 0
    %3324 = vmatprep.subr.bf16.mxu0 0
    %3325 = vmatpush1.bf16.xpose.msra.mxu0 0
    %3326 = vmatprep.subr.bf16.mxu0 0
    %3327 = vmatpush1.bf16.xpose.msra.mxu0 0
    %3328 = vmatprep.subr.bf16.mxu0 0
    %3329 = vmatpush1.bf16.xpose.msra.mxu0 0
    %3330 = vmatprep.mubr.bf16.mxu0 0
    %3331 = vmatmul.mubr.bf16.gmra.mrb[0].mxu0 %v3293
    %v3332 = vpop.f32.mrb[0].mxu0
    %v3333 = vadd.f32 0.0, %v3332
    %v3334 = vpop.f32.mrb[0].mxu0
    %v3335 = vpop.f32.mrb[0].mxu0
    %v3336 = vadd.f32 0.0, %v3335
    %v3337 = vpop.f32.mrb[0].mxu0
    %3338 = vdwg.mxu0
    %v3339 = vmul.f32 %v3004, 0.17677669
    %v3340 = vmul.f32 %v3007, 0.17677669
    %v3341 = vmul.f32 %v3051, 0.17677669
    %v3342 = vmul.f32 %v3054, 0.17677669
    %v3343 = vmul.f32 %v3098, 0.17677669
    %v3344 = vmul.f32 %v3101, 0.17677669
    %v3345 = vmul.f32 %v3145, 0.17677669
    %v3346 = vmul.f32 %v3148, 0.17677669
    %v3347 = vmul.f32 %v3192, 0.17677669
    %v3348 = vmul.f32 %v3195, 0.17677669
    %v3349 = vmul.f32 %v3239, 0.17677669
    %v3350 = vmul.f32 %v3242, 0.17677669
    %v3351 = vmul.f32 %v3286, 0.17677669
    %v3352 = vmul.f32 %v3289, 0.17677669
    %v3353 = vmul.f32 %v3333, 0.17677669
    %v3354 = vmul.f32 %v3336, 0.17677669
    %v3355 = vadd.f32 %v3339, %v1199
    %v3356 = vadd.f32 %v3340, %v1199
    %v3357 = vadd.f32 %v3341, %v1203
    %v3358 = vadd.f32 %v3342, %v1203
    %v3359 = vadd.f32 %v3343, %v1207
    %v3360 = vadd.f32 %v3344, %v1207
    %v3361 = vadd.f32 %v3345, %v1211
    %v3362 = vadd.f32 %v3346, %v1211
    %v3363 = vadd.f32 %v3347, %v1215
    %v3364 = vadd.f32 %v3348, %v1215
    %v3365 = vadd.f32 %v3349, %v1219
    %v3366 = vadd.f32 %v3350, %v1219
    %v3367 = vadd.f32 %v3351, %v1223
    %v3368 = vadd.f32 %v3352, %v1223
    %v3369 = vadd.f32 %v3353, %v1227
    %v3370 = vadd.f32 %v3354, %v1227
    %v3371 = vsel %vm1252, %v3355, -inf
    %3372 = vmax.xlane.f32.xlu0 %v3371
    %v3373 = vpop.xlane.xlu0 %3372
    %v3374 = vsel %vm1252, %v3356, -inf
    %3375 = vmax.xlane.f32.xlu0 %v3374
    %v3376 = vpop.xlane.xlu0 %3375
    %v3377 = vsel %vm1252, %v3357, -inf
    %3378 = vmax.xlane.f32.xlu0 %v3377
    %v3379 = vpop.xlane.xlu0 %3378
    %v3380 = vsel %vm1252, %v3358, -inf
    %3381 = vmax.xlane.f32.xlu0 %v3380
    %v3382 = vpop.xlane.xlu0 %3381
    %v3383 = vsel %vm1252, %v3359, -inf
    %3384 = vmax.xlane.f32.xlu0 %v3383
    %v3385 = vpop.xlane.xlu0 %3384
    %v3386 = vsel %vm1252, %v3360, -inf
    %3387 = vmax.xlane.f32.xlu0 %v3386
    %v3388 = vpop.xlane.xlu0 %3387
    %v3389 = vsel %vm1252, %v3361, -inf
    %3390 = vmax.xlane.f32.xlu0 %v3389
    %v3391 = vpop.xlane.xlu0 %3390
    %v3392 = vsel %vm1252, %v3362, -inf
    %3393 = vmax.xlane.f32.xlu0 %v3392
    %v3394 = vpop.xlane.xlu0 %3393
    %v3395 = vsel %vm1252, %v3363, -inf
    %3396 = vmax.xlane.f32.xlu0 %v3395
    %v3397 = vpop.xlane.xlu0 %3396
    %v3398 = vsel %vm1252, %v3364, -inf
    %3399 = vmax.xlane.f32.xlu0 %v3398
    %v3400 = vpop.xlane.xlu0 %3399
    %v3401 = vsel %vm1252, %v3365, -inf
    %3402 = vmax.xlane.f32.xlu0 %v3401
    %v3403 = vpop.xlane.xlu0 %3402
    %v3404 = vsel %vm1252, %v3366, -inf
    %3405 = vmax.xlane.f32.xlu0 %v3404
    %v3406 = vpop.xlane.xlu0 %3405
    %v3407 = vsel %vm1252, %v3367, -inf
    %3408 = vmax.xlane.f32.xlu0 %v3407
    %v3409 = vpop.xlane.xlu0 %3408
    %v3410 = vsel %vm1252, %v3368, -inf
    %3411 = vmax.xlane.f32.xlu0 %v3410
    %v3412 = vpop.xlane.xlu0 %3411
    %v3413 = vsel %vm1252, %v3369, -inf
    %3414 = vmax.xlane.f32.xlu0 %v3413
    %v3415 = vpop.xlane.xlu0 %3414
    %v3416 = vsel %vm1252, %v3370, -inf
    %3417 = vmax.xlane.f32.xlu0 %v3416
    %v3418 = vpop.xlane.xlu0 %3417
    %v3419 = vsub.f32 %v3355, %v3373
    %v3420 = vsub.f32 %v3356, %v3376
    %v3421 = vsub.f32 %v3357, %v3379
    %v3422 = vsub.f32 %v3358, %v3382
    %v3423 = vsub.f32 %v3359, %v3385
    %v3424 = vsub.f32 %v3360, %v3388
    %v3425 = vsub.f32 %v3361, %v3391
    %v3426 = vsub.f32 %v3362, %v3394
    %v3427 = vsub.f32 %v3363, %v3397
    %v3428 = vsub.f32 %v3364, %v3400
    %v3429 = vsub.f32 %v3365, %v3403
    %v3430 = vsub.f32 %v3366, %v3406
    %v3431 = vsub.f32 %v3367, %v3409
    %v3432 = vsub.f32 %v3368, %v3412
    %v3433 = vsub.f32 %v3369, %v3415
    %v3434 = vsub.f32 %v3370, %v3418
    %v3435 = vmul.f32 %v3419, 1.442695
    %v3436 = vpow.pop %v3435
    %v3437 = vmul.f32 %v3420, 1.442695
    %v3438 = vpow.pop %v3437
    %v3439 = vmul.f32 %v3421, 1.442695
    %v3440 = vpow.pop %v3439
    %v3441 = vmul.f32 %v3422, 1.442695
    %v3442 = vpow.pop %v3441
    %v3443 = vmul.f32 %v3423, 1.442695
    %v3444 = vpow.pop %v3443
    %v3445 = vmul.f32 %v3424, 1.442695
    %v3446 = vpow.pop %v3445
    %v3447 = vmul.f32 %v3425, 1.442695
    %v3448 = vpow.pop %v3447
    %v3449 = vmul.f32 %v3426, 1.442695
    %v3450 = vpow.pop %v3449
    %v3451 = vmul.f32 %v3427, 1.442695
    %v3452 = vpow.pop %v3451
    %v3453 = vmul.f32 %v3428, 1.442695
    %v3454 = vpow.pop %v3453
    %v3455 = vmul.f32 %v3429, 1.442695
    %v3456 = vpow.pop %v3455
    %v3457 = vmul.f32 %v3430, 1.442695
    %v3458 = vpow.pop %v3457
    %v3459 = vmul.f32 %v3431, 1.442695
    %v3460 = vpow.pop %v3459
    %v3461 = vmul.f32 %v3432, 1.442695
    %v3462 = vpow.pop %v3461
    %v3463 = vmul.f32 %v3433, 1.442695
    %v3464 = vpow.pop %v3463
    %v3465 = vmul.f32 %v3434, 1.442695
    %v3466 = vpow.pop %v3465
    %v3467 = vsel %vm1252, %v3436, 0.0
    %3468 = vadd.xlane.f32.xlu0 %v3467
    %v3469 = vpop.xlane.xlu0 %3468
    %v3470 = vsel %vm1252, %v3438, 0.0
    %3471 = vadd.xlane.f32.xlu0 %v3470
    %v3472 = vpop.xlane.xlu0 %3471
    %v3473 = vsel %vm1252, %v3440, 0.0
    %3474 = vadd.xlane.f32.xlu0 %v3473
    %v3475 = vpop.xlane.xlu0 %3474
    %v3476 = vsel %vm1252, %v3442, 0.0
    %3477 = vadd.xlane.f32.xlu0 %v3476
    %v3478 = vpop.xlane.xlu0 %3477
    %v3479 = vsel %vm1252, %v3444, 0.0
    %3480 = vadd.xlane.f32.xlu0 %v3479
    %v3481 = vpop.xlane.xlu0 %3480
    %v3482 = vsel %vm1252, %v3446, 0.0
    %3483 = vadd.xlane.f32.xlu0 %v3482
    %v3484 = vpop.xlane.xlu0 %3483
    %v3485 = vsel %vm1252, %v3448, 0.0
    %3486 = vadd.xlane.f32.xlu0 %v3485
    %v3487 = vpop.xlane.xlu0 %3486
    %v3488 = vsel %vm1252, %v3450, 0.0
    %3489 = vadd.xlane.f32.xlu0 %v3488
    %v3490 = vpop.xlane.xlu0 %3489
    %v3491 = vsel %vm1252, %v3452, 0.0
    %3492 = vadd.xlane.f32.xlu0 %v3491
    %v3493 = vpop.xlane.xlu0 %3492
    %v3494 = vsel %vm1252, %v3454, 0.0
    %3495 = vadd.xlane.f32.xlu0 %v3494
    %v3496 = vpop.xlane.xlu0 %3495
    %v3497 = vsel %vm1252, %v3456, 0.0
    %3498 = vadd.xlane.f32.xlu0 %v3497
    %v3499 = vpop.xlane.xlu0 %3498
    %v3500 = vsel %vm1252, %v3458, 0.0
    %3501 = vadd.xlane.f32.xlu0 %v3500
    %v3502 = vpop.xlane.xlu0 %3501
    %v3503 = vsel %vm1252, %v3460, 0.0
    %3504 = vadd.xlane.f32.xlu0 %v3503
    %v3505 = vpop.xlane.xlu0 %3504
    %v3506 = vsel %vm1252, %v3462, 0.0
    %3507 = vadd.xlane.f32.xlu0 %v3506
    %v3508 = vpop.xlane.xlu0 %3507
    %v3509 = vsel %vm1252, %v3464, 0.0
    %3510 = vadd.xlane.f32.xlu0 %v3509
    %v3511 = vpop.xlane.xlu0 %3510
    %v3512 = vsel %vm1252, %v3466, 0.0
    %3513 = vadd.xlane.f32.xlu0 %v3512
    %v3514 = vpop.xlane.xlu0 %3513
    %v3515 = vrcp.pop %v3469
    %v3516 = vrcp.pop %v3472
    %v3517 = vrcp.pop %v3475
    %v3518 = vrcp.pop %v3478
    %v3519 = vrcp.pop %v3481
    %v3520 = vrcp.pop %v3484
    %v3521 = vrcp.pop %v3487
    %v3522 = vrcp.pop %v3490
    %v3523 = vrcp.pop %v3493
    %v3524 = vrcp.pop %v3496
    %v3525 = vrcp.pop %v3499
    %v3526 = vrcp.pop %v3502
    %v3527 = vrcp.pop %v3505
    %v3528 = vrcp.pop %v3508
    %v3529 = vrcp.pop %v3511
    %v3530 = vrcp.pop %v3514
    %v3531 = vmul.f32 %v3436, %v3515
    %v3532 = vmul.f32 %v3438, %v3516
    %v3533 = vmul.f32 %v3440, %v3517
    %v3534 = vmul.f32 %v3442, %v3518
    %v3535 = vmul.f32 %v3444, %v3519
    %v3536 = vmul.f32 %v3446, %v3520
    %v3537 = vmul.f32 %v3448, %v3521
    %v3538 = vmul.f32 %v3450, %v3522
    %v3539 = vmul.f32 %v3452, %v3523
    %v3540 = vmul.f32 %v3454, %v3524
    %v3541 = vmul.f32 %v3456, %v3525
    %v3542 = vmul.f32 %v3458, %v3526
    %v3543 = vmul.f32 %v3460, %v3527
    %v3544 = vmul.f32 %v3462, %v3528
    %v3545 = vmul.f32 %v3464, %v3529
    %v3546 = vmul.f32 %v3466, %v3530
    %v3547 = vpack.c.bf16 %v3532, %v3531
    %v3548 = vpack.c.bf16 %v3534, %v3533
    %v3549 = vpack.c.bf16 %v3536, %v3535
    %v3550 = vpack.c.bf16 %v3538, %v3537
    %v3551 = vpack.c.bf16 %v3540, %v3539
    %v3552 = vpack.c.bf16 %v3542, %v3541
    %v3553 = vpack.c.bf16 %v3544, %v3543
    %v3554 = vpack.c.bf16 %v3546, %v3545
    %v3556 = vsel %vm1252, %v3547, 0
    %3558 = vmatprep.subr.bf16.mxu0 0
    %3559 = vmatpush1.bf16.msra.mxu0 %v2955
    %3560 = vmatprep.subr.bf16.mxu0 0
    %3561 = vmatpush1.bf16.msra.mxu0 0
    %3562 = vmatprep.subr.bf16.mxu0 0
    %3563 = vmatpush1.bf16.msra.mxu0 0
    %3564 = vmatprep.subr.bf16.mxu0 0
    %3565 = vmatpush1.bf16.msra.mxu0 0
    %3566 = vmatprep.subr.bf16.mxu0 0
    %3567 = vmatpush1.bf16.msra.mxu0 0
    %3568 = vmatprep.subr.bf16.mxu0 0
    %3569 = vmatpush1.bf16.msra.mxu0 0
    %3570 = vmatprep.subr.bf16.mxu0 0
    %3571 = vmatpush1.bf16.msra.mxu0 0
    %3572 = vmatprep.subr.bf16.mxu0 0
    %3573 = vmatpush1.bf16.msra.mxu0 0
    %3574 = vmatprep.subr.bf16.mxu0 0
    %3575 = vmatpush1.bf16.msra.mxu0 0
    %3576 = vmatprep.subr.bf16.mxu0 0
    %3577 = vmatpush1.bf16.msra.mxu0 0
    %3578 = vmatprep.subr.bf16.mxu0 0
    %3579 = vmatpush1.bf16.msra.mxu0 0
    %3580 = vmatprep.subr.bf16.mxu0 0
    %3581 = vmatpush1.bf16.msra.mxu0 0
    %3582 = vmatprep.subr.bf16.mxu0 0
    %3583 = vmatpush1.bf16.msra.mxu0 0
    %3584 = vmatprep.subr.bf16.mxu0 0
    %3585 = vmatpush1.bf16.msra.mxu0 0
    %3586 = vmatprep.subr.bf16.mxu0 0
    %3587 = vmatpush1.bf16.msra.mxu0 0
    %3588 = vmatprep.subr.bf16.mxu0 0
    %3589 = vmatpush1.bf16.msra.mxu0 0
    %3590 = vmatprep.mubr.bf16.mxu0 0
    %3591 = vmatmul.mubr.bf16.gmra.mrb[0].mxu0 %v3556
    %v3592 = vpop.f32.mrb[0].mxu0
    %v3593 = vadd.f32 0.0, %v3592
    %v3594 = vpop.f32.mrb[0].mxu0
    %v3595 = vpop.f32.mrb[0].mxu0
    %v3596 = vadd.f32 0.0, %v3595
    %v3597 = vpop.f32.mrb[0].mxu0
    %3598 = vdwg.mxu0
    %v3600 = vsel %vm1252, %v3548, 0
    %3602 = vmatprep.subr.bf16.mxu0 0
    %3603 = vmatpush1.bf16.msra.mxu0 %v2956
    %3604 = vmatprep.subr.bf16.mxu0 0
    %3605 = vmatpush1.bf16.msra.mxu0 0
    %3606 = vmatprep.subr.bf16.mxu0 0
    %3607 = vmatpush1.bf16.msra.mxu0 0
    %3608 = vmatprep.subr.bf16.mxu0 0
    %3609 = vmatpush1.bf16.msra.mxu0 0
    %3610 = vmatprep.subr.bf16.mxu0 0
    %3611 = vmatpush1.bf16.msra.mxu0 0
    %3612 = vmatprep.subr.bf16.mxu0 0
    %3613 = vmatpush1.bf16.msra.mxu0 0
    %3614 = vmatprep.subr.bf16.mxu0 0
    %3615 = vmatpush1.bf16.msra.mxu0 0
    %3616 = vmatprep.subr.bf16.mxu0 0
    %3617 = vmatpush1.bf16.msra.mxu0 0
    %3618 = vmatprep.subr.bf16.mxu0 0
    %3619 = vmatpush1.bf16.msra.mxu0 0
    %3620 = vmatprep.subr.bf16.mxu0 0
    %3621 = vmatpush1.bf16.msra.mxu0 0
    %3622 = vmatprep.subr.bf16.mxu0 0
    %3623 = vmatpush1.bf16.msra.mxu0 0
    %3624 = vmatprep.subr.bf16.mxu0 0
    %3625 = vmatpush1.bf16.msra.mxu0 0
    %3626 = vmatprep.subr.bf16.mxu0 0
    %3627 = vmatpush1.bf16.msra.mxu0 0
    %3628 = vmatprep.subr.bf16.mxu0 0
    %3629 = vmatpush1.bf16.msra.mxu0 0
    %3630 = vmatprep.subr.bf16.mxu0 0
    %3631 = vmatpush1.bf16.msra.mxu0 0
    %3632 = vmatprep.subr.bf16.mxu0 0
    %3633 = vmatpush1.bf16.msra.mxu0 0
    %3634 = vmatprep.mubr.bf16.mxu0 0
    %3635 = vmatmul.mubr.bf16.gmra.mrb[0].mxu0 %v3600
    %v3636 = vpop.f32.mrb[0].mxu0
    %v3637 = vadd.f32 0.0, %v3636
    %v3638 = vpop.f32.mrb[0].mxu0
    %v3639 = vpop.f32.mrb[0].mxu0
    %v3640 = vadd.f32 0.0, %v3639
    %v3641 = vpop.f32.mrb[0].mxu0
    %3642 = vdwg.mxu0
    %v3644 = vsel %vm1252, %v3549, 0
    %3646 = vmatprep.subr.bf16.mxu0 0
    %3647 = vmatpush1.bf16.msra.mxu0 %v2957
    %3648 = vmatprep.subr.bf16.mxu0 0
    %3649 = vmatpush1.bf16.msra.mxu0 0
    %3650 = vmatprep.subr.bf16.mxu0 0
    %3651 = vmatpush1.bf16.msra.mxu0 0
    %3652 = vmatprep.subr.bf16.mxu0 0
    %3653 = vmatpush1.bf16.msra.mxu0 0
    %3654 = vmatprep.subr.bf16.mxu0 0
    %3655 = vmatpush1.bf16.msra.mxu0 0
    %3656 = vmatprep.subr.bf16.mxu0 0
    %3657 = vmatpush1.bf16.msra.mxu0 0
    %3658 = vmatprep.subr.bf16.mxu0 0
    %3659 = vmatpush1.bf16.msra.mxu0 0
    %3660 = vmatprep.subr.bf16.mxu0 0
    %3661 = vmatpush1.bf16.msra.mxu0 0
    %3662 = vmatprep.subr.bf16.mxu0 0
    %3663 = vmatpush1.bf16.msra.mxu0 0
    %3664 = vmatprep.subr.bf16.mxu0 0
    %3665 = vmatpush1.bf16.msra.mxu0 0
    %3666 = vmatprep.subr.bf16.mxu0 0
    %3667 = vmatpush1.bf16.msra.mxu0 0
    %3668 = vmatprep.subr.bf16.mxu0 0
    %3669 = vmatpush1.bf16.msra.mxu0 0
    %3670 = vmatprep.subr.bf16.mxu0 0
    %3671 = vmatpush1.bf16.msra.mxu0 0
    %3672 = vmatprep.subr.bf16.mxu0 0
    %3673 = vmatpush1.bf16.msra.mxu0 0
    %3674 = vmatprep.subr.bf16.mxu0 0
    %3675 = vmatpush1.bf16.msra.mxu0 0
    %3676 = vmatprep.subr.bf16.mxu0 0
    %3677 = vmatpush1.bf16.msra.mxu0 0
    %3678 = vmatprep.mubr.bf16.mxu0 0
    %3679 = vmatmul.mubr.bf16.gmra.mrb[0].mxu0 %v3644
    %v3680 = vpop.f32.mrb[0].mxu0
    %v3681 = vadd.f32 0.0, %v3680
    %v3682 = vpop.f32.mrb[0].mxu0
    %v3683 = vpop.f32.mrb[0].mxu0
    %v3684 = vadd.f32 0.0, %v3683
    %v3685 = vpop.f32.mrb[0].mxu0
    %3686 = vdwg.mxu0
    %v3688 = vsel %vm1252, %v3550, 0
    %3690 = vmatprep.subr.bf16.mxu0 0
    %3691 = vmatpush1.bf16.msra.mxu0 %v2958
    %3692 = vmatprep.subr.bf16.mxu0 0
    %3693 = vmatpush1.bf16.msra.mxu0 0
    %3694 = vmatprep.subr.bf16.mxu0 0
    %3695 = vmatpush1.bf16.msra.mxu0 0
    %3696 = vmatprep.subr.bf16.mxu0 0
    %3697 = vmatpush1.bf16.msra.mxu0 0
    %3698 = vmatprep.subr.bf16.mxu0 0
    %3699 = vmatpush1.bf16.msra.mxu0 0
    %3700 = vmatprep.subr.bf16.mxu0 0
    %3701 = vmatpush1.bf16.msra.mxu0 0
    %3702 = vmatprep.subr.bf16.mxu0 0
    %3703 = vmatpush1.bf16.msra.mxu0 0
    %3704 = vmatprep.subr.bf16.mxu0 0
    %3705 = vmatpush1.bf16.msra.mxu0 0
    %3706 = vmatprep.subr.bf16.mxu0 0
    %3707 = vmatpush1.bf16.msra.mxu0 0
    %3708 = vmatprep.subr.bf16.mxu0 0
    %3709 = vmatpush1.bf16.msra.mxu0 0
    %3710 = vmatprep.subr.bf16.mxu0 0
    %3711 = vmatpush1.bf16.msra.mxu0 0
    %3712 = vmatprep.subr.bf16.mxu0 0
    %3713 = vmatpush1.bf16.msra.mxu0 0
    %3714 = vmatprep.subr.bf16.mxu0 0
    %3715 = vmatpush1.bf16.msra.mxu0 0
    %3716 = vmatprep.subr.bf16.mxu0 0
    %3717 = vmatpush1.bf16.msra.mxu0 0
    %3718 = vmatprep.subr.bf16.mxu0 0
    %3719 = vmatpush1.bf16.msra.mxu0 0
    %3720 = vmatprep.subr.bf16.mxu0 0
    %3721 = vmatpush1.bf16.msra.mxu0 0
    %3722 = vmatprep.mubr.bf16.mxu0 0
    %3723 = vmatmul.mubr.bf16.gmra.mrb[0].mxu0 %v3688
    %v3724 = vpop.f32.mrb[0].mxu0
    %v3725 = vadd.f32 0.0, %v3724
    %v3726 = vpop.f32.mrb[0].mxu0
    %v3727 = vpop.f32.mrb[0].mxu0
    %v3728 = vadd.f32 0.0, %v3727
    %v3729 = vpop.f32.mrb[0].mxu0
    %3730 = vdwg.mxu0
    %v3732 = vsel %vm1252, %v3551, 0
    %3734 = vmatprep.subr.bf16.mxu0 0
    %3735 = vmatpush1.bf16.msra.mxu0 %v2959
    %3736 = vmatprep.subr.bf16.mxu0 0
    %3737 = vmatpush1.bf16.msra.mxu0 0
    %3738 = vmatprep.subr.bf16.mxu0 0
    %3739 = vmatpush1.bf16.msra.mxu0 0
    %3740 = vmatprep.subr.bf16.mxu0 0
    %3741 = vmatpush1.bf16.msra.mxu0 0
    %3742 = vmatprep.subr.bf16.mxu0 0
    %3743 = vmatpush1.bf16.msra.mxu0 0
    %3744 = vmatprep.subr.bf16.mxu0 0
    %3745 = vmatpush1.bf16.msra.mxu0 0
    %3746 = vmatprep.subr.bf16.mxu0 0
    %3747 = vmatpush1.bf16.msra.mxu0 0
    %3748 = vmatprep.subr.bf16.mxu0 0
    %3749 = vmatpush1.bf16.msra.mxu0 0
    %3750 = vmatprep.subr.bf16.mxu0 0
    %3751 = vmatpush1.bf16.msra.mxu0 0
    %3752 = vmatprep.subr.bf16.mxu0 0
    %3753 = vmatpush1.bf16.msra.mxu0 0
    %3754 = vmatprep.subr.bf16.mxu0 0
    %3755 = vmatpush1.bf16.msra.mxu0 0
    %3756 = vmatprep.subr.bf16.mxu0 0
    %3757 = vmatpush1.bf16.msra.mxu0 0
    %3758 = vmatprep.subr.bf16.mxu0 0
    %3759 = vmatpush1.bf16.msra.mxu0 0
    %3760 = vmatprep.subr.bf16.mxu0 0
    %3761 = vmatpush1.bf16.msra.mxu0 0
    %3762 = vmatprep.subr.bf16.mxu0 0
    %3763 = vmatpush1.bf16.msra.mxu0 0
    %3764 = vmatprep.subr.bf16.mxu0 0
    %3765 = vmatpush1.bf16.msra.mxu0 0
    %3766 = vmatprep.mubr.bf16.mxu0 0
    %3767 = vmatmul.mubr.bf16.gmra.mrb[0].mxu0 %v3732
    %v3768 = vpop.f32.mrb[0].mxu0
    %v3769 = vadd.f32 0.0, %v3768
    %v3770 = vpop.f32.mrb[0].mxu0
    %v3771 = vpop.f32.mrb[0].mxu0
    %v3772 = vadd.f32 0.0, %v3771
    %v3773 = vpop.f32.mrb[0].mxu0
    %3774 = vdwg.mxu0
    %v3776 = vsel %vm1252, %v3552, 0
    %3778 = vmatprep.subr.bf16.mxu0 0
    %3779 = vmatpush1.bf16.msra.mxu0 %v2960
    %3780 = vmatprep.subr.bf16.mxu0 0
    %3781 = vmatpush1.bf16.msra.mxu0 0
    %3782 = vmatprep.subr.bf16.mxu0 0
    %3783 = vmatpush1.bf16.msra.mxu0 0
    %3784 = vmatprep.subr.bf16.mxu0 0
    %3785 = vmatpush1.bf16.msra.mxu0 0
    %3786 = vmatprep.subr.bf16.mxu0 0
    %3787 = vmatpush1.bf16.msra.mxu0 0
    %3788 = vmatprep.subr.bf16.mxu0 0
    %3789 = vmatpush1.bf16.msra.mxu0 0
    %3790 = vmatprep.subr.bf16.mxu0 0
    %3791 = vmatpush1.bf16.msra.mxu0 0
    %3792 = vmatprep.subr.bf16.mxu0 0
    %3793 = vmatpush1.bf16.msra.mxu0 0
    %3794 = vmatprep.subr.bf16.mxu0 0
    %3795 = vmatpush1.bf16.msra.mxu0 0
    %3796 = vmatprep.subr.bf16.mxu0 0
    %3797 = vmatpush1.bf16.msra.mxu0 0
    %3798 = vmatprep.subr.bf16.mxu0 0
    %3799 = vmatpush1.bf16.msra.mxu0 0
    %3800 = vmatprep.subr.bf16.mxu0 0
    %3801 = vmatpush1.bf16.msra.mxu0 0
    %3802 = vmatprep.subr.bf16.mxu0 0
    %3803 = vmatpush1.bf16.msra.mxu0 0
    %3804 = vmatprep.subr.bf16.mxu0 0
    %3805 = vmatpush1.bf16.msra.mxu0 0
    %3806 = vmatprep.subr.bf16.mxu0 0
    %3807 = vmatpush1.bf16.msra.mxu0 0
    %3808 = vmatprep.subr.bf16.mxu0 0
    %3809 = vmatpush1.bf16.msra.mxu0 0
    %3810 = vmatprep.mubr.bf16.mxu0 0
    %3811 = vmatmul.mubr.bf16.gmra.mrb[0].mxu0 %v3776
    %v3812 = vpop.f32.mrb[0].mxu0
    %v3813 = vadd.f32 0.0, %v3812
    %v3814 = vpop.f32.mrb[0].mxu0
    %v3815 = vpop.f32.mrb[0].mxu0
    %v3816 = vadd.f32 0.0, %v3815
    %v3817 = vpop.f32.mrb[0].mxu0
    %3818 = vdwg.mxu0
    %v3820 = vsel %vm1252, %v3553, 0
    %3822 = vmatprep.subr.bf16.mxu0 0
    %3823 = vmatpush1.bf16.msra.mxu0 %v2961
    %3824 = vmatprep.subr.bf16.mxu0 0
    %3825 = vmatpush1.bf16.msra.mxu0 0
    %3826 = vmatprep.subr.bf16.mxu0 0
    %3827 = vmatpush1.bf16.msra.mxu0 0
    %3828 = vmatprep.subr.bf16.mxu0 0
    %3829 = vmatpush1.bf16.msra.mxu0 0
    %3830 = vmatprep.subr.bf16.mxu0 0
    %3831 = vmatpush1.bf16.msra.mxu0 0
    %3832 = vmatprep.subr.bf16.mxu0 0
    %3833 = vmatpush1.bf16.msra.mxu0 0
    %3834 = vmatprep.subr.bf16.mxu0 0
    %3835 = vmatpush1.bf16.msra.mxu0 0
    %3836 = vmatprep.subr.bf16.mxu0 0
    %3837 = vmatpush1.bf16.msra.mxu0 0
    %3838 = vmatprep.subr.bf16.mxu0 0
    %3839 = vmatpush1.bf16.msra.mxu0 0
    %3840 = vmatprep.subr.bf16.mxu0 0
    %3841 = vmatpush1.bf16.msra.mxu0 0
    %3842 = vmatprep.subr.bf16.mxu0 0
    %3843 = vmatpush1.bf16.msra.mxu0 0
    %3844 = vmatprep.subr.bf16.mxu0 0
    %3845 = vmatpush1.bf16.msra.mxu0 0
    %3846 = vmatprep.subr.bf16.mxu0 0
    %3847 = vmatpush1.bf16.msra.mxu0 0
    %3848 = vmatprep.subr.bf16.mxu0 0
    %3849 = vmatpush1.bf16.msra.mxu0 0
    %3850 = vmatprep.subr.bf16.mxu0 0
    %3851 = vmatpush1.bf16.msra.mxu0 0
    %3852 = vmatprep.subr.bf16.mxu0 0
    %3853 = vmatpush1.bf16.msra.mxu0 0
    %3854 = vmatprep.mubr.bf16.mxu0 0
    %3855 = vmatmul.mubr.bf16.gmra.mrb[0].mxu0 %v3820
    %v3856 = vpop.f32.mrb[0].mxu0
    %v3857 = vadd.f32 0.0, %v3856
    %v3858 = vpop.f32.mrb[0].mxu0
    %v3859 = vpop.f32.mrb[0].mxu0
    %v3860 = vadd.f32 0.0, %v3859
    %v3861 = vpop.f32.mrb[0].mxu0
    %3862 = vdwg.mxu0
    %v3864 = vsel %vm1252, %v3554, 0
    %3866 = vmatprep.subr.bf16.mxu0 0
    %3867 = vmatpush1.bf16.msra.mxu0 %v2962
    %3868 = vmatprep.subr.bf16.mxu0 0
    %3869 = vmatpush1.bf16.msra.mxu0 0
    %3870 = vmatprep.subr.bf16.mxu0 0
    %3871 = vmatpush1.bf16.msra.mxu0 0
    %3872 = vmatprep.subr.bf16.mxu0 0
    %3873 = vmatpush1.bf16.msra.mxu0 0
    %3874 = vmatprep.subr.bf16.mxu0 0
    %3875 = vmatpush1.bf16.msra.mxu0 0
    %3876 = vmatprep.subr.bf16.mxu0 0
    %3877 = vmatpush1.bf16.msra.mxu0 0
    %3878 = vmatprep.subr.bf16.mxu0 0
    %3879 = vmatpush1.bf16.msra.mxu0 0
    %3880 = vmatprep.subr.bf16.mxu0 0
    %3881 = vmatpush1.bf16.msra.mxu0 0
    %3882 = vmatprep.subr.bf16.mxu0 0
    %3883 = vmatpush1.bf16.msra.mxu0 0
    %3884 = vmatprep.subr.bf16.mxu0 0
    %3885 = vmatpush1.bf16.msra.mxu0 0
    %3886 = vmatprep.subr.bf16.mxu0 0
    %3887 = vmatpush1.bf16.msra.mxu0 0
    %3888 = vmatprep.subr.bf16.mxu0 0
    %3889 = vmatpush1.bf16.msra.mxu0 0
    %3890 = vmatprep.subr.bf16.mxu0 0
    %3891 = vmatpush1.bf16.msra.mxu0 0
    %3892 = vmatprep.subr.bf16.mxu0 0
    %3893 = vmatpush1.bf16.msra.mxu0 0
    %3894 = vmatprep.subr.bf16.mxu0 0
    %3895 = vmatpush1.bf16.msra.mxu0 0
    %3896 = vmatprep.subr.bf16.mxu0 0
    %3897 = vmatpush1.bf16.msra.mxu0 0
    %3898 = vmatprep.mubr.bf16.mxu0 0
    %3899 = vmatmul.mubr.bf16.gmra.mrb[0].mxu0 %v3864
    %v3900 = vpop.f32.mrb[0].mxu0
    %v3901 = vadd.f32 0.0, %v3900
    %v3902 = vpop.f32.mrb[0].mxu0
    %v3903 = vpop.f32.mrb[0].mxu0
    %v3904 = vadd.f32 0.0, %v3903
    %v3905 = vpop.f32.mrb[0].mxu0
    %3906 = vdwg.mxu0
    %3909 = vrot.lane.b32.xlu0 %v3637, 32
    %v3910 = vpop.permute.xlu0 %3909
    %3911 = vrot.lane.b32.xlu0 %v3640, 32
    %v3912 = vpop.permute.xlu0 %3911
    %3917 = vrot.lane.b32.xlu0 %v3681, 64
    %v3918 = vpop.permute.xlu0 %3917
    %3919 = vrot.lane.b32.xlu0 %v3684, 64
    %v3920 = vpop.permute.xlu0 %3919
    %3925 = vrot.lane.b32.xlu0 %v3725, 96
    %v3926 = vpop.permute.xlu0 %3925
    %3927 = vrot.lane.b32.xlu0 %v3728, 96
    %v3928 = vpop.permute.xlu0 %3927
    %v3931 = vsel %vm795, %v3593, %v3910
    %v3932 = vsel %vm795, %v3596, %v3912
    %v3933 = vsel %vm1815, %v3931, %v3918
    %v3934 = vsel %vm1815, %v3932, %v3920
    %v3935 = vsel %vm1818, %v3933, %v3926
    %v3936 = vsel %vm1818, %v3934, %v3928
    %3939 = vrot.lane.b32.xlu0 %v3813, 32
    %v3940 = vpop.permute.xlu0 %3939
    %3941 = vrot.lane.b32.xlu0 %v3816, 32
    %v3942 = vpop.permute.xlu0 %3941
    %3947 = vrot.lane.b32.xlu0 %v3857, 64
    %v3948 = vpop.permute.xlu0 %3947
    %3949 = vrot.lane.b32.xlu0 %v3860, 64
    %v3950 = vpop.permute.xlu0 %3949
    %3955 = vrot.lane.b32.xlu0 %v3901, 96
    %v3956 = vpop.permute.xlu0 %3955
    %3957 = vrot.lane.b32.xlu0 %v3904, 96
    %v3958 = vpop.permute.xlu0 %3957
    %v3961 = vsel %vm795, %v3769, %v3940
    %v3962 = vsel %vm795, %v3772, %v3942
    %v3963 = vsel %vm1815, %v3961, %v3948
    %v3964 = vsel %vm1815, %v3962, %v3950
    %v3965 = vsel %vm1818, %v3963, %v3956
    %v3966 = vsel %vm1818, %v3964, %v3958
    %v3967 = vpack.c.bf16 %v3936, %v3935
    %v3968 = vpack.c.bf16 %v3966, %v3965
    %s3969 = scalar_lea.vmem [#allocation13], 64
    %v3970 = vld [vmem:[%s3969] sm:$0xf]
    %v3971 = vld [vmem:[%s3969 + $0x4] sm:$0xf]
    %v3972 = vld [vmem:[%s3969 + $0x8] sm:$0xf]
    %v3973 = vld [vmem:[%s3969 + $0xc] sm:$0xf]
    %v3974 = vld [vmem:[%s3969 + $0x10] sm:$0xf]
    %v3975 = vld [vmem:[%s3969 + $0x14] sm:$0xf]
    %v3976 = vld [vmem:[%s3969 + $0x18] sm:$0xf]
    %v3977 = vld [vmem:[%s3969 + $0x1c] sm:$0xf]
    %v3978 = vld [vmem:[%s3969 + $0x20] sm:$0xf]
    %v3979 = vld [vmem:[%s3969 + $0x24] sm:$0xf]
    %v3980 = vld [vmem:[%s3969 + $0x28] sm:$0xf]
    %v3981 = vld [vmem:[%s3969 + $0x2c] sm:$0xf]
    %v3982 = vld [vmem:[%s3969 + $0x30] sm:$0xf]
    %v3983 = vld [vmem:[%s3969 + $0x34] sm:$0xf]
    %v3984 = vld [vmem:[%s3969 + $0x38] sm:$0xf]
    %v3985 = vld [vmem:[%s3969 + $0x3c] sm:$0xf]
    %s3986 = scalar_lea.vmem [#allocation14], 1
    %v3987 = vld [vmem:[%s3986] sm:$0x1]
    %v3989 = vlaneseq
    %v3990 = vshrl.u32 %v3989, 7
    %v3991 = vsub.s32 0, %v3990
    %v3992 = vrot.slane %v3987, %v3991
    %v4010 = vunpack.c.l.b16 %v3970
    %v4011 = vunpack.c.l.b16 %v3971
    %v4012 = vunpack.c.l.b16 %v3972
    %v4013 = vunpack.c.l.b16 %v3973
    %v4014 = vunpack.c.l.b16 %v3974
    %v4015 = vunpack.c.l.b16 %v3975
    %v4016 = vunpack.c.l.b16 %v3976
    %v4017 = vunpack.c.l.b16 %v3977
    %v4018 = vunpack.c.l.b16 %v3978
    %v4019 = vunpack.c.l.b16 %v3979
    %v4020 = vunpack.c.l.b16 %v3980
    %v4021 = vunpack.c.l.b16 %v3981
    %v4022 = vunpack.c.l.b16 %v3982
    %v4023 = vunpack.c.l.b16 %v3983
    %v4024 = vunpack.c.l.b16 %v3984
    %v4025 = vunpack.c.l.b16 %v3985
    %v4026 = vpack.c.b16 %v4011, %v4010
    %v4027 = vpack.c.b16 %v4013, %v4012
    %v4028 = vpack.c.b16 %v4015, %v4014
    %v4029 = vpack.c.b16 %v4017, %v4016
    %v4030 = vpack.c.b16 %v4019, %v4018
    %v4031 = vpack.c.b16 %v4021, %v4020
    %v4032 = vpack.c.b16 %v4023, %v4022
    %v4033 = vpack.c.b16 %v4025, %v4024
    %4042 = vmatprep.subr.bf16.mxu0 0
    %4043 = vmatpush1.bf16.msra.mxu0 %v4026
    %4044 = vmatprep.subr.bf16.mxu0 0
    %4045 = vmatpush1.bf16.msra.mxu0 %v4027
    %4046 = vmatprep.subr.bf16.mxu0 0
    %4047 = vmatpush1.bf16.msra.mxu0 %v4028
    %4048 = vmatprep.subr.bf16.mxu0 0
    %4049 = vmatpush1.bf16.msra.mxu0 %v4029
    %4050 = vmatprep.subr.bf16.mxu0 0
    %4051 = vmatpush1.bf16.msra.mxu0 %v4030
    %4052 = vmatprep.subr.bf16.mxu0 0
    %4053 = vmatpush1.bf16.msra.mxu0 %v4031
    %4054 = vmatprep.subr.bf16.mxu0 0
    %4055 = vmatpush1.bf16.msra.mxu0 %v4032
    %4056 = vmatprep.subr.bf16.mxu0 0
    %4057 = vmatpush1.bf16.msra.mxu0 %v4033
    %4058 = vmatprep.subr.bf16.mxu0 0
    %4059 = vmatpush1.bf16.msra.mxu0 0
    %4060 = vmatprep.subr.bf16.mxu0 0
    %4061 = vmatpush1.bf16.msra.mxu0 0
    %4062 = vmatprep.subr.bf16.mxu0 0
    %4063 = vmatpush1.bf16.msra.mxu0 0
    %4064 = vmatprep.subr.bf16.mxu0 0
    %4065 = vmatpush1.bf16.msra.mxu0 0
    %4066 = vmatprep.subr.bf16.mxu0 0
    %4067 = vmatpush1.bf16.msra.mxu0 0
    %4068 = vmatprep.subr.bf16.mxu0 0
    %4069 = vmatpush1.bf16.msra.mxu0 0
    %4070 = vmatprep.subr.bf16.mxu0 0
    %4071 = vmatpush1.bf16.msra.mxu0 0
    %4072 = vmatprep.subr.bf16.mxu0 0
    %4073 = vmatpush1.bf16.msra.mxu0 0
    %4074 = vmatprep.mubr.bf16.mxu0 0
    %4075 = vmatmul.mubr.bf16.gmra.mrb[0].mxu0 %v3967
    %v4076 = vpop.f32.mrb[0].mxu0
    %v4077 = vadd.f32 %v3992, %v4076
    %v4078 = vpop.f32.mrb[0].mxu0
    %v4079 = vpop.f32.mrb[0].mxu0
    %v4080 = vadd.f32 %v3992, %v4079
    %v4081 = vpop.f32.mrb[0].mxu0
    %4082 = vmatprep.mubr.bf16.mxu0 0
    %4083 = vmatmul.mubr.bf16.gmra.mrb[0].mxu0 %v3968
    %v4084 = vpop.f32.mrb[0].mxu0
    %v4085 = vadd.f32 %v3992, %v4084
    %v4086 = vpop.f32.mrb[0].mxu0
    %v4087 = vpop.f32.mrb[0].mxu0
    %v4088 = vadd.f32 %v3992, %v4087
    %v4089 = vpop.f32.mrb[0].mxu0
    %4090 = vdwg.mxu0
    %v4091 = vadd.f32 %v4077, %v2532
    %v4092 = vadd.f32 %v4080, %v2533
    %v4093 = vadd.f32 %v4085, %v2534
    %v4094 = vadd.f32 %v4088, %v2535
    %s4095 = scalar_lea.vmem [#allocation16], 1
    %v4096 = vld [vmem:[%s4095] sm:$0x1]
    %s4097 = scalar_lea.vmem [#allocation17], 1
    %v4098 = vld [vmem:[%s4097] sm:$0x1]
    %4099 = vadd.xlane.f32.xlu0 %v4091
    %v4100 = vpop.xlane.xlu0 %4099
    %4101 = vadd.xlane.f32.xlu0 %v4092
    %v4102 = vpop.xlane.xlu0 %4101
    %4103 = vadd.xlane.f32.xlu0 %v4093
    %v4104 = vpop.xlane.xlu0 %4103
    %4105 = vadd.xlane.f32.xlu0 %v4094
    %v4106 = vpop.xlane.xlu0 %4105
    %v4107 = vmul.f32 %v4100, %v305
    %v4108 = vmul.f32 %v4102, %v305
    %v4109 = vmul.f32 %v4104, %v305
    %v4110 = vmul.f32 %v4106, %v305
    %v4111 = vsub.f32 %v4091, %v4107
    %v4112 = vsub.f32 %v4092, %v4108
    %v4113 = vsub.f32 %v4093, %v4109
    %v4114 = vsub.f32 %v4094, %v4110
    %v4115 = vmul.f32 %v4111, %v4111
    %v4116 = vmul.f32 %v4112, %v4112
    %v4117 = vmul.f32 %v4113, %v4113
    %v4118 = vmul.f32 %v4114, %v4114
    %4119 = vadd.xlane.f32.xlu0 %v4115
    %v4120 = vpop.xlane.xlu0 %4119
    %4121 = vadd.xlane.f32.xlu0 %v4116
    %v4122 = vpop.xlane.xlu0 %4121
    %4123 = vadd.xlane.f32.xlu0 %v4117
    %v4124 = vpop.xlane.xlu0 %4123
    %4125 = vadd.xlane.f32.xlu0 %v4118
    %v4126 = vpop.xlane.xlu0 %4125
    %v4127 = vmul.f32 %v4120, %v305
    %v4128 = vmul.f32 %v4122, %v305
    %v4129 = vmul.f32 %v4124, %v305
    %v4130 = vmul.f32 %v4126, %v305
    %v4131 = vadd.f32 %v4127, 1e-12
    %v4132 = vadd.f32 %v4128, 1e-12
    %v4133 = vadd.f32 %v4129, 1e-12
    %v4134 = vadd.f32 %v4130, 1e-12
    %v4135 = vrsqrt.pop %v4131
    %v4136 = vrsqrt.pop %v4132
    %v4137 = vrsqrt.pop %v4133
    %v4138 = vrsqrt.pop %v4134
    %v4139 = vmul.f32 %v4111, %v4135
    %v4140 = vmul.f32 %v4112, %v4136
    %v4141 = vmul.f32 %v4113, %v4137
    %v4142 = vmul.f32 %v4114, %v4138
    %v4144 = vlaneseq
    %v4145 = vshrl.u32 %v4144, 7
    %v4146 = vsub.s32 0, %v4145
    %v4147 = vrot.slane %v4096, %v4146
    %v4149 = vmul.f32 %v4139, %v4147
    %v4150 = vmul.f32 %v4140, %v4147
    %v4151 = vmul.f32 %v4141, %v4147
    %v4152 = vmul.f32 %v4142, %v4147
    %v4154 = vlaneseq
    %v4155 = vshrl.u32 %v4154, 7
    %v4156 = vsub.s32 0, %v4155
    %v4157 = vrot.slane %v4098, %v4156
    %v4159 = vadd.f32 %v4149, %v4157
    %v4160 = vadd.f32 %v4150, %v4157
    %v4161 = vadd.f32 %v4151, %v4157
    %v4162 = vadd.f32 %v4152, %v4157
    %v4163 = vpack.c.bf16 %v4160, %v4159
    %v4164 = vpack.c.bf16 %v4162, %v4161
    %s4165 = scalar_lea.vmem [#allocation19], 128
    %v4166 = vld [vmem:[%s4165] sm:$0xff]
    %v4167 = vld [vmem:[%s4165 + $0x8] sm:$0xff]
    %v4168 = vld [vmem:[%s4165 + $0x10] sm:$0xff]
    %v4169 = vld [vmem:[%s4165 + $0x18] sm:$0xff]
    %v4170 = vld [vmem:[%s4165 + $0x20] sm:$0xff]
    %v4171 = vld [vmem:[%s4165 + $0x28] sm:$0xff]
    %v4172 = vld [vmem:[%s4165 + $0x30] sm:$0xff]
    %v4173 = vld [vmem:[%s4165 + $0x38] sm:$0xff]
    %v4174 = vld [vmem:[%s4165 + $0x40] sm:$0xff]
    %v4175 = vld [vmem:[%s4165 + $0x48] sm:$0xff]
    %v4176 = vld [vmem:[%s4165 + $0x50] sm:$0xff]
    %v4177 = vld [vmem:[%s4165 + $0x58] sm:$0xff]
    %v4178 = vld [vmem:[%s4165 + $0x60] sm:$0xff]
    %v4179 = vld [vmem:[%s4165 + $0x68] sm:$0xff]
    %v4180 = vld [vmem:[%s4165 + $0x70] sm:$0xff]
    %v4181 = vld [vmem:[%s4165 + $0x78] sm:$0xff]
    %s4182 = scalar_lea.vmem %s11, 2
    %v4183 = vld [vmem:[%s4182] sm:$0x3]
    %v4185 = vlaneseq
    %v4186 = vshrl.u32 %v4185, 7
    %v4187 = vsub.s32 0, %v4186
    %v4188 = vrot.slane %v4183, %v4187
    %v4189 = vlaneseq
    %v4190 = vshrl.u32 %v4189, 7
    %v4191 = vsub.s32 1, %v4190
    %v4192 = vrot.slane %v4183, %v4191
    %v4211 = vunpack.c.l.b16 %v4166
    %v4212 = vunpack.c.h.b16 %v4166
    %v4213 = vunpack.c.l.b16 %v4167
    %v4214 = vunpack.c.h.b16 %v4167
    %v4215 = vunpack.c.l.b16 %v4168
    %v4216 = vunpack.c.h.b16 %v4168
    %v4217 = vunpack.c.l.b16 %v4169
    %v4218 = vunpack.c.h.b16 %v4169
    %v4219 = vunpack.c.l.b16 %v4170
    %v4220 = vunpack.c.h.b16 %v4170
    %v4221 = vunpack.c.l.b16 %v4171
    %v4222 = vunpack.c.h.b16 %v4171
    %v4223 = vunpack.c.l.b16 %v4172
    %v4224 = vunpack.c.h.b16 %v4172
    %v4225 = vunpack.c.l.b16 %v4173
    %v4226 = vunpack.c.h.b16 %v4173
    %v4227 = vunpack.c.l.b16 %v4174
    %v4228 = vunpack.c.h.b16 %v4174
    %v4229 = vunpack.c.l.b16 %v4175
    %v4230 = vunpack.c.h.b16 %v4175
    %v4231 = vunpack.c.l.b16 %v4176
    %v4232 = vunpack.c.h.b16 %v4176
    %v4233 = vunpack.c.l.b16 %v4177
    %v4234 = vunpack.c.h.b16 %v4177
    %v4235 = vunpack.c.l.b16 %v4178
    %v4236 = vunpack.c.h.b16 %v4178
    %v4237 = vunpack.c.l.b16 %v4179
    %v4238 = vunpack.c.h.b16 %v4179
    %v4239 = vunpack.c.l.b16 %v4180
    %v4240 = vunpack.c.h.b16 %v4180
    %v4241 = vunpack.c.l.b16 %v4181
    %v4242 = vunpack.c.h.b16 %v4181
    %v4243 = vpack.c.b16 %v4213, %v4211
    %v4244 = vpack.c.b16 %v4214, %v4212
    %v4245 = vpack.c.b16 %v4217, %v4215
    %v4246 = vpack.c.b16 %v4218, %v4216
    %v4247 = vpack.c.b16 %v4221, %v4219
    %v4248 = vpack.c.b16 %v4222, %v4220
    %v4249 = vpack.c.b16 %v4225, %v4223
    %v4250 = vpack.c.b16 %v4226, %v4224
    %v4251 = vpack.c.b16 %v4229, %v4227
    %v4252 = vpack.c.b16 %v4230, %v4228
    %v4253 = vpack.c.b16 %v4233, %v4231
    %v4254 = vpack.c.b16 %v4234, %v4232
    %v4255 = vpack.c.b16 %v4237, %v4235
    %v4256 = vpack.c.b16 %v4238, %v4236
    %v4257 = vpack.c.b16 %v4241, %v4239
    %v4258 = vpack.c.b16 %v4242, %v4240
    %4275 = vmatprep.subr.bf16.mxu0 %v4244
    %4276 = vmatpush1.bf16.msra.mxu0 %v4243
    %4277 = vmatprep.subr.bf16.mxu0 %v4246
    %4278 = vmatpush1.bf16.msra.mxu0 %v4245
    %4279 = vmatprep.subr.bf16.mxu0 %v4248
    %4280 = vmatpush1.bf16.msra.mxu0 %v4247
    %4281 = vmatprep.subr.bf16.mxu0 %v4250
    %4282 = vmatpush1.bf16.msra.mxu0 %v4249
    %4283 = vmatprep.subr.bf16.mxu0 %v4252
    %4284 = vmatpush1.bf16.msra.mxu0 %v4251
    %4285 = vmatprep.subr.bf16.mxu0 %v4254
    %4286 = vmatpush1.bf16.msra.mxu0 %v4253
    %4287 = vmatprep.subr.bf16.mxu0 %v4256
    %4288 = vmatpush1.bf16.msra.mxu0 %v4255
    %4289 = vmatprep.subr.bf16.mxu0 %v4258
    %4290 = vmatpush1.bf16.msra.mxu0 %v4257
    %4291 = vmatprep.subr.bf16.mxu0 0
    %4292 = vmatpush1.bf16.msra.mxu0 0
    %4293 = vmatprep.subr.bf16.mxu0 0
    %4294 = vmatpush1.bf16.msra.mxu0 0
    %4295 = vmatprep.subr.bf16.mxu0 0
    %4296 = vmatpush1.bf16.msra.mxu0 0
    %4297 = vmatprep.subr.bf16.mxu0 0
    %4298 = vmatpush1.bf16.msra.mxu0 0
    %4299 = vmatprep.subr.bf16.mxu0 0
    %4300 = vmatpush1.bf16.msra.mxu0 0
    %4301 = vmatprep.subr.bf16.mxu0 0
    %4302 = vmatpush1.bf16.msra.mxu0 0
    %4303 = vmatprep.subr.bf16.mxu0 0
    %4304 = vmatpush1.bf16.msra.mxu0 0
    %4305 = vmatprep.subr.bf16.mxu0 0
    %4306 = vmatpush1.bf16.msra.mxu0 0
    %4307 = vmatprep.mubr.bf16.mxu0 0
    %4308 = vmatmul.mubr.bf16.gmra.mrb[0].mxu0 %v4163
    %v4309 = vpop.f32.mrb[0].mxu0
    %v4310 = vadd.f32 %v4188, %v4309
    %v4311 = vpop.f32.mrb[0].mxu0
    %v4312 = vadd.f32 %v4192, %v4311
    %v4313 = vpop.f32.mrb[0].mxu0
    %v4314 = vadd.f32 %v4188, %v4313
    %v4315 = vpop.f32.mrb[0].mxu0
    %v4316 = vadd.f32 %v4192, %v4315
    %4317 = vmatprep.mubr.bf16.mxu0 0
    %4318 = vmatmul.mubr.bf16.gmra.mrb[0].mxu0 %v4164
    %v4319 = vpop.f32.mrb[0].mxu0
    %v4320 = vadd.f32 %v4188, %v4319
    %v4321 = vpop.f32.mrb[0].mxu0
    %v4322 = vadd.f32 %v4192, %v4321
    %v4323 = vpop.f32.mrb[0].mxu0
    %v4324 = vadd.f32 %v4188, %v4323
    %v4325 = vpop.f32.mrb[0].mxu0
    %v4326 = vadd.f32 %v4192, %v4325
    %4327 = vdwg.mxu0
    %v4328 = vmul.f32 %v4310, 0.5
    %v4329 = vmul.f32 %v4312, 0.5
    %v4330 = vmul.f32 %v4314, 0.5
    %v4331 = vmul.f32 %v4316, 0.5
    %v4332 = vmul.f32 %v4320, 0.5
    %v4333 = vmul.f32 %v4322, 0.5
    %v4334 = vmul.f32 %v4324, 0.5
    %v4335 = vmul.f32 %v4326, 0.5
    %v4336 = vmul.f32 %v4310, 0.044715
    %v4337 = vmul.f32 %v4312, 0.044715
    %v4338 = vmul.f32 %v4314, 0.044715
    %v4339 = vmul.f32 %v4316, 0.044715
    %v4340 = vmul.f32 %v4320, 0.044715
    %v4341 = vmul.f32 %v4322, 0.044715
    %v4342 = vmul.f32 %v4324, 0.044715
    %v4343 = vmul.f32 %v4326, 0.044715
    %v4344 = vmul.f32 %v4336, %v4310
    %v4345 = vmul.f32 %v4337, %v4312
    %v4346 = vmul.f32 %v4338, %v4314
    %v4347 = vmul.f32 %v4339, %v4316
    %v4348 = vmul.f32 %v4340, %v4320
    %v4349 = vmul.f32 %v4341, %v4322
    %v4350 = vmul.f32 %v4342, %v4324
    %v4351 = vmul.f32 %v4343, %v4326
    %v4352 = vmul.f32 %v4344, %v4310
    %v4353 = vmul.f32 %v4345, %v4312
    %v4354 = vmul.f32 %v4346, %v4314
    %v4355 = vmul.f32 %v4347, %v4316
    %v4356 = vmul.f32 %v4348, %v4320
    %v4357 = vmul.f32 %v4349, %v4322
    %v4358 = vmul.f32 %v4350, %v4324
    %v4359 = vmul.f32 %v4351, %v4326
    %v4360 = vadd.f32 %v4310, %v4352
    %v4361 = vadd.f32 %v4312, %v4353
    %v4362 = vadd.f32 %v4314, %v4354
    %v4363 = vadd.f32 %v4316, %v4355
    %v4364 = vadd.f32 %v4320, %v4356
    %v4365 = vadd.f32 %v4322, %v4357
    %v4366 = vadd.f32 %v4324, %v4358
    %v4367 = vadd.f32 %v4326, %v4359
    %v4368 = vmul.f32 %v4360, 0.7978846
    %v4369 = vmul.f32 %v4361, 0.7978846
    %v4370 = vmul.f32 %v4362, 0.7978846
    %v4371 = vmul.f32 %v4363, 0.7978846
    %v4372 = vmul.f32 %v4364, 0.7978846
    %v4373 = vmul.f32 %v4365, 0.7978846
    %v4374 = vmul.f32 %v4366, 0.7978846
    %v4375 = vmul.f32 %v4367, 0.7978846
    %v4376 = vtanh.pop %v4368
    %v4377 = vtanh.pop %v4369
    %v4378 = vtanh.pop %v4370
    %v4379 = vtanh.pop %v4371
    %v4380 = vtanh.pop %v4372
    %v4381 = vtanh.pop %v4373
    %v4382 = vtanh.pop %v4374
    %v4383 = vtanh.pop %v4375
    %v4384 = vadd.f32 %v4376, 1.0
    %v4385 = vadd.f32 %v4377, 1.0
    %v4386 = vadd.f32 %v4378, 1.0
    %v4387 = vadd.f32 %v4379, 1.0
    %v4388 = vadd.f32 %v4380, 1.0
    %v4389 = vadd.f32 %v4381, 1.0
    %v4390 = vadd.f32 %v4382, 1.0
    %v4391 = vadd.f32 %v4383, 1.0
    %v4392 = vmul.f32 %v4328, %v4384
    %v4393 = vmul.f32 %v4329, %v4385
    %v4394 = vmul.f32 %v4330, %v4386
    %v4395 = vmul.f32 %v4331, %v4387
    %v4396 = vmul.f32 %v4332, %v4388
    %v4397 = vmul.f32 %v4333, %v4389
    %v4398 = vmul.f32 %v4334, %v4390
    %v4399 = vmul.f32 %v4335, %v4391
    %v4400 = vpack.c.bf16 %v4394, %v4392
    %v4401 = vpack.c.bf16 %v4395, %v4393
    %v4402 = vpack.c.bf16 %v4398, %v4396
    %v4403 = vpack.c.bf16 %v4399, %v4397
    %s4404 = scalar_lea.vmem [#allocation20], 128
    %v4405 = vld [vmem:[%s4404] sm:$0xf]
    %v4406 = vld [vmem:[%s4404 + $0x4] sm:$0xf]
    %v4407 = vld [vmem:[%s4404 + $0x8] sm:$0xf]
    %v4408 = vld [vmem:[%s4404 + $0xc] sm:$0xf]
    %v4409 = vld [vmem:[%s4404 + $0x10] sm:$0xf]
    %v4410 = vld [vmem:[%s4404 + $0x14] sm:$0xf]
    %v4411 = vld [vmem:[%s4404 + $0x18] sm:$0xf]
    %v4412 = vld [vmem:[%s4404 + $0x1c] sm:$0xf]
    %v4413 = vld [vmem:[%s4404 + $0x20] sm:$0xf]
    %v4414 = vld [vmem:[%s4404 + $0x24] sm:$0xf]
    %v4415 = vld [vmem:[%s4404 + $0x28] sm:$0xf]
    %v4416 = vld [vmem:[%s4404 + $0x2c] sm:$0xf]
    %v4417 = vld [vmem:[%s4404 + $0x30] sm:$0xf]
    %v4418 = vld [vmem:[%s4404 + $0x34] sm:$0xf]
    %v4419 = vld [vmem:[%s4404 + $0x38] sm:$0xf]
    %v4420 = vld [vmem:[%s4404 + $0x3c] sm:$0xf]
    %v4421 = vld [vmem:[%s4404 + $0x40] sm:$0xf]
    %v4422 = vld [vmem:[%s4404 + $0x44] sm:$0xf]
    %v4423 = vld [vmem:[%s4404 + $0x48] sm:$0xf]
    %v4424 = vld [vmem:[%s4404 + $0x4c] sm:$0xf]
    %v4425 = vld [vmem:[%s4404 + $0x50] sm:$0xf]
    %v4426 = vld [vmem:[%s4404 + $0x54] sm:$0xf]
    %v4427 = vld [vmem:[%s4404 + $0x58] sm:$0xf]
    %v4428 = vld [vmem:[%s4404 + $0x5c] sm:$0xf]
    %v4429 = vld [vmem:[%s4404 + $0x60] sm:$0xf]
    %v4430 = vld [vmem:[%s4404 + $0x64] sm:$0xf]
    %v4431 = vld [vmem:[%s4404 + $0x68] sm:$0xf]
    %v4432 = vld [vmem:[%s4404 + $0x6c] sm:$0xf]
    %v4433 = vld [vmem:[%s4404 + $0x70] sm:$0xf]
    %v4434 = vld [vmem:[%s4404 + $0x74] sm:$0xf]
    %v4435 = vld [vmem:[%s4404 + $0x78] sm:$0xf]
    %v4436 = vld [vmem:[%s4404 + $0x7c] sm:$0xf]
    %s4437 = scalar_lea.vmem [#allocation22], 1
    %v4438 = vld [vmem:[%s4437] sm:$0x1]
    %v4440 = vlaneseq
    %v4441 = vshrl.u32 %v4440, 7
    %v4442 = vsub.s32 0, %v4441
    %v4443 = vrot.slane %v4438, %v4442
    %v4477 = vunpack.c.l.b16 %v4405
    %v4478 = vunpack.c.l.b16 %v4406
    %v4479 = vunpack.c.l.b16 %v4407
    %v4480 = vunpack.c.l.b16 %v4408
    %v4481 = vunpack.c.l.b16 %v4409
    %v4482 = vunpack.c.l.b16 %v4410
    %v4483 = vunpack.c.l.b16 %v4411
    %v4484 = vunpack.c.l.b16 %v4412
    %v4485 = vunpack.c.l.b16 %v4413
    %v4486 = vunpack.c.l.b16 %v4414
    %v4487 = vunpack.c.l.b16 %v4415
    %v4488 = vunpack.c.l.b16 %v4416
    %v4489 = vunpack.c.l.b16 %v4417
    %v4490 = vunpack.c.l.b16 %v4418
    %v4491 = vunpack.c.l.b16 %v4419
    %v4492 = vunpack.c.l.b16 %v4420
    %v4493 = vunpack.c.l.b16 %v4421
    %v4494 = vunpack.c.l.b16 %v4422
    %v4495 = vunpack.c.l.b16 %v4423
    %v4496 = vunpack.c.l.b16 %v4424
    %v4497 = vunpack.c.l.b16 %v4425
    %v4498 = vunpack.c.l.b16 %v4426
    %v4499 = vunpack.c.l.b16 %v4427
    %v4500 = vunpack.c.l.b16 %v4428
    %v4501 = vunpack.c.l.b16 %v4429
    %v4502 = vunpack.c.l.b16 %v4430
    %v4503 = vunpack.c.l.b16 %v4431
    %v4504 = vunpack.c.l.b16 %v4432
    %v4505 = vunpack.c.l.b16 %v4433
    %v4506 = vunpack.c.l.b16 %v4434
    %v4507 = vunpack.c.l.b16 %v4435
    %v4508 = vunpack.c.l.b16 %v4436
    %v4509 = vpack.c.b16 %v4478, %v4477
    %v4510 = vpack.c.b16 %v4480, %v4479
    %v4511 = vpack.c.b16 %v4482, %v4481
    %v4512 = vpack.c.b16 %v4484, %v4483
    %v4513 = vpack.c.b16 %v4486, %v4485
    %v4514 = vpack.c.b16 %v4488, %v4487
    %v4515 = vpack.c.b16 %v4490, %v4489
    %v4516 = vpack.c.b16 %v4492, %v4491
    %v4517 = vpack.c.b16 %v4494, %v4493
    %v4518 = vpack.c.b16 %v4496, %v4495
    %v4519 = vpack.c.b16 %v4498, %v4497
    %v4520 = vpack.c.b16 %v4500, %v4499
    %v4521 = vpack.c.b16 %v4502, %v4501
    %v4522 = vpack.c.b16 %v4504, %v4503
    %v4523 = vpack.c.b16 %v4506, %v4505
    %v4524 = vpack.c.b16 %v4508, %v4507
    %4541 = vmatprep.subr.bf16.mxu0 0
    %4542 = vmatpush1.bf16.msra.mxu0 %v4509
    %4543 = vmatprep.subr.bf16.mxu0 0
    %4544 = vmatpush1.bf16.msra.mxu0 %v4510
    %4545 = vmatprep.subr.bf16.mxu0 0
    %4546 = vmatpush1.bf16.msra.mxu0 %v4511
    %4547 = vmatprep.subr.bf16.mxu0 0
    %4548 = vmatpush1.bf16.msra.mxu0 %v4512
    %4549 = vmatprep.subr.bf16.mxu0 0
    %4550 = vmatpush1.bf16.msra.mxu0 %v4513
    %4551 = vmatprep.subr.bf16.mxu0 0
    %4552 = vmatpush1.bf16.msra.mxu0 %v4514
    %4553 = vmatprep.subr.bf16.mxu0 0
    %4554 = vmatpush1.bf16.msra.mxu0 %v4515
    %4555 = vmatprep.subr.bf16.mxu0 0
    %4556 = vmatpush1.bf16.msra.mxu0 %v4516
    %4557 = vmatprep.subr.bf16.mxu0 0
    %4558 = vmatpush1.bf16.msra.mxu0 %v4517
    %4559 = vmatprep.subr.bf16.mxu0 0
    %4560 = vmatpush1.bf16.msra.mxu0 %v4518
    %4561 = vmatprep.subr.bf16.mxu0 0
    %4562 = vmatpush1.bf16.msra.mxu0 %v4519
    %4563 = vmatprep.subr.bf16.mxu0 0
    %4564 = vmatpush1.bf16.msra.mxu0 %v4520
    %4565 = vmatprep.subr.bf16.mxu0 0
    %4566 = vmatpush1.bf16.msra.mxu0 %v4521
    %4567 = vmatprep.subr.bf16.mxu0 0
    %4568 = vmatpush1.bf16.msra.mxu0 %v4522
    %4569 = vmatprep.subr.bf16.mxu0 0
    %4570 = vmatpush1.bf16.msra.mxu0 %v4523
    %4571 = vmatprep.subr.bf16.mxu0 0
    %4572 = vmatpush1.bf16.msra.mxu0 %v4524
    %4573 = vmatprep.mubr.bf16.mxu0 %v4401
    %4574 = vmatmul.mubr.bf16.gmra.mrb[0].mxu0 %v4400
    %v4575 = vpop.f32.mrb[0].mxu0
    %v4576 = vadd.f32 %v4443, %v4575
    %v4577 = vpop.f32.mrb[0].mxu0
    %v4578 = vpop.f32.mrb[0].mxu0
    %v4579 = vpop.f32.mrb[0].mxu0
    %4580 = vmatprep.mubr.bf16.mxu0 %v4403
    %4581 = vmatmul.mubr.bf16.gmra.mrb[0].mxu0 %v4402
    %v4582 = vpop.f32.mrb[0].mxu0
    %v4583 = vadd.f32 %v4443, %v4582
    %v4584 = vpop.f32.mrb[0].mxu0
    %v4585 = vpop.f32.mrb[0].mxu0
    %v4586 = vpop.f32.mrb[0].mxu0
    %4587 = vdwg.mxu0
    %v4588 = vadd.f32 %v4576, %v4159
    %v4589 = vadd.f32 %v4583, %v4161
    %s4590 = scalar_lea.vmem [#allocation23], 1
    %v4591 = vld [vmem:[%s4590] sm:$0x1]
    %s4592 = scalar_lea.vmem [#allocation25], 1
    %v4593 = vld [vmem:[%s4592] sm:$0x1]
    %4594 = vadd.xlane.f32.xlu0 %v4588
    %v4595 = vpop.xlane.xlu0 %4594
    %4596 = vadd.xlane.f32.xlu0 %v4589
    %v4597 = vpop.xlane.xlu0 %4596
    %v4598 = vmul.f32 %v4595, %v305
    %v4599 = vmul.f32 %v4597, %v305
    %v4600 = vsub.f32 %v4588, %v4598
    %v4601 = vsub.f32 %v4589, %v4599
    %v4602 = vmul.f32 %v4600, %v4600
    %v4603 = vmul.f32 %v4601, %v4601
    %4604 = vadd.xlane.f32.xlu0 %v4602
    %v4605 = vpop.xlane.xlu0 %4604
    %4606 = vadd.xlane.f32.xlu0 %v4603
    %v4607 = vpop.xlane.xlu0 %4606
    %v4608 = vmul.f32 %v4605, %v305
    %v4609 = vmul.f32 %v4607, %v305
    %v4610 = vadd.f32 %v4608, 1e-12
    %v4611 = vadd.f32 %v4609, 1e-12
    %v4612 = vrsqrt.pop %v4610
    %v4613 = vrsqrt.pop %v4611
    %v4614 = vmul.f32 %v4600, %v4612
    %v4615 = vmul.f32 %v4601, %v4613
    %v4617 = vlaneseq
    %v4618 = vshrl.u32 %v4617, 7
    %v4619 = vsub.s32 0, %v4618
    %v4620 = vrot.slane %v4591, %v4619
    %v4622 = vmul.f32 %v4614, %v4620
    %v4623 = vmul.f32 %v4615, %v4620
    %v4625 = vlaneseq
    %v4626 = vshrl.u32 %v4625, 7
    %v4627 = vsub.s32 0, %v4626
    %v4628 = vrot.slane %v4593, %v4627
    %v4630 = vadd.f32 %v4622, %v4628
    %v4631 = vadd.f32 %v4623, %v4628
    %v4633 = vrot.slane %v4631, 7
    %vm4635 = vcmask 1040384
    %v4636 = vsel %vm4635, %v4630, %v4633
    %v4637 = vpack.c.bf16 %v4636, %v4636
    %v4638 = vld [vmem:[#allocation26] sm:$0xf]
    %v4639 = vld [vmem:[#allocation26 + $0x4] sm:$0xf]
    %v4640 = vld [vmem:[#allocation26 + $0x8] sm:$0xf]
    %v4641 = vld [vmem:[#allocation26 + $0xc] sm:$0xf]
    %v4642 = vld [vmem:[#allocation26 + $0x10] sm:$0xf]
    %v4643 = vld [vmem:[#allocation26 + $0x14] sm:$0xf]
    %v4644 = vld [vmem:[#allocation26 + $0x18] sm:$0xf]
    %v4645 = vld [vmem:[#allocation26 + $0x1c] sm:$0xf]
    %v4646 = vld [vmem:[#allocation26 + $0x20] sm:$0xf]
    %v4647 = vld [vmem:[#allocation26 + $0x24] sm:$0xf]
    %v4648 = vld [vmem:[#allocation26 + $0x28] sm:$0xf]
    %v4649 = vld [vmem:[#allocation26 + $0x2c] sm:$0xf]
    %v4650 = vld [vmem:[#allocation26 + $0x30] sm:$0xf]
    %v4651 = vld [vmem:[#allocation26 + $0x34] sm:$0xf]
    %v4652 = vld [vmem:[#allocation26 + $0x38] sm:$0xf]
    %v4653 = vld [vmem:[#allocation26 + $0x3c] sm:$0xf]
    %v4654 = vld [vmem:[#allocation28] sm:$0x1]
    %v4656 = vlaneseq
    %v4657 = vshrl.u32 %v4656, 7
    %v4658 = vsub.s32 0, %v4657
    %v4659 = vrot.slane %v4654, %v4658
    %v4677 = vunpack.c.l.b16 %v4638
    %v4678 = vunpack.c.l.b16 %v4639
    %v4679 = vunpack.c.l.b16 %v4640
    %v4680 = vunpack.c.l.b16 %v4641
    %v4681 = vunpack.c.l.b16 %v4642
    %v4682 = vunpack.c.l.b16 %v4643
    %v4683 = vunpack.c.l.b16 %v4644
    %v4684 = vunpack.c.l.b16 %v4645
    %v4685 = vunpack.c.l.b16 %v4646
    %v4686 = vunpack.c.l.b16 %v4647
    %v4687 = vunpack.c.l.b16 %v4648
    %v4688 = vunpack.c.l.b16 %v4649
    %v4689 = vunpack.c.l.b16 %v4650
    %v4690 = vunpack.c.l.b16 %v4651
    %v4691 = vunpack.c.l.b16 %v4652
    %v4692 = vunpack.c.l.b16 %v4653
    %v4693 = vpack.c.b16 %v4678, %v4677
    %v4694 = vpack.c.b16 %v4680, %v4679
    %v4695 = vpack.c.b16 %v4682, %v4681
    %v4696 = vpack.c.b16 %v4684, %v4683
    %v4697 = vpack.c.b16 %v4686, %v4685
    %v4698 = vpack.c.b16 %v4688, %v4687
    %v4699 = vpack.c.b16 %v4690, %v4689
    %v4700 = vpack.c.b16 %v4692, %v4691
    %4709 = vmatprep.subr.bf16.mxu0 0
    %4710 = vmatpush1.bf16.msra.mxu0 %v4693
    %4711 = vmatprep.subr.bf16.mxu0 0
    %4712 = vmatpush1.bf16.msra.mxu0 %v4694
    %4713 = vmatprep.subr.bf16.mxu0 0
    %4714 = vmatpush1.bf16.msra.mxu0 %v4695
    %4715 = vmatprep.subr.bf16.mxu0 0
    %4716 = vmatpush1.bf16.msra.mxu0 %v4696
    %4717 = vmatprep.subr.bf16.mxu0 0
    %4718 = vmatpush1.bf16.msra.mxu0 %v4697
    %4719 = vmatprep.subr.bf16.mxu0 0
    %4720 = vmatpush1.bf16.msra.mxu0 %v4698
    %4721 = vmatprep.subr.bf16.mxu0 0
    %4722 = vmatpush1.bf16.msra.mxu0 %v4699
    %4723 = vmatprep.subr.bf16.mxu0 0
    %4724 = vmatpush1.bf16.msra.mxu0 %v4700
    %4725 = vmatprep.subr.bf16.mxu0 0
    %4726 = vmatpush1.bf16.msra.mxu0 0
    %4727 = vmatprep.subr.bf16.mxu0 0
    %4728 = vmatpush1.bf16.msra.mxu0 0
    %4729 = vmatprep.subr.bf16.mxu0 0
    %4730 = vmatpush1.bf16.msra.mxu0 0
    %4731 = vmatprep.subr.bf16.mxu0 0
    %4732 = vmatpush1.bf16.msra.mxu0 0
    %4733 = vmatprep.subr.bf16.mxu0 0
    %4734 = vmatpush1.bf16.msra.mxu0 0
    %4735 = vmatprep.subr.bf16.mxu0 0
    %4736 = vmatpush1.bf16.msra.mxu0 0
    %4737 = vmatprep.subr.bf16.mxu0 0
    %4738 = vmatpush1.bf16.msra.mxu0 0
    %4739 = vmatprep.subr.bf16.mxu0 0
    %4740 = vmatpush1.bf16.msra.mxu0 0
    %4741 = vmatprep.mubr.bf16.mxu0 0
    %4742 = vmatmul.mubr.bf16.gmra.mrb[0].mxu0 %v4637
    %v4743 = vpop.f32.mrb[0].mxu0
    %v4744 = vadd.f32 %v4659, %v4743
    %v4745 = vpop.f32.mrb[0].mxu0
    %v4746 = vpop.f32.mrb[0].mxu0
    %v4747 = vpop.f32.mrb[0].mxu0
    %4748 = vdwg.mxu0
    %v4749 = vtanh.pop %v4744
    %v4750 = vpack.c.bf16 %v4749, %v4749
    %v4751 = vld [vmem:[%s18] sm:$0xf]
    %v4752 = vld [vmem:[%s18 + $0x4] sm:$0xf]
    %v4753 = vld [vmem:[%s18 + $0x8] sm:$0xf]
    %v4754 = vld [vmem:[%s18 + $0xc] sm:$0xf]
    %v4755 = vld [vmem:[%s18 + $0x10] sm:$0xf]
    %v4756 = vld [vmem:[%s18 + $0x14] sm:$0xf]
    %v4757 = vld [vmem:[%s18 + $0x18] sm:$0xf]
    %v4758 = vld [vmem:[%s18 + $0x1c] sm:$0xf]
    %v4759 = vld [vmem:[%s18 + $0x20] sm:$0xf]
    %v4760 = vld [vmem:[%s18 + $0x24] sm:$0xf]
    %v4761 = vld [vmem:[%s18 + $0x28] sm:$0xf]
    %v4762 = vld [vmem:[%s18 + $0x2c] sm:$0xf]
    %v4763 = vld [vmem:[%s18 + $0x30] sm:$0xf]
    %v4764 = vld [vmem:[%s18 + $0x34] sm:$0xf]
    %v4765 = vld [vmem:[%s18 + $0x38] sm:$0xf]
    %v4766 = vld [vmem:[%s18 + $0x3c] sm:$0xf]
    %v4767 = vld [vmem:[%s19] sm:$0x1]
    %v4769 = vlaneseq
    %v4770 = vshrl.u32 %v4769, 7
    %v4771 = vsub.s32 0, %v4770
    %v4772 = vrot.slane %v4767, %v4771
    %v4790 = vunpack.c.l.b16 %v4751
    %v4791 = vunpack.c.l.b16 %v4752
    %v4792 = vunpack.c.l.b16 %v4753
    %v4793 = vunpack.c.l.b16 %v4754
    %v4794 = vunpack.c.l.b16 %v4755
    %v4795 = vunpack.c.l.b16 %v4756
    %v4796 = vunpack.c.l.b16 %v4757
    %v4797 = vunpack.c.l.b16 %v4758
    %v4798 = vunpack.c.l.b16 %v4759
    %v4799 = vunpack.c.l.b16 %v4760
    %v4800 = vunpack.c.l.b16 %v4761
    %v4801 = vunpack.c.l.b16 %v4762
    %v4802 = vunpack.c.l.b16 %v4763
    %v4803 = vunpack.c.l.b16 %v4764
    %v4804 = vunpack.c.l.b16 %v4765
    %v4805 = vunpack.c.l.b16 %v4766
    %v4806 = vpack.c.b16 %v4791, %v4790
    %v4807 = vpack.c.b16 %v4793, %v4792
    %v4808 = vpack.c.b16 %v4795, %v4794
    %v4809 = vpack.c.b16 %v4797, %v4796
    %v4810 = vpack.c.b16 %v4799, %v4798
    %v4811 = vpack.c.b16 %v4801, %v4800
    %v4812 = vpack.c.b16 %v4803, %v4802
    %v4813 = vpack.c.b16 %v4805, %v4804
    %4822 = vmatprep.subr.bf16.mxu0 0
    %4823 = vmatpush1.bf16.msra.mxu0 %v4806
    %4824 = vmatprep.subr.bf16.mxu0 0
    %4825 = vmatpush1.bf16.msra.mxu0 %v4807
    %4826 = vmatprep.subr.bf16.mxu0 0
    %4827 = vmatpush1.bf16.msra.mxu0 %v4808
    %4828 = vmatprep.subr.bf16.mxu0 0
    %4829 = vmatpush1.bf16.msra.mxu0 %v4809
    %4830 = vmatprep.subr.bf16.mxu0 0
    %4831 = vmatpush1.bf16.msra.mxu0 %v4810
    %4832 = vmatprep.subr.bf16.mxu0 0
    %4833 = vmatpush1.bf16.msra.mxu0 %v4811
    %4834 = vmatprep.subr.bf16.mxu0 0
    %4835 = vmatpush1.bf16.msra.mxu0 %v4812
    %4836 = vmatprep.subr.bf16.mxu0 0
    %4837 = vmatpush1.bf16.msra.mxu0 %v4813
    %4838 = vmatprep.subr.bf16.mxu0 0
    %4839 = vmatpush1.bf16.msra.mxu0 0
    %4840 = vmatprep.subr.bf16.mxu0 0
    %4841 = vmatpush1.bf16.msra.mxu0 0
    %4842 = vmatprep.subr.bf16.mxu0 0
    %4843 = vmatpush1.bf16.msra.mxu0 0
    %4844 = vmatprep.subr.bf16.mxu0 0
    %4845 = vmatpush1.bf16.msra.mxu0 0
    %4846 = vmatprep.subr.bf16.mxu0 0
    %4847 = vmatpush1.bf16.msra.mxu0 0
    %4848 = vmatprep.subr.bf16.mxu0 0
    %4849 = vmatpush1.bf16.msra.mxu0 0
    %4850 = vmatprep.subr.bf16.mxu0 0
    %4851 = vmatpush1.bf16.msra.mxu0 0
    %4852 = vmatprep.subr.bf16.mxu0 0
    %4853 = vmatpush1.bf16.msra.mxu0 0
    %4854 = vmatprep.mubr.bf16.mxu0 0
    %4855 = vmatmul.mubr.bf16.gmra.mrb[0].mxu0 %v4750
    %v4856 = vpop.f32.mrb[0].mxu0
    %v4857 = vadd.f32 %v4772, %v4856
    %v4858 = vpop.f32.mrb[0].mxu0
    %v4859 = vpop.f32.mrb[0].mxu0
    %v4860 = vpop.f32.mrb[0].mxu0
    %4861 = vdwg.mxu0
    %v4862 = vmax.f32 %v4857, 0.0
    %4863 = vst [vmem:[#allocation29] sm:$0x3] %v4862
    // Predicated region
    $region150: #{tpu_custom_call.1} parent=1 // pred_check
      _
    $region151: #{tpu_custom_call.1} parent=1 // pred_check_branch
      %4865 = sbr.rel (0) target = $region153
    $region152: #{tpu_custom_call.1} parent=1 // pred_region
      %s4867 = ssub.s32 32, 32
      %4868 = vsyncadd [#allocation4], %s4867
      %s4870 = sshll.u32 [#allocation29], 4
      %s4871 = int_to_ptr.vmem [resolvable:$true] %s4870
      %4873 = dma.vmem_to_hbm [thread:$0]  %s4871, 32, %s20, [#allocation4]
    $region153: #{tpu_custom_call.1} parent=1 // pred_fallthru
      _
    // Predicated region
    $region154: #{tpu_custom_call.1} parent=1 // pred_check
      _
    $region155: #{tpu_custom_call.1} parent=1 // pred_check_branch
      %4875 = sbr.rel (0) target = $region157
    $region156: #{tpu_custom_call.1} parent=1 // pred_region
      %4876 = dma.done [#allocation4], 32
    $region157: #{tpu_custom_call.1} parent=1 // pred_fallthru
      _
    %4877 = vsyncpa [#allocation3], 1
    %4878 = vsyncpa [#allocation6], 1
    %4879 = vsyncpa [#allocation9], 1
    %4880 = vsyncpa [#allocation12], 1
    %4881 = vsyncpa [#allocation15], 1
    %4882 = vsyncpa [#allocation18], 1
    %4883 = vsyncpa [#allocation21], 1
    %4884 = vsyncpa [#allocation24], 1
    %4885 = vsyncpa [#allocation27], 1
    %4886 = vsyncpa [#allocation4], 1

</llo_original>
